<compile_context>
chip_gen: v5e
topology: v5e:2x2
jax: 0.10.0
libtpu: 0.0.40
codegen_flags: <defaults>
</compile_context>

<pallas_src>
import functools

import jax
import jax.numpy as jnp
from jax.experimental import pallas as pl
from jax.experimental.pallas import tpu as pltpu

SPACE_DIM = 10
TIME_DIM = 1
D = SPACE_DIM + TIME_DIM          # input_size = 11
WIDTH = 32                        # hidden width
OUT = 1                           # output_size
TILE_N = 1024                     # batch columns per grid step (multiple of 128)


def _swish(h):
    # activation(x) = x * sigmoid(x), kept in f32 (v5e VPU/EUP have no bf16).
    return h * jax.nn.sigmoid(h)


def net_kernel(x_ref, w_in_ref, b_in_ref, w_hid_ref, b_hid_ref,
               w_out_ref, b_out_ref, o_ref):
    """Transposed layout: features on sublanes, batch on lanes.

    x_ref:     (D, TILE_N)        f32
    w_in_ref:  (WIDTH, D)         bf16
    b_in_ref:  (WIDTH, 1)         f32
    w_hid_ref: (6, WIDTH, WIDTH)  bf16
    b_hid_ref: (6, WIDTH, 1)      f32
    w_out_ref: (OUT, WIDTH)       bf16
    b_out_ref: (OUT, 1)           f32
    o_ref:     (OUT, TILE_N)      f32
    """
    def lin(w_bf16, h_f32, b_f32):
        # bf16 MXU operands, f32 accumulation, f32 bias (lane broadcast).
        return jnp.dot(w_bf16, h_f32.astype(jnp.bfloat16),
                       preferred_element_type=jnp.float32) + b_f32

    h = lin(w_in_ref[...], x_ref[...], b_in_ref[...])            # (WIDTH, TILE_N)
    # Three residual blocks: h = h + swish(L2(swish(L1(h)))), statically unrolled.
    for blk in range(3):
        i1, i2 = 2 * blk, 2 * blk + 1
        t = _swish(lin(w_hid_ref[i1], h, b_hid_ref[i1]))
        h = h + _swish(lin(w_hid_ref[i2], t, b_hid_ref[i2]))
    o_ref[...] = lin(w_out_ref[...], h, b_out_ref[...]).astype(o_ref.dtype)


def prep_params(params):
    """params: list of (W(out,in) f32, b(out,) f32) in layer order
    [layer_in, layer_1..layer_6, layer_out].  Returns kernel operands."""
    (w_in, b_in) = params[0]
    hidden = params[1:7]
    (w_out, b_out) = params[7]
    w_hid = jnp.stack([w for w, _ in hidden]).astype(jnp.bfloat16)   # (6, W, W)
    b_hid = jnp.stack([b for _, b in hidden])[:, :, None]            # (6, W, 1) f32
    return (w_in.astype(jnp.bfloat16), b_in[:, None],
            w_hid, b_hid,
            w_out.astype(jnp.bfloat16), b_out[:, None])


@functools.partial(jax.jit, static_argnames=("tile_n",))
def net_forward(x, params, *, tile_n=TILE_N):
    """x: (N, D) float32. params: flat list of (W(out,in), b(out,)) pairs."""
    n = x.shape[0]
    n_pad = pl.cdiv(n, tile_n) * tile_n
    # Batch on lanes; zero-pad to a whole number of tiles (padded cols sliced off).
    x_t = jnp.zeros((D, n_pad), jnp.float32).at[:, :n].set(x.T)

    w_in, b_in, w_hid, b_hid, w_out, b_out = prep_params(params)

    out_t = pl.pallas_call(
        net_kernel,
        grid=(n_pad // tile_n,),
        in_specs=[
            pl.BlockSpec((D, tile_n), lambda i: (0, i)),       # x tile (pipelined)
            pl.BlockSpec(w_in.shape, lambda i: (0, 0)),        # weights stay resident
            pl.BlockSpec(b_in.shape, lambda i: (0, 0)),
            pl.BlockSpec(w_hid.shape, lambda i: (0, 0, 0)),
            pl.BlockSpec(b_hid.shape, lambda i: (0, 0, 0)),
            pl.BlockSpec(w_out.shape, lambda i: (0, 0)),
            pl.BlockSpec(b_out.shape, lambda i: (0, 0)),
        ],
        out_specs=pl.BlockSpec((OUT, tile_n), lambda i: (0, i)),
        out_shape=jax.ShapeDtypeStruct((OUT, n_pad), jnp.float32),
        compiler_params=pltpu.CompilerParams(
            dimension_semantics=("parallel",)),                # megacore on v7x
    )(x_t, w_in, b_in, w_hid, b_hid, w_out, b_out)

    return out_t[:, :n].T                                      # (N, OUT)


def init_linear(key, fan_in, fan_out):
    # PyTorch nn.Linear default: U(-1/sqrt(fan_in), 1/sqrt(fan_in)) for W and b.
    kw, kb = jax.random.split(key)
    bound = 1.0 / (fan_in ** 0.5)
    w = jax.random.uniform(kw, (fan_out, fan_in), jnp.float32, -bound, bound)
    b = jax.random.uniform(kb, (fan_out,), jnp.float32, -bound, bound)
    return w, b


def init_params(key):
    sizes = [(D, WIDTH)] + [(WIDTH, WIDTH)] * 6 + [(WIDTH, OUT)]
    keys = jax.random.split(key, len(sizes))
    return [init_linear(k, fi, fo) for k, (fi, fo) in zip(keys, sizes)]


def reference_forward_f32(x, params):
    """Pure-f32 reference matching the PyTorch module semantics."""
    def lin(h, wb):
        w, b = wb
        return h @ w.T + b
    h = lin(x, params[0])
    h = h + _swish(lin(_swish(lin(h, params[1])), params[2]))
    h = h + _swish(lin(_swish(lin(h, params[3])), params[4]))
    h = h + _swish(lin(_swish(lin(h, params[5])), params[6]))
    return lin(h, params[7])


def reference_forward_bf16(x, params):
    """Reference matching the kernel's numerics (bf16 matmul operands,
    f32 accumulation, f32 bias/activation)."""
    def lin(h, wb):
        w, b = wb
        return jnp.dot(h.astype(jnp.bfloat16), w.T.astype(jnp.bfloat16),
                       preferred_element_type=jnp.float32) + b
    h = lin(x, params[0])
    h = h + _swish(lin(_swish(lin(h, params[1])), params[2]))
    h = h + _swish(lin(_swish(lin(h, params[3])), params[4]))
    h = h + _swish(lin(_swish(lin(h, params[5])), params[6]))
    return lin(h, params[7])


if __name__ == "__main__":
    key = jax.random.PRNGKey(0)
    kx, kp = jax.random.split(key)

    batch = 8
    x = jax.random.normal(kx, (batch, D), jnp.float32)
    params = init_params(kp)

    out = net_forward(x, params)
    jax.block_until_ready(out)
    assert out.shape == (batch, OUT), out.shape

    ref_bf16 = reference_forward_bf16(x, params)   # numerics-matched reference
    ref_f32 = reference_forward_f32(x, params)     # module-semantics reference
    assert jnp.allclose(out, ref_bf16, atol=2e-3, rtol=2e-3), (out, ref_bf16)
    assert jnp.allclose(out, ref_f32, atol=1e-1, rtol=1e-1), (out, ref_f32)

    print("KERNEL_OK")
</pallas_src>

<mosaic_0001>
module attributes {stable_mosaic.version = 11 : i64} {
  func.func @net_kernel(%arg0: i32, %arg1: memref<11x1024xf32, #tpu.memory_space<vmem>>, %arg2: memref<32x11xbf16, #tpu.memory_space<vmem>>, %arg3: memref<32x1xf32, #tpu.memory_space<vmem>>, %arg4: memref<6x32x32xbf16, #tpu.memory_space<vmem>>, %arg5: memref<6x32x1xf32, #tpu.memory_space<vmem>>, %arg6: memref<1x32xbf16, #tpu.memory_space<vmem>>, %arg7: memref<1x1xf32, #tpu.memory_space<vmem>>, %arg8: memref<1x1024xf32, #tpu.memory_space<vmem>>) attributes {dimension_semantics = [#tpu.dimension_semantics<parallel>], iteration_bounds = array<i64: 1>, scalar_prefetch = 0 : i64, scratch_operands = 0 : i64, tpu.core_type = #tpu.core_type<tc>, window_params = [{transform_indices = @transform_0, window_bounds = array<i64: 11, 1024>}, {pipeline_mode = #tpu.pipeline_mode<synchronous>, transform_indices = @transform_1, window_bounds = array<i64: 32, 11>}, {pipeline_mode = #tpu.pipeline_mode<synchronous>, transform_indices = @transform_2, window_bounds = array<i64: 32, 1>}, {pipeline_mode = #tpu.pipeline_mode<synchronous>, transform_indices = @transform_3, window_bounds = array<i64: 6, 32, 32>}, {pipeline_mode = #tpu.pipeline_mode<synchronous>, transform_indices = @transform_4, window_bounds = array<i64: 6, 32, 1>}, {pipeline_mode = #tpu.pipeline_mode<synchronous>, transform_indices = @transform_5, window_bounds = array<i64: 1, 32>}, {pipeline_mode = #tpu.pipeline_mode<synchronous>, transform_indices = @transform_6, window_bounds = array<i64: 1, 1>}, {transform_indices = @transform_7, window_bounds = array<i64: 1, 1024>}]} {
    %c0 = arith.constant 0 : index
    %c0_0 = arith.constant 0 : index
    %0 = vector.load %arg2[%c0, %c0_0] : memref<32x11xbf16, #tpu.memory_space<vmem>>, vector<32x11xbf16>
    %c0_1 = arith.constant 0 : index
    %c0_2 = arith.constant 0 : index
    %1 = vector.load %arg1[%c0_1, %c0_2] : memref<11x1024xf32, #tpu.memory_space<vmem>>, vector<11x1024xf32>
    %c0_3 = arith.constant 0 : index
    %c0_4 = arith.constant 0 : index
    %2 = vector.load %arg3[%c0_3, %c0_4] : memref<32x1xf32, #tpu.memory_space<vmem>>, vector<32x1xf32>
    %3 = arith.truncf %1 : vector<11x1024xf32> to vector<11x1024xbf16>
    %cst = arith.constant dense<0.000000e+00> : vector<32x1024xf32>
    %4 = tpu.matmul %0, %3, %cst {dimension_numbers = #tpu.dot_dimension_numbers<[1], [0], [0], [1], [0, 0, 1, 1], [], []>} : vector<32x11xbf16>, vector<11x1024xbf16>, vector<32x1024xf32> -> vector<32x1024xf32>
    %5 = vector.broadcast %2 : vector<32x1xf32> to vector<32x1024xf32>
    %6 = arith.addf %4, %5 : vector<32x1024xf32>
    %c0_5 = arith.constant 0 : index
    %c0_6 = arith.constant 0 : index
    %c0_7 = arith.constant 0 : index
    %7 = vector.load %arg4[%c0_5, %c0_6, %c0_7] : memref<6x32x32xbf16, #tpu.memory_space<vmem>>, vector<1x32x32xbf16>
    %8 = vector.shape_cast %7 : vector<1x32x32xbf16> to vector<32x32xbf16>
    %c0_8 = arith.constant 0 : index
    %c0_9 = arith.constant 0 : index
    %c0_10 = arith.constant 0 : index
    %9 = vector.load %arg5[%c0_8, %c0_9, %c0_10] : memref<6x32x1xf32, #tpu.memory_space<vmem>>, vector<1x32x1xf32>
    %10 = vector.shape_cast %9 : vector<1x32x1xf32> to vector<32x1xf32>
    %11 = arith.truncf %6 : vector<32x1024xf32> to vector<32x1024xbf16>
    %cst_11 = arith.constant dense<0.000000e+00> : vector<32x1024xf32>
    %12 = tpu.matmul %8, %11, %cst_11 {dimension_numbers = #tpu.dot_dimension_numbers<[1], [0], [0], [1], [0, 0, 1, 1], [], []>} : vector<32x32xbf16>, vector<32x1024xbf16>, vector<32x1024xf32> -> vector<32x1024xf32>
    %13 = vector.broadcast %10 : vector<32x1xf32> to vector<32x1024xf32>
    %14 = arith.addf %12, %13 : vector<32x1024xf32>
    %15 = arith.negf %14 : vector<32x1024xf32>
    %16 = math.exp %15 : vector<32x1024xf32>
    %cst_12 = arith.constant 1.000000e+00 : f32
    %17 = vector.broadcast %cst_12 : f32 to vector<32x1024xf32>
    %18 = arith.addf %17, %16 : vector<32x1024xf32>
    %19 = arith.divf %17, %18 : vector<32x1024xf32>
    %20 = arith.mulf %14, %19 : vector<32x1024xf32>
    %c1 = arith.constant 1 : index
    %c0_13 = arith.constant 0 : index
    %c0_14 = arith.constant 0 : index
    %21 = vector.load %arg4[%c1, %c0_13, %c0_14] : memref<6x32x32xbf16, #tpu.memory_space<vmem>>, vector<1x32x32xbf16>
    %22 = vector.shape_cast %21 : vector<1x32x32xbf16> to vector<32x32xbf16>
    %c1_15 = arith.constant 1 : index
    %c0_16 = arith.constant 0 : index
    %c0_17 = arith.constant 0 : index
    %23 = vector.load %arg5[%c1_15, %c0_16, %c0_17] : memref<6x32x1xf32, #tpu.memory_space<vmem>>, vector<1x32x1xf32>
    %24 = vector.shape_cast %23 : vector<1x32x1xf32> to vector<32x1xf32>
    %25 = arith.truncf %20 : vector<32x1024xf32> to vector<32x1024xbf16>
    %cst_18 = arith.constant dense<0.000000e+00> : vector<32x1024xf32>
    %26 = tpu.matmul %22, %25, %cst_18 {dimension_numbers = #tpu.dot_dimension_numbers<[1], [0], [0], [1], [0, 0, 1, 1], [], []>} : vector<32x32xbf16>, vector<32x1024xbf16>, vector<32x1024xf32> -> vector<32x1024xf32>
    %27 = vector.broadcast %24 : vector<32x1xf32> to vector<32x1024xf32>
    %28 = arith.addf %26, %27 : vector<32x1024xf32>
    %29 = arith.negf %28 : vector<32x1024xf32>
    %30 = math.exp %29 : vector<32x1024xf32>
    %cst_19 = arith.constant 1.000000e+00 : f32
    %31 = vector.broadcast %cst_19 : f32 to vector<32x1024xf32>
    %32 = arith.addf %31, %30 : vector<32x1024xf32>
    %33 = arith.divf %31, %32 : vector<32x1024xf32>
    %34 = arith.mulf %28, %33 : vector<32x1024xf32>
    %35 = arith.addf %6, %34 : vector<32x1024xf32>
    %c2 = arith.constant 2 : index
    %c0_20 = arith.constant 0 : index
    %c0_21 = arith.constant 0 : index
    %36 = vector.load %arg4[%c2, %c0_20, %c0_21] : memref<6x32x32xbf16, #tpu.memory_space<vmem>>, vector<1x32x32xbf16>
    %37 = vector.shape_cast %36 : vector<1x32x32xbf16> to vector<32x32xbf16>
    %c2_22 = arith.constant 2 : index
    %c0_23 = arith.constant 0 : index
    %c0_24 = arith.constant 0 : index
    %38 = vector.load %arg5[%c2_22, %c0_23, %c0_24] : memref<6x32x1xf32, #tpu.memory_space<vmem>>, vector<1x32x1xf32>
    %39 = vector.shape_cast %38 : vector<1x32x1xf32> to vector<32x1xf32>
    %40 = arith.truncf %35 : vector<32x1024xf32> to vector<32x1024xbf16>
    %cst_25 = arith.constant dense<0.000000e+00> : vector<32x1024xf32>
    %41 = tpu.matmul %37, %40, %cst_25 {dimension_numbers = #tpu.dot_dimension_numbers<[1], [0], [0], [1], [0, 0, 1, 1], [], []>} : vector<32x32xbf16>, vector<32x1024xbf16>, vector<32x1024xf32> -> vector<32x1024xf32>
    %42 = vector.broadcast %39 : vector<32x1xf32> to vector<32x1024xf32>
    %43 = arith.addf %41, %42 : vector<32x1024xf32>
    %44 = arith.negf %43 : vector<32x1024xf32>
    %45 = math.exp %44 : vector<32x1024xf32>
    %cst_26 = arith.constant 1.000000e+00 : f32
    %46 = vector.broadcast %cst_26 : f32 to vector<32x1024xf32>
    %47 = arith.addf %46, %45 : vector<32x1024xf32>
    %48 = arith.divf %46, %47 : vector<32x1024xf32>
    %49 = arith.mulf %43, %48 : vector<32x1024xf32>
    %c3 = arith.constant 3 : index
    %c0_27 = arith.constant 0 : index
    %c0_28 = arith.constant 0 : index
    %50 = vector.load %arg4[%c3, %c0_27, %c0_28] : memref<6x32x32xbf16, #tpu.memory_space<vmem>>, vector<1x32x32xbf16>
    %51 = vector.shape_cast %50 : vector<1x32x32xbf16> to vector<32x32xbf16>
    %c3_29 = arith.constant 3 : index
    %c0_30 = arith.constant 0 : index
    %c0_31 = arith.constant 0 : index
    %52 = vector.load %arg5[%c3_29, %c0_30, %c0_31] : memref<6x32x1xf32, #tpu.memory_space<vmem>>, vector<1x32x1xf32>
    %53 = vector.shape_cast %52 : vector<1x32x1xf32> to vector<32x1xf32>
    %54 = arith.truncf %49 : vector<32x1024xf32> to vector<32x1024xbf16>
    %cst_32 = arith.constant dense<0.000000e+00> : vector<32x1024xf32>
    %55 = tpu.matmul %51, %54, %cst_32 {dimension_numbers = #tpu.dot_dimension_numbers<[1], [0], [0], [1], [0, 0, 1, 1], [], []>} : vector<32x32xbf16>, vector<32x1024xbf16>, vector<32x1024xf32> -> vector<32x1024xf32>
    %56 = vector.broadcast %53 : vector<32x1xf32> to vector<32x1024xf32>
    %57 = arith.addf %55, %56 : vector<32x1024xf32>
    %58 = arith.negf %57 : vector<32x1024xf32>
    %59 = math.exp %58 : vector<32x1024xf32>
    %cst_33 = arith.constant 1.000000e+00 : f32
    %60 = vector.broadcast %cst_33 : f32 to vector<32x1024xf32>
    %61 = arith.addf %60, %59 : vector<32x1024xf32>
    %62 = arith.divf %60, %61 : vector<32x1024xf32>
    %63 = arith.mulf %57, %62 : vector<32x1024xf32>
    %64 = arith.addf %35, %63 : vector<32x1024xf32>
    %c4 = arith.constant 4 : index
    %c0_34 = arith.constant 0 : index
    %c0_35 = arith.constant 0 : index
    %65 = vector.load %arg4[%c4, %c0_34, %c0_35] : memref<6x32x32xbf16, #tpu.memory_space<vmem>>, vector<1x32x32xbf16>
    %66 = vector.shape_cast %65 : vector<1x32x32xbf16> to vector<32x32xbf16>
    %c4_36 = arith.constant 4 : index
    %c0_37 = arith.constant 0 : index
    %c0_38 = arith.constant 0 : index
    %67 = vector.load %arg5[%c4_36, %c0_37, %c0_38] : memref<6x32x1xf32, #tpu.memory_space<vmem>>, vector<1x32x1xf32>
    %68 = vector.shape_cast %67 : vector<1x32x1xf32> to vector<32x1xf32>
    %69 = arith.truncf %64 : vector<32x1024xf32> to vector<32x1024xbf16>
    %cst_39 = arith.constant dense<0.000000e+00> : vector<32x1024xf32>
    %70 = tpu.matmul %66, %69, %cst_39 {dimension_numbers = #tpu.dot_dimension_numbers<[1], [0], [0], [1], [0, 0, 1, 1], [], []>} : vector<32x32xbf16>, vector<32x1024xbf16>, vector<32x1024xf32> -> vector<32x1024xf32>
    %71 = vector.broadcast %68 : vector<32x1xf32> to vector<32x1024xf32>
    %72 = arith.addf %70, %71 : vector<32x1024xf32>
    %73 = arith.negf %72 : vector<32x1024xf32>
    %74 = math.exp %73 : vector<32x1024xf32>
    %cst_40 = arith.constant 1.000000e+00 : f32
    %75 = vector.broadcast %cst_40 : f32 to vector<32x1024xf32>
    %76 = arith.addf %75, %74 : vector<32x1024xf32>
    %77 = arith.divf %75, %76 : vector<32x1024xf32>
    %78 = arith.mulf %72, %77 : vector<32x1024xf32>
    %c5 = arith.constant 5 : index
    %c0_41 = arith.constant 0 : index
    %c0_42 = arith.constant 0 : index
    %79 = vector.load %arg4[%c5, %c0_41, %c0_42] : memref<6x32x32xbf16, #tpu.memory_space<vmem>>, vector<1x32x32xbf16>
    %80 = vector.shape_cast %79 : vector<1x32x32xbf16> to vector<32x32xbf16>
    %c5_43 = arith.constant 5 : index
    %c0_44 = arith.constant 0 : index
    %c0_45 = arith.constant 0 : index
    %81 = vector.load %arg5[%c5_43, %c0_44, %c0_45] : memref<6x32x1xf32, #tpu.memory_space<vmem>>, vector<1x32x1xf32>
    %82 = vector.shape_cast %81 : vector<1x32x1xf32> to vector<32x1xf32>
    %83 = arith.truncf %78 : vector<32x1024xf32> to vector<32x1024xbf16>
    %cst_46 = arith.constant dense<0.000000e+00> : vector<32x1024xf32>
    %84 = tpu.matmul %80, %83, %cst_46 {dimension_numbers = #tpu.dot_dimension_numbers<[1], [0], [0], [1], [0, 0, 1, 1], [], []>} : vector<32x32xbf16>, vector<32x1024xbf16>, vector<32x1024xf32> -> vector<32x1024xf32>
    %85 = vector.broadcast %82 : vector<32x1xf32> to vector<32x1024xf32>
    %86 = arith.addf %84, %85 : vector<32x1024xf32>
    %87 = arith.negf %86 : vector<32x1024xf32>
    %88 = math.exp %87 : vector<32x1024xf32>
    %cst_47 = arith.constant 1.000000e+00 : f32
    %89 = vector.broadcast %cst_47 : f32 to vector<32x1024xf32>
    %90 = arith.addf %89, %88 : vector<32x1024xf32>
    %91 = arith.divf %89, %90 : vector<32x1024xf32>
    %92 = arith.mulf %86, %91 : vector<32x1024xf32>
    %93 = arith.addf %64, %92 : vector<32x1024xf32>
    %c0_48 = arith.constant 0 : index
    %c0_49 = arith.constant 0 : index
    %94 = vector.load %arg6[%c0_48, %c0_49] : memref<1x32xbf16, #tpu.memory_space<vmem>>, vector<1x32xbf16>
    %c0_50 = arith.constant 0 : index
    %c0_51 = arith.constant 0 : index
    %95 = vector.load %arg7[%c0_50, %c0_51] : memref<1x1xf32, #tpu.memory_space<vmem>>, vector<1x1xf32>
    %96 = arith.truncf %93 : vector<32x1024xf32> to vector<32x1024xbf16>
    %cst_52 = arith.constant dense<0.000000e+00> : vector<1x1024xf32>
    %97 = tpu.matmul %94, %96, %cst_52 {dimension_numbers = #tpu.dot_dimension_numbers<[1], [0], [0], [1], [0, 0, 1, 1], [], []>} : vector<1x32xbf16>, vector<32x1024xbf16>, vector<1x1024xf32> -> vector<1x1024xf32>
    %98 = vector.broadcast %95 : vector<1x1xf32> to vector<1x1024xf32>
    %99 = arith.addf %97, %98 : vector<1x1024xf32>
    %c0_53 = arith.constant 0 : index
    %c0_54 = arith.constant 0 : index
    %100 = vector.load %arg8[%c0_53, %c0_54] : memref<1x1024xf32, #tpu.memory_space<vmem>>, vector<1x1024xf32>
    tpu.vector_store %arg8[%c0_53, %c0_54], %99 {strides = array<i32>} : memref<1x1024xf32, #tpu.memory_space<vmem>>, vector<1x1024xf32>,
    return
  }
  func.func @transform_0(%arg0: i32) -> (i32, i32) {
    %c0_i32 = arith.constant 0 : i32
    %c0_i32_0 = arith.constant 0 : i32
    return %c0_i32, %arg0 : i32, i32
  }
  func.func @transform_1(%arg0: i32) -> (i32, i32) {
    %c0_i32 = arith.constant 0 : i32
    %c0_i32_0 = arith.constant 0 : i32
    %c0_i32_1 = arith.constant 0 : i32
    return %c0_i32, %c0_i32_0 : i32, i32
  }
  func.func @transform_2(%arg0: i32) -> (i32, i32) {
    %c0_i32 = arith.constant 0 : i32
    %c0_i32_0 = arith.constant 0 : i32
    %c0_i32_1 = arith.constant 0 : i32
    return %c0_i32, %c0_i32_0 : i32, i32
  }
  func.func @transform_3(%arg0: i32) -> (i32, i32, i32) {
    %c0_i32 = arith.constant 0 : i32
    %c0_i32_0 = arith.constant 0 : i32
    %c0_i32_1 = arith.constant 0 : i32
    %c0_i32_2 = arith.constant 0 : i32
    return %c0_i32, %c0_i32_0, %c0_i32_1 : i32, i32, i32
  }
  func.func @transform_4(%arg0: i32) -> (i32, i32, i32) {
    %c0_i32 = arith.constant 0 : i32
    %c0_i32_0 = arith.constant 0 : i32
    %c0_i32_1 = arith.constant 0 : i32
    %c0_i32_2 = arith.constant 0 : i32
    return %c0_i32, %c0_i32_0, %c0_i32_1 : i32, i32, i32
  }
  func.func @transform_5(%arg0: i32) -> (i32, i32) {
    %c0_i32 = arith.constant 0 : i32
    %c0_i32_0 = arith.constant 0 : i32
    %c0_i32_1 = arith.constant 0 : i32
    return %c0_i32, %c0_i32_0 : i32, i32
  }
  func.func @transform_6(%arg0: i32) -> (i32, i32) {
    %c0_i32 = arith.constant 0 : i32
    %c0_i32_0 = arith.constant 0 : i32
    %c0_i32_1 = arith.constant 0 : i32
    return %c0_i32, %c0_i32_0 : i32, i32
  }
  func.func @transform_7(%arg0: i32) -> (i32, i32) {
    %c0_i32 = arith.constant 0 : i32
    %c0_i32_0 = arith.constant 0 : i32
    return %c0_i32, %arg0 : i32, i32
  }
}

</mosaic_0001>

<llo_original>
// kernel: net_forward.1
$region0: #{net_forward.1}
  #allocation0 [shape = 'u32[]', space=smem, size = 0x4, offset = 0x4, fixed_abs, tag = 'smem constant byte address 0x4 - core index']
  #allocation1 [shape = 'u32[72,128]{1,0:T(1,128)}', space=vmem, size = 0x9000, scoped, tag = 'internal scratch']
  #allocation2 [shape = 'f32[1,1]{1,0:T(1,128)S(1)}', space=vmem, size = 0x200, scoped, tag = 'scoped memory for net_forward.1']
  %s0 = inlined_call_operand.vmem [shape: f32[11,1024], index: 0, kind: input, shape index: {}]
  %s1 = inlined_call_operand.vmem [shape: bf16[32,11], index: 1, kind: input, shape index: {}]
  %s2 = inlined_call_operand.vmem [shape: f32[32,1], index: 2, kind: input, shape index: {}]
  %s3 = inlined_call_operand.vmem [shape: bf16[6,32,32], index: 3, kind: input, shape index: {}]
  %s4 = inlined_call_operand.vmem [shape: f32[6,32,1], index: 4, kind: input, shape index: {}]
  %s5 = inlined_call_operand.vmem [shape: bf16[1,32], index: 5, kind: input, shape index: {}]
  %s6 = inlined_call_operand.<no memory space> [shape: f32[1,1], index: 6, kind: input, shape index: {}]
  %s7 = inlined_call_operand.vmem [shape: f32[1,1024], index: 7, kind: output, shape index: {}]
  %s8 = sld [smem:[#allocation0]]
  $region38: #{net_forward.1} parent=0
    _
  %s10 = ssub.s32 1, %s8
  %s11 = scalar_select 0, %s10, %s8
  %v12 = vstv %s6
  %13 = vst [vmem:[#allocation2] sm:$0x1] %v12
  // Predicated region
  $region2: #{net_forward.1} parent=0 // pred_check
    _
  $region3: #{net_forward.1} parent=0 // pred_check_branch
    %15 = sbr.rel (0) target = $region5
  $region4: #{net_forward.1} parent=0 // pred_region
    _
  $region5: #{net_forward.1} parent=0 // pred_fallthru
    _
  // Predicated region
  $region6: #{net_forward.1} parent=0 // pred_check
    _
  $region7: #{net_forward.1} parent=0 // pred_check_branch
    %17 = sbr.rel (0) target = $region9
  $region8: #{net_forward.1} parent=0 // pred_region
    _
  $region9: #{net_forward.1} parent=0 // pred_fallthru
    _
  // Predicated region
  $region10: #{net_forward.1} parent=0 // pred_check
    _
  $region11: #{net_forward.1} parent=0 // pred_check_branch
    %19 = sbr.rel (0) target = $region13
  $region12: #{net_forward.1} parent=0 // pred_region
    _
  $region13: #{net_forward.1} parent=0 // pred_fallthru
    _
  // Predicated region
  $region14: #{net_forward.1} parent=0 // pred_check
    _
  $region15: #{net_forward.1} parent=0 // pred_check_branch
    %21 = sbr.rel (0) target = $region17
  $region16: #{net_forward.1} parent=0 // pred_region
    _
  $region17: #{net_forward.1} parent=0 // pred_fallthru
    _
  // Predicated region
  $region18: #{net_forward.1} parent=0 // pred_check
    _
  $region19: #{net_forward.1} parent=0 // pred_check_branch
    %23 = sbr.rel (0) target = $region21
  $region20: #{net_forward.1} parent=0 // pred_region
    _
  $region21: #{net_forward.1} parent=0 // pred_fallthru
    _
  // Predicated region
  $region22: #{net_forward.1} parent=0 // pred_check
    _
  $region23: #{net_forward.1} parent=0 // pred_check_branch
    %25 = sbr.rel (0) target = $region25
  $region24: #{net_forward.1} parent=0 // pred_region
    _
  $region25: #{net_forward.1} parent=0 // pred_fallthru
    _
  // Predicated region
  $region26: #{net_forward.1} parent=0 // pred_check
    _
  $region27: #{net_forward.1} parent=0 // pred_check_branch
    %27 = sbr.rel (0) target = $region29
  $region28: #{net_forward.1} parent=0 // pred_region
    _
  $region29: #{net_forward.1} parent=0 // pred_fallthru
    _
  %v29 = vld [vmem:[%s1] sm:$0xf]
  %v30 = vld [vmem:[%s1 + $0x4] sm:$0xf]
  %v31 = vld [vmem:[%s1 + $0x8] sm:$0xf]
  %v32 = vld [vmem:[%s1 + $0xc] sm:$0xf]
  %v33 = vld [vmem:[%s0] sm:$0xff]
  %v34 = vld [vmem:[%s0 + $0x8] sm:$0xff]
  %v35 = vld [vmem:[%s0 + $0x10] sm:$0xff]
  %v36 = vld [vmem:[%s0 + $0x18] sm:$0xff]
  %v37 = vld [vmem:[%s0 + $0x20] sm:$0xff]
  %v38 = vld [vmem:[%s0 + $0x28] sm:$0xff]
  %v39 = vld [vmem:[%s0 + $0x30] sm:$0xff]
  %v40 = vld [vmem:[%s0 + $0x38] sm:$0xff]
  %v41 = vld [vmem:[%s0 + $0x40] sm:$0x7]
  %v42 = vld [vmem:[%s0 + $0x48] sm:$0x7]
  %v43 = vld [vmem:[%s0 + $0x50] sm:$0x7]
  %v44 = vld [vmem:[%s0 + $0x58] sm:$0x7]
  %v45 = vld [vmem:[%s0 + $0x60] sm:$0x7]
  %v46 = vld [vmem:[%s0 + $0x68] sm:$0x7]
  %v47 = vld [vmem:[%s0 + $0x70] sm:$0x7]
  %v48 = vld [vmem:[%s0 + $0x78] sm:$0x7]
  %v49 = vld [vmem:[%s2] sm:$0xff]
  %v50 = vld [vmem:[%s2 + $0x8] sm:$0xff]
  %v51 = vld [vmem:[%s2 + $0x10] sm:$0xff]
  %v52 = vld [vmem:[%s2 + $0x18] sm:$0xff]
  %v53 = vpack.c.bf16 %v41, %v33
  %v54 = vpack.c.bf16 %v42, %v34
  %v55 = vpack.c.bf16 %v43, %v35
  %v56 = vpack.c.bf16 %v44, %v36
  %v57 = vpack.c.bf16 %v45, %v37
  %v58 = vpack.c.bf16 %v46, %v38
  %v59 = vpack.c.bf16 %v47, %v39
  %v60 = vpack.c.bf16 %v48, %v40
  %62 = vset.pattern.permute.xlu0 0
  %63 = vperm.xlu0 %62, %v49
  %v64 = vpop.permute.xlu0 %63
  %67 = vset.pattern.permute.xlu0 0
  %68 = vperm.xlu0 %67, %v50
  %v69 = vpop.permute.xlu0 %68
  %72 = vset.pattern.permute.xlu0 0
  %73 = vperm.xlu0 %72, %v51
  %v74 = vpop.permute.xlu0 %73
  %77 = vset.pattern.permute.xlu0 0
  %78 = vperm.xlu0 %77, %v52
  %v79 = vpop.permute.xlu0 %78
  %v85 = vunpack.c.l.b16 %v29
  %v86 = vunpack.c.l.b16 %v30
  %v87 = vunpack.c.l.b16 %v31
  %v88 = vunpack.c.l.b16 %v32
  %v89 = vpack.c.b16 %v86, %v85
  %v90 = vpack.c.b16 %v88, %v87
  %vm91 = vcmask 89088
  %v93 = vsel %vm91, %v89, 0
  %v96 = vsel %vm91, %v90, 0
  %vm98 = vcmask 1044480
  %vm99 = vcmask 1045504
  %v100 = vsel %vm98, 4294967295, 65535
  %v101 = vsel %vm99, %v100, 0
  %v103 = vand.u32 %v53, %v101
  %v106 = vand.u32 %v54, %v101
  %v109 = vand.u32 %v55, %v101
  %v112 = vand.u32 %v56, %v101
  %v115 = vand.u32 %v57, %v101
  %v118 = vand.u32 %v58, %v101
  %v121 = vand.u32 %v59, %v101
  %v124 = vand.u32 %v60, %v101
  %126 = vmatpush.bf16.msra.mxu0 0
  %127 = vmatpush.bf16.msra.mxu0 0
  %128 = vmatpush.bf16.msra.mxu0 0
  %129 = vmatpush.bf16.msra.mxu0 0
  %130 = vmatpush.bf16.msra.mxu0 0
  %131 = vmatpush.bf16.msra.mxu0 0
  %132 = vmatpush.bf16.msra.mxu0 0
  %133 = vmatpush.bf16.msra.mxu0 %v103
  %134 = vmatmul.bf16.gmra.mxu0 %v93
  %v135 = vpop.f32.mrf.mxu0
  %v136 = vadd.f32 %v64, %v135
  %v137 = vpop.f32.mrf.mxu0
  %v138 = vadd.f32 %v69, %v137
  %139 = vmatmul.bf16.gmra.mxu0 %v96
  %v140 = vpop.f32.mrf.mxu0
  %v141 = vadd.f32 %v74, %v140
  %v142 = vpop.f32.mrf.mxu0
  %v143 = vadd.f32 %v79, %v142
  %144 = vdwg.mxu0
  %145 = vmatpush.bf16.msra.mxu0 0
  %146 = vmatpush.bf16.msra.mxu0 0
  %147 = vmatpush.bf16.msra.mxu0 0
  %148 = vmatpush.bf16.msra.mxu0 0
  %149 = vmatpush.bf16.msra.mxu0 0
  %150 = vmatpush.bf16.msra.mxu0 0
  %151 = vmatpush.bf16.msra.mxu0 0
  %152 = vmatpush.bf16.msra.mxu0 %v106
  %153 = vmatmul.bf16.gmra.mxu0 %v93
  %v154 = vpop.f32.mrf.mxu0
  %v155 = vadd.f32 %v64, %v154
  %v156 = vpop.f32.mrf.mxu0
  %v157 = vadd.f32 %v69, %v156
  %158 = vmatmul.bf16.gmra.mxu0 %v96
  %v159 = vpop.f32.mrf.mxu0
  %v160 = vadd.f32 %v74, %v159
  %v161 = vpop.f32.mrf.mxu0
  %v162 = vadd.f32 %v79, %v161
  %163 = vdwg.mxu0
  %164 = vmatpush.bf16.msra.mxu0 0
  %165 = vmatpush.bf16.msra.mxu0 0
  %166 = vmatpush.bf16.msra.mxu0 0
  %167 = vmatpush.bf16.msra.mxu0 0
  %168 = vmatpush.bf16.msra.mxu0 0
  %169 = vmatpush.bf16.msra.mxu0 0
  %170 = vmatpush.bf16.msra.mxu0 0
  %171 = vmatpush.bf16.msra.mxu0 %v109
  %172 = vmatmul.bf16.gmra.mxu0 %v93
  %v173 = vpop.f32.mrf.mxu0
  %v174 = vadd.f32 %v64, %v173
  %v175 = vpop.f32.mrf.mxu0
  %v176 = vadd.f32 %v69, %v175
  %177 = vmatmul.bf16.gmra.mxu0 %v96
  %v178 = vpop.f32.mrf.mxu0
  %v179 = vadd.f32 %v74, %v178
  %v180 = vpop.f32.mrf.mxu0
  %v181 = vadd.f32 %v79, %v180
  %182 = vdwg.mxu0
  %183 = vmatpush.bf16.msra.mxu0 0
  %184 = vmatpush.bf16.msra.mxu0 0
  %185 = vmatpush.bf16.msra.mxu0 0
  %186 = vmatpush.bf16.msra.mxu0 0
  %187 = vmatpush.bf16.msra.mxu0 0
  %188 = vmatpush.bf16.msra.mxu0 0
  %189 = vmatpush.bf16.msra.mxu0 0
  %190 = vmatpush.bf16.msra.mxu0 %v112
  %191 = vmatmul.bf16.gmra.mxu0 %v93
  %v192 = vpop.f32.mrf.mxu0
  %v193 = vadd.f32 %v64, %v192
  %v194 = vpop.f32.mrf.mxu0
  %v195 = vadd.f32 %v69, %v194
  %196 = vmatmul.bf16.gmra.mxu0 %v96
  %v197 = vpop.f32.mrf.mxu0
  %v198 = vadd.f32 %v74, %v197
  %v199 = vpop.f32.mrf.mxu0
  %v200 = vadd.f32 %v79, %v199
  %201 = vdwg.mxu0
  %202 = vmatpush.bf16.msra.mxu0 0
  %203 = vmatpush.bf16.msra.mxu0 0
  %204 = vmatpush.bf16.msra.mxu0 0
  %205 = vmatpush.bf16.msra.mxu0 0
  %206 = vmatpush.bf16.msra.mxu0 0
  %207 = vmatpush.bf16.msra.mxu0 0
  %208 = vmatpush.bf16.msra.mxu0 0
  %209 = vmatpush.bf16.msra.mxu0 %v115
  %210 = vmatmul.bf16.gmra.mxu0 %v93
  %v211 = vpop.f32.mrf.mxu0
  %v212 = vadd.f32 %v64, %v211
  %v213 = vpop.f32.mrf.mxu0
  %v214 = vadd.f32 %v69, %v213
  %215 = vmatmul.bf16.gmra.mxu0 %v96
  %v216 = vpop.f32.mrf.mxu0
  %v217 = vadd.f32 %v74, %v216
  %v218 = vpop.f32.mrf.mxu0
  %v219 = vadd.f32 %v79, %v218
  %220 = vdwg.mxu0
  %221 = vmatpush.bf16.msra.mxu0 0
  %222 = vmatpush.bf16.msra.mxu0 0
  %223 = vmatpush.bf16.msra.mxu0 0
  %224 = vmatpush.bf16.msra.mxu0 0
  %225 = vmatpush.bf16.msra.mxu0 0
  %226 = vmatpush.bf16.msra.mxu0 0
  %227 = vmatpush.bf16.msra.mxu0 0
  %228 = vmatpush.bf16.msra.mxu0 %v118
  %229 = vmatmul.bf16.gmra.mxu0 %v93
  %v230 = vpop.f32.mrf.mxu0
  %v231 = vadd.f32 %v64, %v230
  %v232 = vpop.f32.mrf.mxu0
  %v233 = vadd.f32 %v69, %v232
  %234 = vmatmul.bf16.gmra.mxu0 %v96
  %v235 = vpop.f32.mrf.mxu0
  %v236 = vadd.f32 %v74, %v235
  %v237 = vpop.f32.mrf.mxu0
  %v238 = vadd.f32 %v79, %v237
  %239 = vdwg.mxu0
  %240 = vmatpush.bf16.msra.mxu0 0
  %241 = vmatpush.bf16.msra.mxu0 0
  %242 = vmatpush.bf16.msra.mxu0 0
  %243 = vmatpush.bf16.msra.mxu0 0
  %244 = vmatpush.bf16.msra.mxu0 0
  %245 = vmatpush.bf16.msra.mxu0 0
  %246 = vmatpush.bf16.msra.mxu0 0
  %247 = vmatpush.bf16.msra.mxu0 %v121
  %248 = vmatmul.bf16.gmra.mxu0 %v93
  %v249 = vpop.f32.mrf.mxu0
  %v250 = vadd.f32 %v64, %v249
  %v251 = vpop.f32.mrf.mxu0
  %v252 = vadd.f32 %v69, %v251
  %253 = vmatmul.bf16.gmra.mxu0 %v96
  %v254 = vpop.f32.mrf.mxu0
  %v255 = vadd.f32 %v74, %v254
  %v256 = vpop.f32.mrf.mxu0
  %v257 = vadd.f32 %v79, %v256
  %258 = vdwg.mxu0
  %259 = vmatpush.bf16.msra.mxu0 0
  %260 = vmatpush.bf16.msra.mxu0 0
  %261 = vmatpush.bf16.msra.mxu0 0
  %262 = vmatpush.bf16.msra.mxu0 0
  %263 = vmatpush.bf16.msra.mxu0 0
  %264 = vmatpush.bf16.msra.mxu0 0
  %265 = vmatpush.bf16.msra.mxu0 0
  %266 = vmatpush.bf16.msra.mxu0 %v124
  %267 = vmatmul.bf16.gmra.mxu0 %v93
  %v268 = vpop.f32.mrf.mxu0
  %v269 = vadd.f32 %v64, %v268
  %v270 = vpop.f32.mrf.mxu0
  %v271 = vadd.f32 %v69, %v270
  %272 = vmatmul.bf16.gmra.mxu0 %v96
  %v273 = vpop.f32.mrf.mxu0
  %v274 = vadd.f32 %v74, %v273
  %v275 = vpop.f32.mrf.mxu0
  %v276 = vadd.f32 %v79, %v275
  %277 = vdwg.mxu0
  %v278 = vld [vmem:[%s3] sm:$0xf]
  %v279 = vld [vmem:[%s3 + $0x4] sm:$0xf]
  %v280 = vld [vmem:[%s3 + $0x8] sm:$0xf]
  %v281 = vld [vmem:[%s3 + $0xc] sm:$0xf]
  %v282 = vld [vmem:[%s4] sm:$0xff]
  %v283 = vld [vmem:[%s4 + $0x8] sm:$0xff]
  %v284 = vld [vmem:[%s4 + $0x10] sm:$0xff]
  %v285 = vld [vmem:[%s4 + $0x18] sm:$0xff]
  %v286 = vpack.c.bf16 %v138, %v136
  %v287 = vpack.c.bf16 %v157, %v155
  %v288 = vpack.c.bf16 %v176, %v174
  %v289 = vpack.c.bf16 %v195, %v193
  %v290 = vpack.c.bf16 %v214, %v212
  %v291 = vpack.c.bf16 %v233, %v231
  %v292 = vpack.c.bf16 %v252, %v250
  %v293 = vpack.c.bf16 %v271, %v269
  %v294 = vpack.c.bf16 %v143, %v141
  %v295 = vpack.c.bf16 %v162, %v160
  %v296 = vpack.c.bf16 %v181, %v179
  %v297 = vpack.c.bf16 %v200, %v198
  %v298 = vpack.c.bf16 %v219, %v217
  %v299 = vpack.c.bf16 %v238, %v236
  %v300 = vpack.c.bf16 %v257, %v255
  %v301 = vpack.c.bf16 %v276, %v274
  %303 = vset.pattern.permute.xlu0 0
  %304 = vperm.xlu0 %303, %v282
  %v305 = vpop.permute.xlu0 %304
  %308 = vset.pattern.permute.xlu0 0
  %309 = vperm.xlu0 %308, %v283
  %v310 = vpop.permute.xlu0 %309
  %313 = vset.pattern.permute.xlu0 0
  %314 = vperm.xlu0 %313, %v284
  %v315 = vpop.permute.xlu0 %314
  %318 = vset.pattern.permute.xlu0 0
  %319 = vperm.xlu0 %318, %v285
  %v320 = vpop.permute.xlu0 %319
  %v326 = vunpack.c.l.b16 %v278
  %v327 = vunpack.c.l.b16 %v279
  %v328 = vunpack.c.l.b16 %v280
  %v329 = vunpack.c.l.b16 %v281
  %v330 = vpack.c.b16 %v327, %v326
  %v331 = vpack.c.b16 %v329, %v328
  %vm332 = vcmask 261120
  %v334 = vsel %vm332, %v330, 0
  %v337 = vsel %vm332, %v331, 0
  %339 = vmatpush.bf16.msra.mxu0 0
  %340 = vmatpush.bf16.msra.mxu0 0
  %341 = vmatpush.bf16.msra.mxu0 0
  %342 = vmatpush.bf16.msra.mxu0 0
  %343 = vmatpush.bf16.msra.mxu0 0
  %344 = vmatpush.bf16.msra.mxu0 0
  %345 = vmatpush.bf16.msra.mxu0 %v294
  %346 = vmatpush.bf16.msra.mxu0 %v286
  %347 = vmatmul.bf16.gmra.mxu0 %v334
  %v348 = vpop.f32.mrf.mxu0
  %v349 = vadd.f32 %v305, %v348
  %v350 = vpop.f32.mrf.mxu0
  %v351 = vadd.f32 %v310, %v350
  %352 = vmatmul.bf16.gmra.mxu0 %v337
  %v353 = vpop.f32.mrf.mxu0
  %v354 = vadd.f32 %v315, %v353
  %v355 = vpop.f32.mrf.mxu0
  %v356 = vadd.f32 %v320, %v355
  %357 = vdwg.mxu0
  %358 = vmatpush.bf16.msra.mxu0 0
  %359 = vmatpush.bf16.msra.mxu0 0
  %360 = vmatpush.bf16.msra.mxu0 0
  %361 = vmatpush.bf16.msra.mxu0 0
  %362 = vmatpush.bf16.msra.mxu0 0
  %363 = vmatpush.bf16.msra.mxu0 0
  %364 = vmatpush.bf16.msra.mxu0 %v295
  %365 = vmatpush.bf16.msra.mxu0 %v287
  %366 = vmatmul.bf16.gmra.mxu0 %v334
  %v367 = vpop.f32.mrf.mxu0
  %v368 = vadd.f32 %v305, %v367
  %v369 = vpop.f32.mrf.mxu0
  %v370 = vadd.f32 %v310, %v369
  %371 = vmatmul.bf16.gmra.mxu0 %v337
  %v372 = vpop.f32.mrf.mxu0
  %v373 = vadd.f32 %v315, %v372
  %v374 = vpop.f32.mrf.mxu0
  %v375 = vadd.f32 %v320, %v374
  %376 = vdwg.mxu0
  %377 = vmatpush.bf16.msra.mxu0 0
  %378 = vmatpush.bf16.msra.mxu0 0
  %379 = vmatpush.bf16.msra.mxu0 0
  %380 = vmatpush.bf16.msra.mxu0 0
  %381 = vmatpush.bf16.msra.mxu0 0
  %382 = vmatpush.bf16.msra.mxu0 0
  %383 = vmatpush.bf16.msra.mxu0 %v296
  %384 = vmatpush.bf16.msra.mxu0 %v288
  %385 = vmatmul.bf16.gmra.mxu0 %v334
  %v386 = vpop.f32.mrf.mxu0
  %v387 = vadd.f32 %v305, %v386
  %v388 = vpop.f32.mrf.mxu0
  %v389 = vadd.f32 %v310, %v388
  %390 = vmatmul.bf16.gmra.mxu0 %v337
  %v391 = vpop.f32.mrf.mxu0
  %v392 = vadd.f32 %v315, %v391
  %v393 = vpop.f32.mrf.mxu0
  %v394 = vadd.f32 %v320, %v393
  %395 = vdwg.mxu0
  %396 = vmatpush.bf16.msra.mxu0 0
  %397 = vmatpush.bf16.msra.mxu0 0
  %398 = vmatpush.bf16.msra.mxu0 0
  %399 = vmatpush.bf16.msra.mxu0 0
  %400 = vmatpush.bf16.msra.mxu0 0
  %401 = vmatpush.bf16.msra.mxu0 0
  %402 = vmatpush.bf16.msra.mxu0 %v297
  %403 = vmatpush.bf16.msra.mxu0 %v289
  %404 = vmatmul.bf16.gmra.mxu0 %v334
  %v405 = vpop.f32.mrf.mxu0
  %v406 = vadd.f32 %v305, %v405
  %v407 = vpop.f32.mrf.mxu0
  %v408 = vadd.f32 %v310, %v407
  %409 = vmatmul.bf16.gmra.mxu0 %v337
  %v410 = vpop.f32.mrf.mxu0
  %v411 = vadd.f32 %v315, %v410
  %v412 = vpop.f32.mrf.mxu0
  %v413 = vadd.f32 %v320, %v412
  %414 = vdwg.mxu0
  %415 = vmatpush.bf16.msra.mxu0 0
  %416 = vmatpush.bf16.msra.mxu0 0
  %417 = vmatpush.bf16.msra.mxu0 0
  %418 = vmatpush.bf16.msra.mxu0 0
  %419 = vmatpush.bf16.msra.mxu0 0
  %420 = vmatpush.bf16.msra.mxu0 0
  %421 = vmatpush.bf16.msra.mxu0 %v298
  %422 = vmatpush.bf16.msra.mxu0 %v290
  %423 = vmatmul.bf16.gmra.mxu0 %v334
  %v424 = vpop.f32.mrf.mxu0
  %v425 = vadd.f32 %v305, %v424
  %v426 = vpop.f32.mrf.mxu0
  %v427 = vadd.f32 %v310, %v426
  %428 = vmatmul.bf16.gmra.mxu0 %v337
  %v429 = vpop.f32.mrf.mxu0
  %v430 = vadd.f32 %v315, %v429
  %v431 = vpop.f32.mrf.mxu0
  %v432 = vadd.f32 %v320, %v431
  %433 = vdwg.mxu0
  %434 = vmatpush.bf16.msra.mxu0 0
  %435 = vmatpush.bf16.msra.mxu0 0
  %436 = vmatpush.bf16.msra.mxu0 0
  %437 = vmatpush.bf16.msra.mxu0 0
  %438 = vmatpush.bf16.msra.mxu0 0
  %439 = vmatpush.bf16.msra.mxu0 0
  %440 = vmatpush.bf16.msra.mxu0 %v299
  %441 = vmatpush.bf16.msra.mxu0 %v291
  %442 = vmatmul.bf16.gmra.mxu0 %v334
  %v443 = vpop.f32.mrf.mxu0
  %v444 = vadd.f32 %v305, %v443
  %v445 = vpop.f32.mrf.mxu0
  %v446 = vadd.f32 %v310, %v445
  %447 = vmatmul.bf16.gmra.mxu0 %v337
  %v448 = vpop.f32.mrf.mxu0
  %v449 = vadd.f32 %v315, %v448
  %v450 = vpop.f32.mrf.mxu0
  %v451 = vadd.f32 %v320, %v450
  %452 = vdwg.mxu0
  %453 = vmatpush.bf16.msra.mxu0 0
  %454 = vmatpush.bf16.msra.mxu0 0
  %455 = vmatpush.bf16.msra.mxu0 0
  %456 = vmatpush.bf16.msra.mxu0 0
  %457 = vmatpush.bf16.msra.mxu0 0
  %458 = vmatpush.bf16.msra.mxu0 0
  %459 = vmatpush.bf16.msra.mxu0 %v300
  %460 = vmatpush.bf16.msra.mxu0 %v292
  %461 = vmatmul.bf16.gmra.mxu0 %v334
  %v462 = vpop.f32.mrf.mxu0
  %v463 = vadd.f32 %v305, %v462
  %v464 = vpop.f32.mrf.mxu0
  %v465 = vadd.f32 %v310, %v464
  %466 = vmatmul.bf16.gmra.mxu0 %v337
  %v467 = vpop.f32.mrf.mxu0
  %v468 = vadd.f32 %v315, %v467
  %v469 = vpop.f32.mrf.mxu0
  %v470 = vadd.f32 %v320, %v469
  %471 = vdwg.mxu0
  %472 = vmatpush.bf16.msra.mxu0 0
  %473 = vmatpush.bf16.msra.mxu0 0
  %474 = vmatpush.bf16.msra.mxu0 0
  %475 = vmatpush.bf16.msra.mxu0 0
  %476 = vmatpush.bf16.msra.mxu0 0
  %477 = vmatpush.bf16.msra.mxu0 0
  %478 = vmatpush.bf16.msra.mxu0 %v301
  %479 = vmatpush.bf16.msra.mxu0 %v293
  %480 = vmatmul.bf16.gmra.mxu0 %v334
  %v481 = vpop.f32.mrf.mxu0
  %v482 = vadd.f32 %v305, %v481
  %v483 = vpop.f32.mrf.mxu0
  %v484 = vadd.f32 %v310, %v483
  %485 = vmatmul.bf16.gmra.mxu0 %v337
  %v486 = vpop.f32.mrf.mxu0
  %v487 = vadd.f32 %v315, %v486
  %v488 = vpop.f32.mrf.mxu0
  %v489 = vadd.f32 %v320, %v488
  %490 = vdwg.mxu0
  %v491 = vxor.u32 %v349, 2147483648
  %v492 = vxor.u32 %v368, 2147483648
  %v493 = vxor.u32 %v387, 2147483648
  %v494 = vxor.u32 %v406, 2147483648
  %v495 = vxor.u32 %v425, 2147483648
  %v496 = vxor.u32 %v444, 2147483648
  %v497 = vxor.u32 %v463, 2147483648
  %v498 = vxor.u32 %v482, 2147483648
  %v499 = vxor.u32 %v351, 2147483648
  %v500 = vxor.u32 %v370, 2147483648
  %v501 = vxor.u32 %v389, 2147483648
  %v502 = vxor.u32 %v408, 2147483648
  %v503 = vxor.u32 %v427, 2147483648
  %v504 = vxor.u32 %v446, 2147483648
  %v505 = vxor.u32 %v465, 2147483648
  %v506 = vxor.u32 %v484, 2147483648
  %v507 = vxor.u32 %v354, 2147483648
  %v508 = vxor.u32 %v373, 2147483648
  %v509 = vxor.u32 %v392, 2147483648
  %v510 = vxor.u32 %v411, 2147483648
  %v511 = vxor.u32 %v430, 2147483648
  %v512 = vxor.u32 %v449, 2147483648
  %v513 = vxor.u32 %v468, 2147483648
  %v514 = vxor.u32 %v487, 2147483648
  %v515 = vxor.u32 %v356, 2147483648
  %v516 = vxor.u32 %v375, 2147483648
  %v517 = vxor.u32 %v394, 2147483648
  %v518 = vxor.u32 %v413, 2147483648
  %v519 = vxor.u32 %v432, 2147483648
  %v520 = vxor.u32 %v451, 2147483648
  %v521 = vxor.u32 %v470, 2147483648
  %v522 = vxor.u32 %v489, 2147483648
  %v523 = vmul.f32 %v491, 1.442695
  %v524 = vpow.pop %v523
  %v525 = vmul.f32 %v492, 1.442695
  %v526 = vpow.pop %v525
  %v527 = vmul.f32 %v493, 1.442695
  %v528 = vpow.pop %v527
  %v529 = vmul.f32 %v494, 1.442695
  %v530 = vpow.pop %v529
  %v531 = vmul.f32 %v495, 1.442695
  %v532 = vpow.pop %v531
  %v533 = vmul.f32 %v496, 1.442695
  %v534 = vpow.pop %v533
  %v535 = vmul.f32 %v497, 1.442695
  %v536 = vpow.pop %v535
  %v537 = vmul.f32 %v498, 1.442695
  %v538 = vpow.pop %v537
  %v539 = vmul.f32 %v499, 1.442695
  %v540 = vpow.pop %v539
  %v541 = vmul.f32 %v500, 1.442695
  %v542 = vpow.pop %v541
  %v543 = vmul.f32 %v501, 1.442695
  %v544 = vpow.pop %v543
  %v545 = vmul.f32 %v502, 1.442695
  %v546 = vpow.pop %v545
  %v547 = vmul.f32 %v503, 1.442695
  %v548 = vpow.pop %v547
  %v549 = vmul.f32 %v504, 1.442695
  %v550 = vpow.pop %v549
  %v551 = vmul.f32 %v505, 1.442695
  %v552 = vpow.pop %v551
  %v553 = vmul.f32 %v506, 1.442695
  %v554 = vpow.pop %v553
  %v555 = vmul.f32 %v507, 1.442695
  %v556 = vpow.pop %v555
  %v557 = vmul.f32 %v508, 1.442695
  %v558 = vpow.pop %v557
  %v559 = vmul.f32 %v509, 1.442695
  %v560 = vpow.pop %v559
  %v561 = vmul.f32 %v510, 1.442695
  %v562 = vpow.pop %v561
  %v563 = vmul.f32 %v511, 1.442695
  %v564 = vpow.pop %v563
  %v565 = vmul.f32 %v512, 1.442695
  %v566 = vpow.pop %v565
  %v567 = vmul.f32 %v513, 1.442695
  %v568 = vpow.pop %v567
  %v569 = vmul.f32 %v514, 1.442695
  %v570 = vpow.pop %v569
  %v571 = vmul.f32 %v515, 1.442695
  %v572 = vpow.pop %v571
  %v573 = vmul.f32 %v516, 1.442695
  %v574 = vpow.pop %v573
  %v575 = vmul.f32 %v517, 1.442695
  %v576 = vpow.pop %v575
  %v577 = vmul.f32 %v518, 1.442695
  %v578 = vpow.pop %v577
  %v579 = vmul.f32 %v519, 1.442695
  %v580 = vpow.pop %v579
  %v581 = vmul.f32 %v520, 1.442695
  %v582 = vpow.pop %v581
  %v583 = vmul.f32 %v521, 1.442695
  %v584 = vpow.pop %v583
  %v585 = vmul.f32 %v522, 1.442695
  %v586 = vpow.pop %v585
  %v587 = vadd.f32 %v524, 1.0
  %v588 = vadd.f32 %v526, 1.0
  %v589 = vadd.f32 %v528, 1.0
  %v590 = vadd.f32 %v530, 1.0
  %v591 = vadd.f32 %v532, 1.0
  %v592 = vadd.f32 %v534, 1.0
  %v593 = vadd.f32 %v536, 1.0
  %v594 = vadd.f32 %v538, 1.0
  %v595 = vadd.f32 %v540, 1.0
  %v596 = vadd.f32 %v542, 1.0
  %v597 = vadd.f32 %v544, 1.0
  %v598 = vadd.f32 %v546, 1.0
  %v599 = vadd.f32 %v548, 1.0
  %v600 = vadd.f32 %v550, 1.0
  %v601 = vadd.f32 %v552, 1.0
  %v602 = vadd.f32 %v554, 1.0
  %v603 = vadd.f32 %v556, 1.0
  %v604 = vadd.f32 %v558, 1.0
  %v605 = vadd.f32 %v560, 1.0
  %v606 = vadd.f32 %v562, 1.0
  %v607 = vadd.f32 %v564, 1.0
  %v608 = vadd.f32 %v566, 1.0
  %v609 = vadd.f32 %v568, 1.0
  %v610 = vadd.f32 %v570, 1.0
  %v611 = vadd.f32 %v572, 1.0
  %v612 = vadd.f32 %v574, 1.0
  %v613 = vadd.f32 %v576, 1.0
  %v614 = vadd.f32 %v578, 1.0
  %v615 = vadd.f32 %v580, 1.0
  %v616 = vadd.f32 %v582, 1.0
  %v617 = vadd.f32 %v584, 1.0
  %v618 = vadd.f32 %v586, 1.0
  %v619 = vrcp.pop %v587
  %v620 = vmul.f32 %v587, %v619
  %v621 = vsub.f32 1.0, %v620
  %v622 = vmul.f32 %v619, %v621
  %v623 = vadd.f32 %v619, %v622
  %vm624 = vweird.f32 %v587
  %vm625 = vweird.f32 %v619
  %vm626 = vmor %vm624, %vm625
  %v627 = vsel %vm626, %v619, %v623
  %v628 = vand.u32 2147483647, %v587
  %vm629 = vcmp.eq.f32.partialorder %v628, 8.507059e+37
  %v630 = vand.u32 %v587, 2147483648
  %v631 = vor.u32 1.1754944e-38, %v630
  %v632 = vsel %vm629, %v631, %v627
  %v633 = vmul.f32 1.0, %v632
  %v634 = vrcp.pop %v588
  %v635 = vmul.f32 %v588, %v634
  %v636 = vsub.f32 1.0, %v635
  %v637 = vmul.f32 %v634, %v636
  %v638 = vadd.f32 %v634, %v637
  %vm639 = vweird.f32 %v588
  %vm640 = vweird.f32 %v634
  %vm641 = vmor %vm639, %vm640
  %v642 = vsel %vm641, %v634, %v638
  %v643 = vand.u32 2147483647, %v588
  %vm644 = vcmp.eq.f32.partialorder %v643, 8.507059e+37
  %v645 = vand.u32 %v588, 2147483648
  %v646 = vor.u32 1.1754944e-38, %v645
  %v647 = vsel %vm644, %v646, %v642
  %v648 = vmul.f32 1.0, %v647
  %v649 = vrcp.pop %v589
  %v650 = vmul.f32 %v589, %v649
  %v651 = vsub.f32 1.0, %v650
  %v652 = vmul.f32 %v649, %v651
  %v653 = vadd.f32 %v649, %v652
  %vm654 = vweird.f32 %v589
  %vm655 = vweird.f32 %v649
  %vm656 = vmor %vm654, %vm655
  %v657 = vsel %vm656, %v649, %v653
  %v658 = vand.u32 2147483647, %v589
  %vm659 = vcmp.eq.f32.partialorder %v658, 8.507059e+37
  %v660 = vand.u32 %v589, 2147483648
  %v661 = vor.u32 1.1754944e-38, %v660
  %v662 = vsel %vm659, %v661, %v657
  %v663 = vmul.f32 1.0, %v662
  %v664 = vrcp.pop %v590
  %v665 = vmul.f32 %v590, %v664
  %v666 = vsub.f32 1.0, %v665
  %v667 = vmul.f32 %v664, %v666
  %v668 = vadd.f32 %v664, %v667
  %vm669 = vweird.f32 %v590
  %vm670 = vweird.f32 %v664
  %vm671 = vmor %vm669, %vm670
  %v672 = vsel %vm671, %v664, %v668
  %v673 = vand.u32 2147483647, %v590
  %vm674 = vcmp.eq.f32.partialorder %v673, 8.507059e+37
  %v675 = vand.u32 %v590, 2147483648
  %v676 = vor.u32 1.1754944e-38, %v675
  %v677 = vsel %vm674, %v676, %v672
  %v678 = vmul.f32 1.0, %v677
  %v679 = vrcp.pop %v591
  %v680 = vmul.f32 %v591, %v679
  %v681 = vsub.f32 1.0, %v680
  %v682 = vmul.f32 %v679, %v681
  %v683 = vadd.f32 %v679, %v682
  %vm684 = vweird.f32 %v591
  %vm685 = vweird.f32 %v679
  %vm686 = vmor %vm684, %vm685
  %v687 = vsel %vm686, %v679, %v683
  %v688 = vand.u32 2147483647, %v591
  %vm689 = vcmp.eq.f32.partialorder %v688, 8.507059e+37
  %v690 = vand.u32 %v591, 2147483648
  %v691 = vor.u32 1.1754944e-38, %v690
  %v692 = vsel %vm689, %v691, %v687
  %v693 = vmul.f32 1.0, %v692
  %v694 = vrcp.pop %v592
  %v695 = vmul.f32 %v592, %v694
  %v696 = vsub.f32 1.0, %v695
  %v697 = vmul.f32 %v694, %v696
  %v698 = vadd.f32 %v694, %v697
  %vm699 = vweird.f32 %v592
  %vm700 = vweird.f32 %v694
  %vm701 = vmor %vm699, %vm700
  %v702 = vsel %vm701, %v694, %v698
  %v703 = vand.u32 2147483647, %v592
  %vm704 = vcmp.eq.f32.partialorder %v703, 8.507059e+37
  %v705 = vand.u32 %v592, 2147483648
  %v706 = vor.u32 1.1754944e-38, %v705
  %v707 = vsel %vm704, %v706, %v702
  %v708 = vmul.f32 1.0, %v707
  %v709 = vrcp.pop %v593
  %v710 = vmul.f32 %v593, %v709
  %v711 = vsub.f32 1.0, %v710
  %v712 = vmul.f32 %v709, %v711
  %v713 = vadd.f32 %v709, %v712
  %vm714 = vweird.f32 %v593
  %vm715 = vweird.f32 %v709
  %vm716 = vmor %vm714, %vm715
  %v717 = vsel %vm716, %v709, %v713
  %v718 = vand.u32 2147483647, %v593
  %vm719 = vcmp.eq.f32.partialorder %v718, 8.507059e+37
  %v720 = vand.u32 %v593, 2147483648
  %v721 = vor.u32 1.1754944e-38, %v720
  %v722 = vsel %vm719, %v721, %v717
  %v723 = vmul.f32 1.0, %v722
  %v724 = vrcp.pop %v594
  %v725 = vmul.f32 %v594, %v724
  %v726 = vsub.f32 1.0, %v725
  %v727 = vmul.f32 %v724, %v726
  %v728 = vadd.f32 %v724, %v727
  %vm729 = vweird.f32 %v594
  %vm730 = vweird.f32 %v724
  %vm731 = vmor %vm729, %vm730
  %v732 = vsel %vm731, %v724, %v728
  %v733 = vand.u32 2147483647, %v594
  %vm734 = vcmp.eq.f32.partialorder %v733, 8.507059e+37
  %v735 = vand.u32 %v594, 2147483648
  %v736 = vor.u32 1.1754944e-38, %v735
  %v737 = vsel %vm734, %v736, %v732
  %v738 = vmul.f32 1.0, %v737
  %v739 = vrcp.pop %v595
  %v740 = vmul.f32 %v595, %v739
  %v741 = vsub.f32 1.0, %v740
  %v742 = vmul.f32 %v739, %v741
  %v743 = vadd.f32 %v739, %v742
  %vm744 = vweird.f32 %v595
  %vm745 = vweird.f32 %v739
  %vm746 = vmor %vm744, %vm745
  %v747 = vsel %vm746, %v739, %v743
  %v748 = vand.u32 2147483647, %v595
  %vm749 = vcmp.eq.f32.partialorder %v748, 8.507059e+37
  %v750 = vand.u32 %v595, 2147483648
  %v751 = vor.u32 1.1754944e-38, %v750
  %v752 = vsel %vm749, %v751, %v747
  %v753 = vmul.f32 1.0, %v752
  %v754 = vrcp.pop %v596
  %v755 = vmul.f32 %v596, %v754
  %v756 = vsub.f32 1.0, %v755
  %v757 = vmul.f32 %v754, %v756
  %v758 = vadd.f32 %v754, %v757
  %vm759 = vweird.f32 %v596
  %vm760 = vweird.f32 %v754
  %vm761 = vmor %vm759, %vm760
  %v762 = vsel %vm761, %v754, %v758
  %v763 = vand.u32 2147483647, %v596
  %vm764 = vcmp.eq.f32.partialorder %v763, 8.507059e+37
  %v765 = vand.u32 %v596, 2147483648
  %v766 = vor.u32 1.1754944e-38, %v765
  %v767 = vsel %vm764, %v766, %v762
  %v768 = vmul.f32 1.0, %v767
  %v769 = vrcp.pop %v597
  %v770 = vmul.f32 %v597, %v769
  %v771 = vsub.f32 1.0, %v770
  %v772 = vmul.f32 %v769, %v771
  %v773 = vadd.f32 %v769, %v772
  %vm774 = vweird.f32 %v597
  %vm775 = vweird.f32 %v769
  %vm776 = vmor %vm774, %vm775
  %v777 = vsel %vm776, %v769, %v773
  %v778 = vand.u32 2147483647, %v597
  %vm779 = vcmp.eq.f32.partialorder %v778, 8.507059e+37
  %v780 = vand.u32 %v597, 2147483648
  %v781 = vor.u32 1.1754944e-38, %v780
  %v782 = vsel %vm779, %v781, %v777
  %v783 = vmul.f32 1.0, %v782
  %v784 = vrcp.pop %v598
  %v785 = vmul.f32 %v598, %v784
  %v786 = vsub.f32 1.0, %v785
  %v787 = vmul.f32 %v784, %v786
  %v788 = vadd.f32 %v784, %v787
  %vm789 = vweird.f32 %v598
  %vm790 = vweird.f32 %v784
  %vm791 = vmor %vm789, %vm790
  %v792 = vsel %vm791, %v784, %v788
  %v793 = vand.u32 2147483647, %v598
  %vm794 = vcmp.eq.f32.partialorder %v793, 8.507059e+37
  %v795 = vand.u32 %v598, 2147483648
  %v796 = vor.u32 1.1754944e-38, %v795
  %v797 = vsel %vm794, %v796, %v792
  %v798 = vmul.f32 1.0, %v797
  %v799 = vrcp.pop %v599
  %v800 = vmul.f32 %v599, %v799
  %v801 = vsub.f32 1.0, %v800
  %v802 = vmul.f32 %v799, %v801
  %v803 = vadd.f32 %v799, %v802
  %vm804 = vweird.f32 %v599
  %vm805 = vweird.f32 %v799
  %vm806 = vmor %vm804, %vm805
  %v807 = vsel %vm806, %v799, %v803
  %v808 = vand.u32 2147483647, %v599
  %vm809 = vcmp.eq.f32.partialorder %v808, 8.507059e+37
  %v810 = vand.u32 %v599, 2147483648
  %v811 = vor.u32 1.1754944e-38, %v810
  %v812 = vsel %vm809, %v811, %v807
  %v813 = vmul.f32 1.0, %v812
  %v814 = vrcp.pop %v600
  %v815 = vmul.f32 %v600, %v814
  %v816 = vsub.f32 1.0, %v815
  %v817 = vmul.f32 %v814, %v816
  %v818 = vadd.f32 %v814, %v817
  %vm819 = vweird.f32 %v600
  %vm820 = vweird.f32 %v814
  %vm821 = vmor %vm819, %vm820
  %v822 = vsel %vm821, %v814, %v818
  %v823 = vand.u32 2147483647, %v600
  %vm824 = vcmp.eq.f32.partialorder %v823, 8.507059e+37
  %v825 = vand.u32 %v600, 2147483648
  %v826 = vor.u32 1.1754944e-38, %v825
  %v827 = vsel %vm824, %v826, %v822
  %v828 = vmul.f32 1.0, %v827
  %v829 = vrcp.pop %v601
  %v830 = vmul.f32 %v601, %v829
  %v831 = vsub.f32 1.0, %v830
  %v832 = vmul.f32 %v829, %v831
  %v833 = vadd.f32 %v829, %v832
  %vm834 = vweird.f32 %v601
  %vm835 = vweird.f32 %v829
  %vm836 = vmor %vm834, %vm835
  %v837 = vsel %vm836, %v829, %v833
  %v838 = vand.u32 2147483647, %v601
  %vm839 = vcmp.eq.f32.partialorder %v838, 8.507059e+37
  %v840 = vand.u32 %v601, 2147483648
  %v841 = vor.u32 1.1754944e-38, %v840
  %v842 = vsel %vm839, %v841, %v837
  %v843 = vmul.f32 1.0, %v842
  %v844 = vrcp.pop %v602
  %v845 = vmul.f32 %v602, %v844
  %v846 = vsub.f32 1.0, %v845
  %v847 = vmul.f32 %v844, %v846
  %v848 = vadd.f32 %v844, %v847
  %vm849 = vweird.f32 %v602
  %vm850 = vweird.f32 %v844
  %vm851 = vmor %vm849, %vm850
  %v852 = vsel %vm851, %v844, %v848
  %v853 = vand.u32 2147483647, %v602
  %vm854 = vcmp.eq.f32.partialorder %v853, 8.507059e+37
  %v855 = vand.u32 %v602, 2147483648
  %v856 = vor.u32 1.1754944e-38, %v855
  %v857 = vsel %vm854, %v856, %v852
  %v858 = vmul.f32 1.0, %v857
  %v859 = vrcp.pop %v603
  %v860 = vmul.f32 %v603, %v859
  %v861 = vsub.f32 1.0, %v860
  %v862 = vmul.f32 %v859, %v861
  %v863 = vadd.f32 %v859, %v862
  %vm864 = vweird.f32 %v603
  %vm865 = vweird.f32 %v859
  %vm866 = vmor %vm864, %vm865
  %v867 = vsel %vm866, %v859, %v863
  %v868 = vand.u32 2147483647, %v603
  %vm869 = vcmp.eq.f32.partialorder %v868, 8.507059e+37
  %v870 = vand.u32 %v603, 2147483648
  %v871 = vor.u32 1.1754944e-38, %v870
  %v872 = vsel %vm869, %v871, %v867
  %v873 = vmul.f32 1.0, %v872
  %v874 = vrcp.pop %v604
  %v875 = vmul.f32 %v604, %v874
  %v876 = vsub.f32 1.0, %v875
  %v877 = vmul.f32 %v874, %v876
  %v878 = vadd.f32 %v874, %v877
  %vm879 = vweird.f32 %v604
  %vm880 = vweird.f32 %v874
  %vm881 = vmor %vm879, %vm880
  %v882 = vsel %vm881, %v874, %v878
  %v883 = vand.u32 2147483647, %v604
  %vm884 = vcmp.eq.f32.partialorder %v883, 8.507059e+37
  %v885 = vand.u32 %v604, 2147483648
  %v886 = vor.u32 1.1754944e-38, %v885
  %v887 = vsel %vm884, %v886, %v882
  %v888 = vmul.f32 1.0, %v887
  %v889 = vrcp.pop %v605
  %v890 = vmul.f32 %v605, %v889
  %v891 = vsub.f32 1.0, %v890
  %v892 = vmul.f32 %v889, %v891
  %v893 = vadd.f32 %v889, %v892
  %vm894 = vweird.f32 %v605
  %vm895 = vweird.f32 %v889
  %vm896 = vmor %vm894, %vm895
  %v897 = vsel %vm896, %v889, %v893
  %v898 = vand.u32 2147483647, %v605
  %vm899 = vcmp.eq.f32.partialorder %v898, 8.507059e+37
  %v900 = vand.u32 %v605, 2147483648
  %v901 = vor.u32 1.1754944e-38, %v900
  %v902 = vsel %vm899, %v901, %v897
  %v903 = vmul.f32 1.0, %v902
  %v904 = vrcp.pop %v606
  %v905 = vmul.f32 %v606, %v904
  %v906 = vsub.f32 1.0, %v905
  %v907 = vmul.f32 %v904, %v906
  %v908 = vadd.f32 %v904, %v907
  %vm909 = vweird.f32 %v606
  %vm910 = vweird.f32 %v904
  %vm911 = vmor %vm909, %vm910
  %v912 = vsel %vm911, %v904, %v908
  %v913 = vand.u32 2147483647, %v606
  %vm914 = vcmp.eq.f32.partialorder %v913, 8.507059e+37
  %v915 = vand.u32 %v606, 2147483648
  %v916 = vor.u32 1.1754944e-38, %v915
  %v917 = vsel %vm914, %v916, %v912
  %v918 = vmul.f32 1.0, %v917
  %v919 = vrcp.pop %v607
  %v920 = vmul.f32 %v607, %v919
  %v921 = vsub.f32 1.0, %v920
  %v922 = vmul.f32 %v919, %v921
  %v923 = vadd.f32 %v919, %v922
  %vm924 = vweird.f32 %v607
  %vm925 = vweird.f32 %v919
  %vm926 = vmor %vm924, %vm925
  %v927 = vsel %vm926, %v919, %v923
  %v928 = vand.u32 2147483647, %v607
  %vm929 = vcmp.eq.f32.partialorder %v928, 8.507059e+37
  %v930 = vand.u32 %v607, 2147483648
  %v931 = vor.u32 1.1754944e-38, %v930
  %v932 = vsel %vm929, %v931, %v927
  %v933 = vmul.f32 1.0, %v932
  %v934 = vrcp.pop %v608
  %v935 = vmul.f32 %v608, %v934
  %v936 = vsub.f32 1.0, %v935
  %v937 = vmul.f32 %v934, %v936
  %v938 = vadd.f32 %v934, %v937
  %vm939 = vweird.f32 %v608
  %vm940 = vweird.f32 %v934
  %vm941 = vmor %vm939, %vm940
  %v942 = vsel %vm941, %v934, %v938
  %v943 = vand.u32 2147483647, %v608
  %vm944 = vcmp.eq.f32.partialorder %v943, 8.507059e+37
  %v945 = vand.u32 %v608, 2147483648
  %v946 = vor.u32 1.1754944e-38, %v945
  %v947 = vsel %vm944, %v946, %v942
  %v948 = vmul.f32 1.0, %v947
  %v949 = vrcp.pop %v609
  %v950 = vmul.f32 %v609, %v949
  %v951 = vsub.f32 1.0, %v950
  %v952 = vmul.f32 %v949, %v951
  %v953 = vadd.f32 %v949, %v952
  %vm954 = vweird.f32 %v609
  %vm955 = vweird.f32 %v949
  %vm956 = vmor %vm954, %vm955
  %v957 = vsel %vm956, %v949, %v953
  %v958 = vand.u32 2147483647, %v609
  %vm959 = vcmp.eq.f32.partialorder %v958, 8.507059e+37
  %v960 = vand.u32 %v609, 2147483648
  %v961 = vor.u32 1.1754944e-38, %v960
  %v962 = vsel %vm959, %v961, %v957
  %v963 = vmul.f32 1.0, %v962
  %v964 = vrcp.pop %v610
  %v965 = vmul.f32 %v610, %v964
  %v966 = vsub.f32 1.0, %v965
  %v967 = vmul.f32 %v964, %v966
  %v968 = vadd.f32 %v964, %v967
  %vm969 = vweird.f32 %v610
  %vm970 = vweird.f32 %v964
  %vm971 = vmor %vm969, %vm970
  %v972 = vsel %vm971, %v964, %v968
  %v973 = vand.u32 2147483647, %v610
  %vm974 = vcmp.eq.f32.partialorder %v973, 8.507059e+37
  %v975 = vand.u32 %v610, 2147483648
  %v976 = vor.u32 1.1754944e-38, %v975
  %v977 = vsel %vm974, %v976, %v972
  %v978 = vmul.f32 1.0, %v977
  %v979 = vrcp.pop %v611
  %v980 = vmul.f32 %v611, %v979
  %v981 = vsub.f32 1.0, %v980
  %v982 = vmul.f32 %v979, %v981
  %v983 = vadd.f32 %v979, %v982
  %vm984 = vweird.f32 %v611
  %vm985 = vweird.f32 %v979
  %vm986 = vmor %vm984, %vm985
  %v987 = vsel %vm986, %v979, %v983
  %v988 = vand.u32 2147483647, %v611
  %vm989 = vcmp.eq.f32.partialorder %v988, 8.507059e+37
  %v990 = vand.u32 %v611, 2147483648
  %v991 = vor.u32 1.1754944e-38, %v990
  %v992 = vsel %vm989, %v991, %v987
  %v993 = vmul.f32 1.0, %v992
  %v994 = vrcp.pop %v612
  %v995 = vmul.f32 %v612, %v994
  %v996 = vsub.f32 1.0, %v995
  %v997 = vmul.f32 %v994, %v996
  %v998 = vadd.f32 %v994, %v997
  %vm999 = vweird.f32 %v612
  %vm1000 = vweird.f32 %v994
  %vm1001 = vmor %vm999, %vm1000
  %v1002 = vsel %vm1001, %v994, %v998
  %v1003 = vand.u32 2147483647, %v612
  %vm1004 = vcmp.eq.f32.partialorder %v1003, 8.507059e+37
  %v1005 = vand.u32 %v612, 2147483648
  %v1006 = vor.u32 1.1754944e-38, %v1005
  %v1007 = vsel %vm1004, %v1006, %v1002
  %v1008 = vmul.f32 1.0, %v1007
  %v1009 = vrcp.pop %v613
  %v1010 = vmul.f32 %v613, %v1009
  %v1011 = vsub.f32 1.0, %v1010
  %v1012 = vmul.f32 %v1009, %v1011
  %v1013 = vadd.f32 %v1009, %v1012
  %vm1014 = vweird.f32 %v613
  %vm1015 = vweird.f32 %v1009
  %vm1016 = vmor %vm1014, %vm1015
  %v1017 = vsel %vm1016, %v1009, %v1013
  %v1018 = vand.u32 2147483647, %v613
  %vm1019 = vcmp.eq.f32.partialorder %v1018, 8.507059e+37
  %v1020 = vand.u32 %v613, 2147483648
  %v1021 = vor.u32 1.1754944e-38, %v1020
  %v1022 = vsel %vm1019, %v1021, %v1017
  %v1023 = vmul.f32 1.0, %v1022
  %v1024 = vrcp.pop %v614
  %v1025 = vmul.f32 %v614, %v1024
  %v1026 = vsub.f32 1.0, %v1025
  %v1027 = vmul.f32 %v1024, %v1026
  %v1028 = vadd.f32 %v1024, %v1027
  %vm1029 = vweird.f32 %v614
  %vm1030 = vweird.f32 %v1024
  %vm1031 = vmor %vm1029, %vm1030
  %v1032 = vsel %vm1031, %v1024, %v1028
  %v1033 = vand.u32 2147483647, %v614
  %vm1034 = vcmp.eq.f32.partialorder %v1033, 8.507059e+37
  %v1035 = vand.u32 %v614, 2147483648
  %v1036 = vor.u32 1.1754944e-38, %v1035
  %v1037 = vsel %vm1034, %v1036, %v1032
  %v1038 = vmul.f32 1.0, %v1037
  %v1039 = vrcp.pop %v615
  %v1040 = vmul.f32 %v615, %v1039
  %v1041 = vsub.f32 1.0, %v1040
  %v1042 = vmul.f32 %v1039, %v1041
  %v1043 = vadd.f32 %v1039, %v1042
  %vm1044 = vweird.f32 %v615
  %vm1045 = vweird.f32 %v1039
  %vm1046 = vmor %vm1044, %vm1045
  %v1047 = vsel %vm1046, %v1039, %v1043
  %v1048 = vand.u32 2147483647, %v615
  %vm1049 = vcmp.eq.f32.partialorder %v1048, 8.507059e+37
  %v1050 = vand.u32 %v615, 2147483648
  %v1051 = vor.u32 1.1754944e-38, %v1050
  %v1052 = vsel %vm1049, %v1051, %v1047
  %v1053 = vmul.f32 1.0, %v1052
  %v1054 = vrcp.pop %v616
  %v1055 = vmul.f32 %v616, %v1054
  %v1056 = vsub.f32 1.0, %v1055
  %v1057 = vmul.f32 %v1054, %v1056
  %v1058 = vadd.f32 %v1054, %v1057
  %vm1059 = vweird.f32 %v616
  %vm1060 = vweird.f32 %v1054
  %vm1061 = vmor %vm1059, %vm1060
  %v1062 = vsel %vm1061, %v1054, %v1058
  %v1063 = vand.u32 2147483647, %v616
  %vm1064 = vcmp.eq.f32.partialorder %v1063, 8.507059e+37
  %v1065 = vand.u32 %v616, 2147483648
  %v1066 = vor.u32 1.1754944e-38, %v1065
  %v1067 = vsel %vm1064, %v1066, %v1062
  %v1068 = vmul.f32 1.0, %v1067
  %v1069 = vrcp.pop %v617
  %v1070 = vmul.f32 %v617, %v1069
  %v1071 = vsub.f32 1.0, %v1070
  %v1072 = vmul.f32 %v1069, %v1071
  %v1073 = vadd.f32 %v1069, %v1072
  %vm1074 = vweird.f32 %v617
  %vm1075 = vweird.f32 %v1069
  %vm1076 = vmor %vm1074, %vm1075
  %v1077 = vsel %vm1076, %v1069, %v1073
  %v1078 = vand.u32 2147483647, %v617
  %vm1079 = vcmp.eq.f32.partialorder %v1078, 8.507059e+37
  %v1080 = vand.u32 %v617, 2147483648
  %v1081 = vor.u32 1.1754944e-38, %v1080
  %v1082 = vsel %vm1079, %v1081, %v1077
  %v1083 = vmul.f32 1.0, %v1082
  %v1084 = vrcp.pop %v618
  %v1085 = vmul.f32 %v618, %v1084
  %v1086 = vsub.f32 1.0, %v1085
  %v1087 = vmul.f32 %v1084, %v1086
  %v1088 = vadd.f32 %v1084, %v1087
  %vm1089 = vweird.f32 %v618
  %vm1090 = vweird.f32 %v1084
  %vm1091 = vmor %vm1089, %vm1090
  %v1092 = vsel %vm1091, %v1084, %v1088
  %v1093 = vand.u32 2147483647, %v618
  %vm1094 = vcmp.eq.f32.partialorder %v1093, 8.507059e+37
  %v1095 = vand.u32 %v618, 2147483648
  %v1096 = vor.u32 1.1754944e-38, %v1095
  %v1097 = vsel %vm1094, %v1096, %v1092
  %v1098 = vmul.f32 1.0, %v1097
  %v1099 = vmul.f32 %v349, %v633
  %v1100 = vmul.f32 %v368, %v648
  %v1101 = vmul.f32 %v387, %v663
  %v1102 = vmul.f32 %v406, %v678
  %v1103 = vmul.f32 %v425, %v693
  %v1104 = vmul.f32 %v444, %v708
  %v1105 = vmul.f32 %v463, %v723
  %v1106 = vmul.f32 %v482, %v738
  %v1107 = vmul.f32 %v351, %v753
  %v1108 = vmul.f32 %v370, %v768
  %v1109 = vmul.f32 %v389, %v783
  %v1110 = vmul.f32 %v408, %v798
  %v1111 = vmul.f32 %v427, %v813
  %v1112 = vmul.f32 %v446, %v828
  %v1113 = vmul.f32 %v465, %v843
  %v1114 = vmul.f32 %v484, %v858
  %v1115 = vmul.f32 %v354, %v873
  %v1116 = vmul.f32 %v373, %v888
  %v1117 = vmul.f32 %v392, %v903
  %v1118 = vmul.f32 %v411, %v918
  %v1119 = vmul.f32 %v430, %v933
  %v1120 = vmul.f32 %v449, %v948
  %v1121 = vmul.f32 %v468, %v963
  %v1122 = vmul.f32 %v487, %v978
  %v1123 = vmul.f32 %v356, %v993
  %v1124 = vmul.f32 %v375, %v1008
  %v1125 = vmul.f32 %v394, %v1023
  %v1126 = vmul.f32 %v413, %v1038
  %v1127 = vmul.f32 %v432, %v1053
  %v1128 = vmul.f32 %v451, %v1068
  %v1129 = vmul.f32 %v470, %v1083
  %v1130 = vmul.f32 %v489, %v1098
  %s1131 = scalar_lea.vmem %s3, 16
  %v1132 = vld [vmem:[%s1131] sm:$0xf]
  %v1133 = vld [vmem:[%s1131 + $0x4] sm:$0xf]
  %v1134 = vld [vmem:[%s1131 + $0x8] sm:$0xf]
  %v1135 = vld [vmem:[%s1131 + $0xc] sm:$0xf]
  %s1136 = scalar_lea.vmem %s4, 32
  %v1137 = vld [vmem:[%s1136] sm:$0xff]
  %v1138 = vld [vmem:[%s1136 + $0x8] sm:$0xff]
  %v1139 = vld [vmem:[%s1136 + $0x10] sm:$0xff]
  %v1140 = vld [vmem:[%s1136 + $0x18] sm:$0xff]
  %v1141 = vpack.c.bf16 %v1107, %v1099
  %v1142 = vpack.c.bf16 %v1108, %v1100
  %v1143 = vpack.c.bf16 %v1109, %v1101
  %v1144 = vpack.c.bf16 %v1110, %v1102
  %v1145 = vpack.c.bf16 %v1111, %v1103
  %v1146 = vpack.c.bf16 %v1112, %v1104
  %v1147 = vpack.c.bf16 %v1113, %v1105
  %v1148 = vpack.c.bf16 %v1114, %v1106
  %v1149 = vpack.c.bf16 %v1123, %v1115
  %v1150 = vpack.c.bf16 %v1124, %v1116
  %v1151 = vpack.c.bf16 %v1125, %v1117
  %v1152 = vpack.c.bf16 %v1126, %v1118
  %v1153 = vpack.c.bf16 %v1127, %v1119
  %v1154 = vpack.c.bf16 %v1128, %v1120
  %v1155 = vpack.c.bf16 %v1129, %v1121
  %v1156 = vpack.c.bf16 %v1130, %v1122
  %1158 = vset.pattern.permute.xlu0 0
  %1159 = vperm.xlu0 %1158, %v1137
  %v1160 = vpop.permute.xlu0 %1159
  %1163 = vset.pattern.permute.xlu0 0
  %1164 = vperm.xlu0 %1163, %v1138
  %v1165 = vpop.permute.xlu0 %1164
  %1168 = vset.pattern.permute.xlu0 0
  %1169 = vperm.xlu0 %1168, %v1139
  %v1170 = vpop.permute.xlu0 %1169
  %1173 = vset.pattern.permute.xlu0 0
  %1174 = vperm.xlu0 %1173, %v1140
  %v1175 = vpop.permute.xlu0 %1174
  %v1181 = vunpack.c.l.b16 %v1132
  %v1182 = vunpack.c.l.b16 %v1133
  %v1183 = vunpack.c.l.b16 %v1134
  %v1184 = vunpack.c.l.b16 %v1135
  %v1185 = vpack.c.b16 %v1182, %v1181
  %v1186 = vpack.c.b16 %v1184, %v1183
  %v1188 = vsel %vm332, %v1185, 0
  %v1191 = vsel %vm332, %v1186, 0
  %1193 = vmatpush.bf16.msra.mxu0 0
  %1194 = vmatpush.bf16.msra.mxu0 0
  %1195 = vmatpush.bf16.msra.mxu0 0
  %1196 = vmatpush.bf16.msra.mxu0 0
  %1197 = vmatpush.bf16.msra.mxu0 0
  %1198 = vmatpush.bf16.msra.mxu0 0
  %1199 = vmatpush.bf16.msra.mxu0 %v1149
  %1200 = vmatpush.bf16.msra.mxu0 %v1141
  %1201 = vmatmul.bf16.gmra.mxu0 %v1188
  %v1202 = vpop.f32.mrf.mxu0
  %v1203 = vadd.f32 %v1160, %v1202
  %v1204 = vpop.f32.mrf.mxu0
  %v1205 = vadd.f32 %v1165, %v1204
  %1206 = vmatmul.bf16.gmra.mxu0 %v1191
  %v1207 = vpop.f32.mrf.mxu0
  %v1208 = vadd.f32 %v1170, %v1207
  %v1209 = vpop.f32.mrf.mxu0
  %v1210 = vadd.f32 %v1175, %v1209
  %1211 = vdwg.mxu0
  %1212 = vmatpush.bf16.msra.mxu0 0
  %1213 = vmatpush.bf16.msra.mxu0 0
  %1214 = vmatpush.bf16.msra.mxu0 0
  %1215 = vmatpush.bf16.msra.mxu0 0
  %1216 = vmatpush.bf16.msra.mxu0 0
  %1217 = vmatpush.bf16.msra.mxu0 0
  %1218 = vmatpush.bf16.msra.mxu0 %v1150
  %1219 = vmatpush.bf16.msra.mxu0 %v1142
  %1220 = vmatmul.bf16.gmra.mxu0 %v1188
  %v1221 = vpop.f32.mrf.mxu0
  %v1222 = vadd.f32 %v1160, %v1221
  %v1223 = vpop.f32.mrf.mxu0
  %v1224 = vadd.f32 %v1165, %v1223
  %1225 = vmatmul.bf16.gmra.mxu0 %v1191
  %v1226 = vpop.f32.mrf.mxu0
  %v1227 = vadd.f32 %v1170, %v1226
  %v1228 = vpop.f32.mrf.mxu0
  %v1229 = vadd.f32 %v1175, %v1228
  %1230 = vdwg.mxu0
  %1231 = vmatpush.bf16.msra.mxu0 0
  %1232 = vmatpush.bf16.msra.mxu0 0
  %1233 = vmatpush.bf16.msra.mxu0 0
  %1234 = vmatpush.bf16.msra.mxu0 0
  %1235 = vmatpush.bf16.msra.mxu0 0
  %1236 = vmatpush.bf16.msra.mxu0 0
  %1237 = vmatpush.bf16.msra.mxu0 %v1151
  %1238 = vmatpush.bf16.msra.mxu0 %v1143
  %1239 = vmatmul.bf16.gmra.mxu0 %v1188
  %v1240 = vpop.f32.mrf.mxu0
  %v1241 = vadd.f32 %v1160, %v1240
  %v1242 = vpop.f32.mrf.mxu0
  %v1243 = vadd.f32 %v1165, %v1242
  %1244 = vmatmul.bf16.gmra.mxu0 %v1191
  %v1245 = vpop.f32.mrf.mxu0
  %v1246 = vadd.f32 %v1170, %v1245
  %v1247 = vpop.f32.mrf.mxu0
  %v1248 = vadd.f32 %v1175, %v1247
  %1249 = vdwg.mxu0
  %1250 = vmatpush.bf16.msra.mxu0 0
  %1251 = vmatpush.bf16.msra.mxu0 0
  %1252 = vmatpush.bf16.msra.mxu0 0
  %1253 = vmatpush.bf16.msra.mxu0 0
  %1254 = vmatpush.bf16.msra.mxu0 0
  %1255 = vmatpush.bf16.msra.mxu0 0
  %1256 = vmatpush.bf16.msra.mxu0 %v1152
  %1257 = vmatpush.bf16.msra.mxu0 %v1144
  %1258 = vmatmul.bf16.gmra.mxu0 %v1188
  %v1259 = vpop.f32.mrf.mxu0
  %v1260 = vadd.f32 %v1160, %v1259
  %v1261 = vpop.f32.mrf.mxu0
  %v1262 = vadd.f32 %v1165, %v1261
  %1263 = vmatmul.bf16.gmra.mxu0 %v1191
  %v1264 = vpop.f32.mrf.mxu0
  %v1265 = vadd.f32 %v1170, %v1264
  %v1266 = vpop.f32.mrf.mxu0
  %v1267 = vadd.f32 %v1175, %v1266
  %1268 = vdwg.mxu0
  %1269 = vmatpush.bf16.msra.mxu0 0
  %1270 = vmatpush.bf16.msra.mxu0 0
  %1271 = vmatpush.bf16.msra.mxu0 0
  %1272 = vmatpush.bf16.msra.mxu0 0
  %1273 = vmatpush.bf16.msra.mxu0 0
  %1274 = vmatpush.bf16.msra.mxu0 0
  %1275 = vmatpush.bf16.msra.mxu0 %v1153
  %1276 = vmatpush.bf16.msra.mxu0 %v1145
  %1277 = vmatmul.bf16.gmra.mxu0 %v1188
  %v1278 = vpop.f32.mrf.mxu0
  %v1279 = vadd.f32 %v1160, %v1278
  %v1280 = vpop.f32.mrf.mxu0
  %v1281 = vadd.f32 %v1165, %v1280
  %1282 = vmatmul.bf16.gmra.mxu0 %v1191
  %v1283 = vpop.f32.mrf.mxu0
  %v1284 = vadd.f32 %v1170, %v1283
  %v1285 = vpop.f32.mrf.mxu0
  %v1286 = vadd.f32 %v1175, %v1285
  %1287 = vdwg.mxu0
  %1288 = vmatpush.bf16.msra.mxu0 0
  %1289 = vmatpush.bf16.msra.mxu0 0
  %1290 = vmatpush.bf16.msra.mxu0 0
  %1291 = vmatpush.bf16.msra.mxu0 0
  %1292 = vmatpush.bf16.msra.mxu0 0
  %1293 = vmatpush.bf16.msra.mxu0 0
  %1294 = vmatpush.bf16.msra.mxu0 %v1154
  %1295 = vmatpush.bf16.msra.mxu0 %v1146
  %1296 = vmatmul.bf16.gmra.mxu0 %v1188
  %v1297 = vpop.f32.mrf.mxu0
  %v1298 = vadd.f32 %v1160, %v1297
  %v1299 = vpop.f32.mrf.mxu0
  %v1300 = vadd.f32 %v1165, %v1299
  %1301 = vmatmul.bf16.gmra.mxu0 %v1191
  %v1302 = vpop.f32.mrf.mxu0
  %v1303 = vadd.f32 %v1170, %v1302
  %v1304 = vpop.f32.mrf.mxu0
  %v1305 = vadd.f32 %v1175, %v1304
  %1306 = vdwg.mxu0
  %1307 = vmatpush.bf16.msra.mxu0 0
  %1308 = vmatpush.bf16.msra.mxu0 0
  %1309 = vmatpush.bf16.msra.mxu0 0
  %1310 = vmatpush.bf16.msra.mxu0 0
  %1311 = vmatpush.bf16.msra.mxu0 0
  %1312 = vmatpush.bf16.msra.mxu0 0
  %1313 = vmatpush.bf16.msra.mxu0 %v1155
  %1314 = vmatpush.bf16.msra.mxu0 %v1147
  %1315 = vmatmul.bf16.gmra.mxu0 %v1188
  %v1316 = vpop.f32.mrf.mxu0
  %v1317 = vadd.f32 %v1160, %v1316
  %v1318 = vpop.f32.mrf.mxu0
  %v1319 = vadd.f32 %v1165, %v1318
  %1320 = vmatmul.bf16.gmra.mxu0 %v1191
  %v1321 = vpop.f32.mrf.mxu0
  %v1322 = vadd.f32 %v1170, %v1321
  %v1323 = vpop.f32.mrf.mxu0
  %v1324 = vadd.f32 %v1175, %v1323
  %1325 = vdwg.mxu0
  %1326 = vmatpush.bf16.msra.mxu0 0
  %1327 = vmatpush.bf16.msra.mxu0 0
  %1328 = vmatpush.bf16.msra.mxu0 0
  %1329 = vmatpush.bf16.msra.mxu0 0
  %1330 = vmatpush.bf16.msra.mxu0 0
  %1331 = vmatpush.bf16.msra.mxu0 0
  %1332 = vmatpush.bf16.msra.mxu0 %v1156
  %1333 = vmatpush.bf16.msra.mxu0 %v1148
  %1334 = vmatmul.bf16.gmra.mxu0 %v1188
  %v1335 = vpop.f32.mrf.mxu0
  %v1336 = vadd.f32 %v1160, %v1335
  %v1337 = vpop.f32.mrf.mxu0
  %v1338 = vadd.f32 %v1165, %v1337
  %1339 = vmatmul.bf16.gmra.mxu0 %v1191
  %v1340 = vpop.f32.mrf.mxu0
  %v1341 = vadd.f32 %v1170, %v1340
  %v1342 = vpop.f32.mrf.mxu0
  %v1343 = vadd.f32 %v1175, %v1342
  %1344 = vdwg.mxu0
  %v1345 = vxor.u32 %v1203, 2147483648
  %v1346 = vxor.u32 %v1222, 2147483648
  %v1347 = vxor.u32 %v1241, 2147483648
  %v1348 = vxor.u32 %v1260, 2147483648
  %v1349 = vxor.u32 %v1279, 2147483648
  %v1350 = vxor.u32 %v1298, 2147483648
  %v1351 = vxor.u32 %v1317, 2147483648
  %v1352 = vxor.u32 %v1336, 2147483648
  %v1353 = vxor.u32 %v1205, 2147483648
  %v1354 = vxor.u32 %v1224, 2147483648
  %v1355 = vxor.u32 %v1243, 2147483648
  %v1356 = vxor.u32 %v1262, 2147483648
  %v1357 = vxor.u32 %v1281, 2147483648
  %v1358 = vxor.u32 %v1300, 2147483648
  %v1359 = vxor.u32 %v1319, 2147483648
  %v1360 = vxor.u32 %v1338, 2147483648
  %v1361 = vxor.u32 %v1208, 2147483648
  %v1362 = vxor.u32 %v1227, 2147483648
  %v1363 = vxor.u32 %v1246, 2147483648
  %v1364 = vxor.u32 %v1265, 2147483648
  %v1365 = vxor.u32 %v1284, 2147483648
  %v1366 = vxor.u32 %v1303, 2147483648
  %v1367 = vxor.u32 %v1322, 2147483648
  %v1368 = vxor.u32 %v1341, 2147483648
  %v1369 = vxor.u32 %v1210, 2147483648
  %v1370 = vxor.u32 %v1229, 2147483648
  %v1371 = vxor.u32 %v1248, 2147483648
  %v1372 = vxor.u32 %v1267, 2147483648
  %v1373 = vxor.u32 %v1286, 2147483648
  %v1374 = vxor.u32 %v1305, 2147483648
  %v1375 = vxor.u32 %v1324, 2147483648
  %v1376 = vxor.u32 %v1343, 2147483648
  %v1377 = vmul.f32 %v1345, 1.442695
  %v1378 = vpow.pop %v1377
  %v1379 = vmul.f32 %v1346, 1.442695
  %v1380 = vpow.pop %v1379
  %v1381 = vmul.f32 %v1347, 1.442695
  %v1382 = vpow.pop %v1381
  %v1383 = vmul.f32 %v1348, 1.442695
  %v1384 = vpow.pop %v1383
  %v1385 = vmul.f32 %v1349, 1.442695
  %v1386 = vpow.pop %v1385
  %v1387 = vmul.f32 %v1350, 1.442695
  %v1388 = vpow.pop %v1387
  %v1389 = vmul.f32 %v1351, 1.442695
  %v1390 = vpow.pop %v1389
  %v1391 = vmul.f32 %v1352, 1.442695
  %v1392 = vpow.pop %v1391
  %v1393 = vmul.f32 %v1353, 1.442695
  %v1394 = vpow.pop %v1393
  %v1395 = vmul.f32 %v1354, 1.442695
  %v1396 = vpow.pop %v1395
  %v1397 = vmul.f32 %v1355, 1.442695
  %v1398 = vpow.pop %v1397
  %v1399 = vmul.f32 %v1356, 1.442695
  %v1400 = vpow.pop %v1399
  %v1401 = vmul.f32 %v1357, 1.442695
  %v1402 = vpow.pop %v1401
  %v1403 = vmul.f32 %v1358, 1.442695
  %v1404 = vpow.pop %v1403
  %v1405 = vmul.f32 %v1359, 1.442695
  %v1406 = vpow.pop %v1405
  %v1407 = vmul.f32 %v1360, 1.442695
  %v1408 = vpow.pop %v1407
  %v1409 = vmul.f32 %v1361, 1.442695
  %v1410 = vpow.pop %v1409
  %v1411 = vmul.f32 %v1362, 1.442695
  %v1412 = vpow.pop %v1411
  %v1413 = vmul.f32 %v1363, 1.442695
  %v1414 = vpow.pop %v1413
  %v1415 = vmul.f32 %v1364, 1.442695
  %v1416 = vpow.pop %v1415
  %v1417 = vmul.f32 %v1365, 1.442695
  %v1418 = vpow.pop %v1417
  %v1419 = vmul.f32 %v1366, 1.442695
  %v1420 = vpow.pop %v1419
  %v1421 = vmul.f32 %v1367, 1.442695
  %v1422 = vpow.pop %v1421
  %v1423 = vmul.f32 %v1368, 1.442695
  %v1424 = vpow.pop %v1423
  %v1425 = vmul.f32 %v1369, 1.442695
  %v1426 = vpow.pop %v1425
  %v1427 = vmul.f32 %v1370, 1.442695
  %v1428 = vpow.pop %v1427
  %v1429 = vmul.f32 %v1371, 1.442695
  %v1430 = vpow.pop %v1429
  %v1431 = vmul.f32 %v1372, 1.442695
  %v1432 = vpow.pop %v1431
  %v1433 = vmul.f32 %v1373, 1.442695
  %v1434 = vpow.pop %v1433
  %v1435 = vmul.f32 %v1374, 1.442695
  %v1436 = vpow.pop %v1435
  %v1437 = vmul.f32 %v1375, 1.442695
  %v1438 = vpow.pop %v1437
  %v1439 = vmul.f32 %v1376, 1.442695
  %v1440 = vpow.pop %v1439
  %v1441 = vadd.f32 %v1378, 1.0
  %v1442 = vadd.f32 %v1380, 1.0
  %v1443 = vadd.f32 %v1382, 1.0
  %v1444 = vadd.f32 %v1384, 1.0
  %v1445 = vadd.f32 %v1386, 1.0
  %v1446 = vadd.f32 %v1388, 1.0
  %v1447 = vadd.f32 %v1390, 1.0
  %v1448 = vadd.f32 %v1392, 1.0
  %v1449 = vadd.f32 %v1394, 1.0
  %v1450 = vadd.f32 %v1396, 1.0
  %v1451 = vadd.f32 %v1398, 1.0
  %v1452 = vadd.f32 %v1400, 1.0
  %v1453 = vadd.f32 %v1402, 1.0
  %v1454 = vadd.f32 %v1404, 1.0
  %v1455 = vadd.f32 %v1406, 1.0
  %v1456 = vadd.f32 %v1408, 1.0
  %v1457 = vadd.f32 %v1410, 1.0
  %v1458 = vadd.f32 %v1412, 1.0
  %v1459 = vadd.f32 %v1414, 1.0
  %v1460 = vadd.f32 %v1416, 1.0
  %v1461 = vadd.f32 %v1418, 1.0
  %v1462 = vadd.f32 %v1420, 1.0
  %v1463 = vadd.f32 %v1422, 1.0
  %v1464 = vadd.f32 %v1424, 1.0
  %v1465 = vadd.f32 %v1426, 1.0
  %v1466 = vadd.f32 %v1428, 1.0
  %v1467 = vadd.f32 %v1430, 1.0
  %v1468 = vadd.f32 %v1432, 1.0
  %v1469 = vadd.f32 %v1434, 1.0
  %v1470 = vadd.f32 %v1436, 1.0
  %v1471 = vadd.f32 %v1438, 1.0
  %v1472 = vadd.f32 %v1440, 1.0
  %v1473 = vrcp.pop %v1441
  %v1474 = vmul.f32 %v1441, %v1473
  %v1475 = vsub.f32 1.0, %v1474
  %v1476 = vmul.f32 %v1473, %v1475
  %v1477 = vadd.f32 %v1473, %v1476
  %vm1478 = vweird.f32 %v1441
  %vm1479 = vweird.f32 %v1473
  %vm1480 = vmor %vm1478, %vm1479
  %v1481 = vsel %vm1480, %v1473, %v1477
  %v1482 = vand.u32 2147483647, %v1441
  %vm1483 = vcmp.eq.f32.partialorder %v1482, 8.507059e+37
  %v1484 = vand.u32 %v1441, 2147483648
  %v1485 = vor.u32 1.1754944e-38, %v1484
  %v1486 = vsel %vm1483, %v1485, %v1481
  %v1487 = vmul.f32 1.0, %v1486
  %v1488 = vrcp.pop %v1442
  %v1489 = vmul.f32 %v1442, %v1488
  %v1490 = vsub.f32 1.0, %v1489
  %v1491 = vmul.f32 %v1488, %v1490
  %v1492 = vadd.f32 %v1488, %v1491
  %vm1493 = vweird.f32 %v1442
  %vm1494 = vweird.f32 %v1488
  %vm1495 = vmor %vm1493, %vm1494
  %v1496 = vsel %vm1495, %v1488, %v1492
  %v1497 = vand.u32 2147483647, %v1442
  %vm1498 = vcmp.eq.f32.partialorder %v1497, 8.507059e+37
  %v1499 = vand.u32 %v1442, 2147483648
  %v1500 = vor.u32 1.1754944e-38, %v1499
  %v1501 = vsel %vm1498, %v1500, %v1496
  %v1502 = vmul.f32 1.0, %v1501
  %v1503 = vrcp.pop %v1443
  %v1504 = vmul.f32 %v1443, %v1503
  %v1505 = vsub.f32 1.0, %v1504
  %v1506 = vmul.f32 %v1503, %v1505
  %v1507 = vadd.f32 %v1503, %v1506
  %vm1508 = vweird.f32 %v1443
  %vm1509 = vweird.f32 %v1503
  %vm1510 = vmor %vm1508, %vm1509
  %v1511 = vsel %vm1510, %v1503, %v1507
  %v1512 = vand.u32 2147483647, %v1443
  %vm1513 = vcmp.eq.f32.partialorder %v1512, 8.507059e+37
  %v1514 = vand.u32 %v1443, 2147483648
  %v1515 = vor.u32 1.1754944e-38, %v1514
  %v1516 = vsel %vm1513, %v1515, %v1511
  %v1517 = vmul.f32 1.0, %v1516
  %v1518 = vrcp.pop %v1444
  %v1519 = vmul.f32 %v1444, %v1518
  %v1520 = vsub.f32 1.0, %v1519
  %v1521 = vmul.f32 %v1518, %v1520
  %v1522 = vadd.f32 %v1518, %v1521
  %vm1523 = vweird.f32 %v1444
  %vm1524 = vweird.f32 %v1518
  %vm1525 = vmor %vm1523, %vm1524
  %v1526 = vsel %vm1525, %v1518, %v1522
  %v1527 = vand.u32 2147483647, %v1444
  %vm1528 = vcmp.eq.f32.partialorder %v1527, 8.507059e+37
  %v1529 = vand.u32 %v1444, 2147483648
  %v1530 = vor.u32 1.1754944e-38, %v1529
  %v1531 = vsel %vm1528, %v1530, %v1526
  %v1532 = vmul.f32 1.0, %v1531
  %v1533 = vrcp.pop %v1445
  %v1534 = vmul.f32 %v1445, %v1533
  %v1535 = vsub.f32 1.0, %v1534
  %v1536 = vmul.f32 %v1533, %v1535
  %v1537 = vadd.f32 %v1533, %v1536
  %vm1538 = vweird.f32 %v1445
  %vm1539 = vweird.f32 %v1533
  %vm1540 = vmor %vm1538, %vm1539
  %v1541 = vsel %vm1540, %v1533, %v1537
  %v1542 = vand.u32 2147483647, %v1445
  %vm1543 = vcmp.eq.f32.partialorder %v1542, 8.507059e+37
  %v1544 = vand.u32 %v1445, 2147483648
  %v1545 = vor.u32 1.1754944e-38, %v1544
  %v1546 = vsel %vm1543, %v1545, %v1541
  %v1547 = vmul.f32 1.0, %v1546
  %v1548 = vrcp.pop %v1446
  %v1549 = vmul.f32 %v1446, %v1548
  %v1550 = vsub.f32 1.0, %v1549
  %v1551 = vmul.f32 %v1548, %v1550
  %v1552 = vadd.f32 %v1548, %v1551
  %vm1553 = vweird.f32 %v1446
  %vm1554 = vweird.f32 %v1548
  %vm1555 = vmor %vm1553, %vm1554
  %v1556 = vsel %vm1555, %v1548, %v1552
  %v1557 = vand.u32 2147483647, %v1446
  %vm1558 = vcmp.eq.f32.partialorder %v1557, 8.507059e+37
  %v1559 = vand.u32 %v1446, 2147483648
  %v1560 = vor.u32 1.1754944e-38, %v1559
  %v1561 = vsel %vm1558, %v1560, %v1556
  %v1562 = vmul.f32 1.0, %v1561
  %v1563 = vrcp.pop %v1447
  %v1564 = vmul.f32 %v1447, %v1563
  %v1565 = vsub.f32 1.0, %v1564
  %v1566 = vmul.f32 %v1563, %v1565
  %v1567 = vadd.f32 %v1563, %v1566
  %vm1568 = vweird.f32 %v1447
  %vm1569 = vweird.f32 %v1563
  %vm1570 = vmor %vm1568, %vm1569
  %v1571 = vsel %vm1570, %v1563, %v1567
  %v1572 = vand.u32 2147483647, %v1447
  %vm1573 = vcmp.eq.f32.partialorder %v1572, 8.507059e+37
  %v1574 = vand.u32 %v1447, 2147483648
  %v1575 = vor.u32 1.1754944e-38, %v1574
  %v1576 = vsel %vm1573, %v1575, %v1571
  %v1577 = vmul.f32 1.0, %v1576
  %v1578 = vrcp.pop %v1448
  %v1579 = vmul.f32 %v1448, %v1578
  %v1580 = vsub.f32 1.0, %v1579
  %v1581 = vmul.f32 %v1578, %v1580
  %v1582 = vadd.f32 %v1578, %v1581
  %vm1583 = vweird.f32 %v1448
  %vm1584 = vweird.f32 %v1578
  %vm1585 = vmor %vm1583, %vm1584
  %v1586 = vsel %vm1585, %v1578, %v1582
  %v1587 = vand.u32 2147483647, %v1448
  %vm1588 = vcmp.eq.f32.partialorder %v1587, 8.507059e+37
  %v1589 = vand.u32 %v1448, 2147483648
  %v1590 = vor.u32 1.1754944e-38, %v1589
  %v1591 = vsel %vm1588, %v1590, %v1586
  %v1592 = vmul.f32 1.0, %v1591
  %v1593 = vrcp.pop %v1449
  %v1594 = vmul.f32 %v1449, %v1593
  %v1595 = vsub.f32 1.0, %v1594
  %v1596 = vmul.f32 %v1593, %v1595
  %v1597 = vadd.f32 %v1593, %v1596
  %vm1598 = vweird.f32 %v1449
  %vm1599 = vweird.f32 %v1593
  %vm1600 = vmor %vm1598, %vm1599
  %v1601 = vsel %vm1600, %v1593, %v1597
  %v1602 = vand.u32 2147483647, %v1449
  %vm1603 = vcmp.eq.f32.partialorder %v1602, 8.507059e+37
  %v1604 = vand.u32 %v1449, 2147483648
  %v1605 = vor.u32 1.1754944e-38, %v1604
  %v1606 = vsel %vm1603, %v1605, %v1601
  %v1607 = vmul.f32 1.0, %v1606
  %v1608 = vrcp.pop %v1450
  %v1609 = vmul.f32 %v1450, %v1608
  %v1610 = vsub.f32 1.0, %v1609
  %v1611 = vmul.f32 %v1608, %v1610
  %v1612 = vadd.f32 %v1608, %v1611
  %vm1613 = vweird.f32 %v1450
  %vm1614 = vweird.f32 %v1608
  %vm1615 = vmor %vm1613, %vm1614
  %v1616 = vsel %vm1615, %v1608, %v1612
  %v1617 = vand.u32 2147483647, %v1450
  %vm1618 = vcmp.eq.f32.partialorder %v1617, 8.507059e+37
  %v1619 = vand.u32 %v1450, 2147483648
  %v1620 = vor.u32 1.1754944e-38, %v1619
  %v1621 = vsel %vm1618, %v1620, %v1616
  %v1622 = vmul.f32 1.0, %v1621
  %v1623 = vrcp.pop %v1451
  %v1624 = vmul.f32 %v1451, %v1623
  %v1625 = vsub.f32 1.0, %v1624
  %v1626 = vmul.f32 %v1623, %v1625
  %v1627 = vadd.f32 %v1623, %v1626
  %vm1628 = vweird.f32 %v1451
  %vm1629 = vweird.f32 %v1623
  %vm1630 = vmor %vm1628, %vm1629
  %v1631 = vsel %vm1630, %v1623, %v1627
  %v1632 = vand.u32 2147483647, %v1451
  %vm1633 = vcmp.eq.f32.partialorder %v1632, 8.507059e+37
  %v1634 = vand.u32 %v1451, 2147483648
  %v1635 = vor.u32 1.1754944e-38, %v1634
  %v1636 = vsel %vm1633, %v1635, %v1631
  %v1637 = vmul.f32 1.0, %v1636
  %v1638 = vrcp.pop %v1452
  %v1639 = vmul.f32 %v1452, %v1638
  %v1640 = vsub.f32 1.0, %v1639
  %v1641 = vmul.f32 %v1638, %v1640
  %v1642 = vadd.f32 %v1638, %v1641
  %vm1643 = vweird.f32 %v1452
  %vm1644 = vweird.f32 %v1638
  %vm1645 = vmor %vm1643, %vm1644
  %v1646 = vsel %vm1645, %v1638, %v1642
  %v1647 = vand.u32 2147483647, %v1452
  %vm1648 = vcmp.eq.f32.partialorder %v1647, 8.507059e+37
  %v1649 = vand.u32 %v1452, 2147483648
  %v1650 = vor.u32 1.1754944e-38, %v1649
  %v1651 = vsel %vm1648, %v1650, %v1646
  %v1652 = vmul.f32 1.0, %v1651
  %v1653 = vrcp.pop %v1453
  %v1654 = vmul.f32 %v1453, %v1653
  %v1655 = vsub.f32 1.0, %v1654
  %v1656 = vmul.f32 %v1653, %v1655
  %v1657 = vadd.f32 %v1653, %v1656
  %vm1658 = vweird.f32 %v1453
  %vm1659 = vweird.f32 %v1653
  %vm1660 = vmor %vm1658, %vm1659
  %v1661 = vsel %vm1660, %v1653, %v1657
  %v1662 = vand.u32 2147483647, %v1453
  %vm1663 = vcmp.eq.f32.partialorder %v1662, 8.507059e+37
  %v1664 = vand.u32 %v1453, 2147483648
  %v1665 = vor.u32 1.1754944e-38, %v1664
  %v1666 = vsel %vm1663, %v1665, %v1661
  %v1667 = vmul.f32 1.0, %v1666
  %v1668 = vrcp.pop %v1454
  %v1669 = vmul.f32 %v1454, %v1668
  %v1670 = vsub.f32 1.0, %v1669
  %v1671 = vmul.f32 %v1668, %v1670
  %v1672 = vadd.f32 %v1668, %v1671
  %vm1673 = vweird.f32 %v1454
  %vm1674 = vweird.f32 %v1668
  %vm1675 = vmor %vm1673, %vm1674
  %v1676 = vsel %vm1675, %v1668, %v1672
  %v1677 = vand.u32 2147483647, %v1454
  %vm1678 = vcmp.eq.f32.partialorder %v1677, 8.507059e+37
  %v1679 = vand.u32 %v1454, 2147483648
  %v1680 = vor.u32 1.1754944e-38, %v1679
  %v1681 = vsel %vm1678, %v1680, %v1676
  %v1682 = vmul.f32 1.0, %v1681
  %v1683 = vrcp.pop %v1455
  %v1684 = vmul.f32 %v1455, %v1683
  %v1685 = vsub.f32 1.0, %v1684
  %v1686 = vmul.f32 %v1683, %v1685
  %v1687 = vadd.f32 %v1683, %v1686
  %vm1688 = vweird.f32 %v1455
  %vm1689 = vweird.f32 %v1683
  %vm1690 = vmor %vm1688, %vm1689
  %v1691 = vsel %vm1690, %v1683, %v1687
  %v1692 = vand.u32 2147483647, %v1455
  %vm1693 = vcmp.eq.f32.partialorder %v1692, 8.507059e+37
  %v1694 = vand.u32 %v1455, 2147483648
  %v1695 = vor.u32 1.1754944e-38, %v1694
  %v1696 = vsel %vm1693, %v1695, %v1691
  %v1697 = vmul.f32 1.0, %v1696
  %v1698 = vrcp.pop %v1456
  %v1699 = vmul.f32 %v1456, %v1698
  %v1700 = vsub.f32 1.0, %v1699
  %v1701 = vmul.f32 %v1698, %v1700
  %v1702 = vadd.f32 %v1698, %v1701
  %vm1703 = vweird.f32 %v1456
  %vm1704 = vweird.f32 %v1698
  %vm1705 = vmor %vm1703, %vm1704
  %v1706 = vsel %vm1705, %v1698, %v1702
  %v1707 = vand.u32 2147483647, %v1456
  %vm1708 = vcmp.eq.f32.partialorder %v1707, 8.507059e+37
  %v1709 = vand.u32 %v1456, 2147483648
  %v1710 = vor.u32 1.1754944e-38, %v1709
  %v1711 = vsel %vm1708, %v1710, %v1706
  %v1712 = vmul.f32 1.0, %v1711
  %v1713 = vrcp.pop %v1457
  %v1714 = vmul.f32 %v1457, %v1713
  %v1715 = vsub.f32 1.0, %v1714
  %v1716 = vmul.f32 %v1713, %v1715
  %v1717 = vadd.f32 %v1713, %v1716
  %vm1718 = vweird.f32 %v1457
  %vm1719 = vweird.f32 %v1713
  %vm1720 = vmor %vm1718, %vm1719
  %v1721 = vsel %vm1720, %v1713, %v1717
  %v1722 = vand.u32 2147483647, %v1457
  %vm1723 = vcmp.eq.f32.partialorder %v1722, 8.507059e+37
  %v1724 = vand.u32 %v1457, 2147483648
  %v1725 = vor.u32 1.1754944e-38, %v1724
  %v1726 = vsel %vm1723, %v1725, %v1721
  %v1727 = vmul.f32 1.0, %v1726
  %v1728 = vrcp.pop %v1458
  %v1729 = vmul.f32 %v1458, %v1728
  %v1730 = vsub.f32 1.0, %v1729
  %v1731 = vmul.f32 %v1728, %v1730
  %v1732 = vadd.f32 %v1728, %v1731
  %vm1733 = vweird.f32 %v1458
  %vm1734 = vweird.f32 %v1728
  %vm1735 = vmor %vm1733, %vm1734
  %v1736 = vsel %vm1735, %v1728, %v1732
  %v1737 = vand.u32 2147483647, %v1458
  %vm1738 = vcmp.eq.f32.partialorder %v1737, 8.507059e+37
  %v1739 = vand.u32 %v1458, 2147483648
  %v1740 = vor.u32 1.1754944e-38, %v1739
  %v1741 = vsel %vm1738, %v1740, %v1736
  %v1742 = vmul.f32 1.0, %v1741
  %v1743 = vrcp.pop %v1459
  %v1744 = vmul.f32 %v1459, %v1743
  %v1745 = vsub.f32 1.0, %v1744
  %v1746 = vmul.f32 %v1743, %v1745
  %v1747 = vadd.f32 %v1743, %v1746
  %vm1748 = vweird.f32 %v1459
  %vm1749 = vweird.f32 %v1743
  %vm1750 = vmor %vm1748, %vm1749
  %v1751 = vsel %vm1750, %v1743, %v1747
  %v1752 = vand.u32 2147483647, %v1459
  %vm1753 = vcmp.eq.f32.partialorder %v1752, 8.507059e+37
  %v1754 = vand.u32 %v1459, 2147483648
  %v1755 = vor.u32 1.1754944e-38, %v1754
  %v1756 = vsel %vm1753, %v1755, %v1751
  %v1757 = vmul.f32 1.0, %v1756
  %v1758 = vrcp.pop %v1460
  %v1759 = vmul.f32 %v1460, %v1758
  %v1760 = vsub.f32 1.0, %v1759
  %v1761 = vmul.f32 %v1758, %v1760
  %v1762 = vadd.f32 %v1758, %v1761
  %vm1763 = vweird.f32 %v1460
  %vm1764 = vweird.f32 %v1758
  %vm1765 = vmor %vm1763, %vm1764
  %v1766 = vsel %vm1765, %v1758, %v1762
  %v1767 = vand.u32 2147483647, %v1460
  %vm1768 = vcmp.eq.f32.partialorder %v1767, 8.507059e+37
  %v1769 = vand.u32 %v1460, 2147483648
  %v1770 = vor.u32 1.1754944e-38, %v1769
  %v1771 = vsel %vm1768, %v1770, %v1766
  %v1772 = vmul.f32 1.0, %v1771
  %v1773 = vrcp.pop %v1461
  %v1774 = vmul.f32 %v1461, %v1773
  %v1775 = vsub.f32 1.0, %v1774
  %v1776 = vmul.f32 %v1773, %v1775
  %v1777 = vadd.f32 %v1773, %v1776
  %vm1778 = vweird.f32 %v1461
  %vm1779 = vweird.f32 %v1773
  %vm1780 = vmor %vm1778, %vm1779
  %v1781 = vsel %vm1780, %v1773, %v1777
  %v1782 = vand.u32 2147483647, %v1461
  %vm1783 = vcmp.eq.f32.partialorder %v1782, 8.507059e+37
  %v1784 = vand.u32 %v1461, 2147483648
  %v1785 = vor.u32 1.1754944e-38, %v1784
  %v1786 = vsel %vm1783, %v1785, %v1781
  %v1787 = vmul.f32 1.0, %v1786
  %v1788 = vrcp.pop %v1462
  %v1789 = vmul.f32 %v1462, %v1788
  %v1790 = vsub.f32 1.0, %v1789
  %v1791 = vmul.f32 %v1788, %v1790
  %v1792 = vadd.f32 %v1788, %v1791
  %vm1793 = vweird.f32 %v1462
  %vm1794 = vweird.f32 %v1788
  %vm1795 = vmor %vm1793, %vm1794
  %v1796 = vsel %vm1795, %v1788, %v1792
  %v1797 = vand.u32 2147483647, %v1462
  %vm1798 = vcmp.eq.f32.partialorder %v1797, 8.507059e+37
  %v1799 = vand.u32 %v1462, 2147483648
  %v1800 = vor.u32 1.1754944e-38, %v1799
  %v1801 = vsel %vm1798, %v1800, %v1796
  %v1802 = vmul.f32 1.0, %v1801
  %v1803 = vrcp.pop %v1463
  %v1804 = vmul.f32 %v1463, %v1803
  %v1805 = vsub.f32 1.0, %v1804
  %v1806 = vmul.f32 %v1803, %v1805
  %v1807 = vadd.f32 %v1803, %v1806
  %vm1808 = vweird.f32 %v1463
  %vm1809 = vweird.f32 %v1803
  %vm1810 = vmor %vm1808, %vm1809
  %v1811 = vsel %vm1810, %v1803, %v1807
  %v1812 = vand.u32 2147483647, %v1463
  %vm1813 = vcmp.eq.f32.partialorder %v1812, 8.507059e+37
  %v1814 = vand.u32 %v1463, 2147483648
  %v1815 = vor.u32 1.1754944e-38, %v1814
  %v1816 = vsel %vm1813, %v1815, %v1811
  %v1817 = vmul.f32 1.0, %v1816
  %v1818 = vrcp.pop %v1464
  %v1819 = vmul.f32 %v1464, %v1818
  %v1820 = vsub.f32 1.0, %v1819
  %v1821 = vmul.f32 %v1818, %v1820
  %v1822 = vadd.f32 %v1818, %v1821
  %vm1823 = vweird.f32 %v1464
  %vm1824 = vweird.f32 %v1818
  %vm1825 = vmor %vm1823, %vm1824
  %v1826 = vsel %vm1825, %v1818, %v1822
  %v1827 = vand.u32 2147483647, %v1464
  %vm1828 = vcmp.eq.f32.partialorder %v1827, 8.507059e+37
  %v1829 = vand.u32 %v1464, 2147483648
  %v1830 = vor.u32 1.1754944e-38, %v1829
  %v1831 = vsel %vm1828, %v1830, %v1826
  %v1832 = vmul.f32 1.0, %v1831
  %v1833 = vrcp.pop %v1465
  %v1834 = vmul.f32 %v1465, %v1833
  %v1835 = vsub.f32 1.0, %v1834
  %v1836 = vmul.f32 %v1833, %v1835
  %v1837 = vadd.f32 %v1833, %v1836
  %vm1838 = vweird.f32 %v1465
  %vm1839 = vweird.f32 %v1833
  %vm1840 = vmor %vm1838, %vm1839
  %v1841 = vsel %vm1840, %v1833, %v1837
  %v1842 = vand.u32 2147483647, %v1465
  %vm1843 = vcmp.eq.f32.partialorder %v1842, 8.507059e+37
  %v1844 = vand.u32 %v1465, 2147483648
  %v1845 = vor.u32 1.1754944e-38, %v1844
  %v1846 = vsel %vm1843, %v1845, %v1841
  %v1847 = vmul.f32 1.0, %v1846
  %v1848 = vrcp.pop %v1466
  %v1849 = vmul.f32 %v1466, %v1848
  %v1850 = vsub.f32 1.0, %v1849
  %v1851 = vmul.f32 %v1848, %v1850
  %v1852 = vadd.f32 %v1848, %v1851
  %vm1853 = vweird.f32 %v1466
  %vm1854 = vweird.f32 %v1848
  %vm1855 = vmor %vm1853, %vm1854
  %v1856 = vsel %vm1855, %v1848, %v1852
  %v1857 = vand.u32 2147483647, %v1466
  %vm1858 = vcmp.eq.f32.partialorder %v1857, 8.507059e+37
  %v1859 = vand.u32 %v1466, 2147483648
  %v1860 = vor.u32 1.1754944e-38, %v1859
  %v1861 = vsel %vm1858, %v1860, %v1856
  %v1862 = vmul.f32 1.0, %v1861
  %v1863 = vrcp.pop %v1467
  %v1864 = vmul.f32 %v1467, %v1863
  %v1865 = vsub.f32 1.0, %v1864
  %v1866 = vmul.f32 %v1863, %v1865
  %v1867 = vadd.f32 %v1863, %v1866
  %vm1868 = vweird.f32 %v1467
  %vm1869 = vweird.f32 %v1863
  %vm1870 = vmor %vm1868, %vm1869
  %v1871 = vsel %vm1870, %v1863, %v1867
  %v1872 = vand.u32 2147483647, %v1467
  %vm1873 = vcmp.eq.f32.partialorder %v1872, 8.507059e+37
  %v1874 = vand.u32 %v1467, 2147483648
  %v1875 = vor.u32 1.1754944e-38, %v1874
  %v1876 = vsel %vm1873, %v1875, %v1871
  %v1877 = vmul.f32 1.0, %v1876
  %v1878 = vrcp.pop %v1468
  %v1879 = vmul.f32 %v1468, %v1878
  %v1880 = vsub.f32 1.0, %v1879
  %v1881 = vmul.f32 %v1878, %v1880
  %v1882 = vadd.f32 %v1878, %v1881
  %vm1883 = vweird.f32 %v1468
  %vm1884 = vweird.f32 %v1878
  %vm1885 = vmor %vm1883, %vm1884
  %v1886 = vsel %vm1885, %v1878, %v1882
  %v1887 = vand.u32 2147483647, %v1468
  %vm1888 = vcmp.eq.f32.partialorder %v1887, 8.507059e+37
  %v1889 = vand.u32 %v1468, 2147483648
  %v1890 = vor.u32 1.1754944e-38, %v1889
  %v1891 = vsel %vm1888, %v1890, %v1886
  %v1892 = vmul.f32 1.0, %v1891
  %v1893 = vrcp.pop %v1469
  %v1894 = vmul.f32 %v1469, %v1893
  %v1895 = vsub.f32 1.0, %v1894
  %v1896 = vmul.f32 %v1893, %v1895
  %v1897 = vadd.f32 %v1893, %v1896
  %vm1898 = vweird.f32 %v1469
  %vm1899 = vweird.f32 %v1893
  %vm1900 = vmor %vm1898, %vm1899
  %v1901 = vsel %vm1900, %v1893, %v1897
  %v1902 = vand.u32 2147483647, %v1469
  %vm1903 = vcmp.eq.f32.partialorder %v1902, 8.507059e+37
  %v1904 = vand.u32 %v1469, 2147483648
  %v1905 = vor.u32 1.1754944e-38, %v1904
  %v1906 = vsel %vm1903, %v1905, %v1901
  %v1907 = vmul.f32 1.0, %v1906
  %v1908 = vrcp.pop %v1470
  %v1909 = vmul.f32 %v1470, %v1908
  %v1910 = vsub.f32 1.0, %v1909
  %v1911 = vmul.f32 %v1908, %v1910
  %v1912 = vadd.f32 %v1908, %v1911
  %vm1913 = vweird.f32 %v1470
  %vm1914 = vweird.f32 %v1908
  %vm1915 = vmor %vm1913, %vm1914
  %v1916 = vsel %vm1915, %v1908, %v1912
  %v1917 = vand.u32 2147483647, %v1470
  %vm1918 = vcmp.eq.f32.partialorder %v1917, 8.507059e+37
  %v1919 = vand.u32 %v1470, 2147483648
  %v1920 = vor.u32 1.1754944e-38, %v1919
  %v1921 = vsel %vm1918, %v1920, %v1916
  %v1922 = vmul.f32 1.0, %v1921
  %v1923 = vrcp.pop %v1471
  %v1924 = vmul.f32 %v1471, %v1923
  %v1925 = vsub.f32 1.0, %v1924
  %v1926 = vmul.f32 %v1923, %v1925
  %v1927 = vadd.f32 %v1923, %v1926
  %vm1928 = vweird.f32 %v1471
  %vm1929 = vweird.f32 %v1923
  %vm1930 = vmor %vm1928, %vm1929
  %v1931 = vsel %vm1930, %v1923, %v1927
  %v1932 = vand.u32 2147483647, %v1471
  %vm1933 = vcmp.eq.f32.partialorder %v1932, 8.507059e+37
  %v1934 = vand.u32 %v1471, 2147483648
  %v1935 = vor.u32 1.1754944e-38, %v1934
  %v1936 = vsel %vm1933, %v1935, %v1931
  %v1937 = vmul.f32 1.0, %v1936
  %v1938 = vrcp.pop %v1472
  %v1939 = vmul.f32 %v1472, %v1938
  %v1940 = vsub.f32 1.0, %v1939
  %v1941 = vmul.f32 %v1938, %v1940
  %v1942 = vadd.f32 %v1938, %v1941
  %vm1943 = vweird.f32 %v1472
  %vm1944 = vweird.f32 %v1938
  %vm1945 = vmor %vm1943, %vm1944
  %v1946 = vsel %vm1945, %v1938, %v1942
  %v1947 = vand.u32 2147483647, %v1472
  %vm1948 = vcmp.eq.f32.partialorder %v1947, 8.507059e+37
  %v1949 = vand.u32 %v1472, 2147483648
  %v1950 = vor.u32 1.1754944e-38, %v1949
  %v1951 = vsel %vm1948, %v1950, %v1946
  %v1952 = vmul.f32 1.0, %v1951
  %v1953 = vmul.f32 %v1203, %v1487
  %v1954 = vmul.f32 %v1222, %v1502
  %v1955 = vmul.f32 %v1241, %v1517
  %v1956 = vmul.f32 %v1260, %v1532
  %v1957 = vmul.f32 %v1279, %v1547
  %v1958 = vmul.f32 %v1298, %v1562
  %v1959 = vmul.f32 %v1317, %v1577
  %v1960 = vmul.f32 %v1336, %v1592
  %v1961 = vmul.f32 %v1205, %v1607
  %v1962 = vmul.f32 %v1224, %v1622
  %v1963 = vmul.f32 %v1243, %v1637
  %v1964 = vmul.f32 %v1262, %v1652
  %v1965 = vmul.f32 %v1281, %v1667
  %v1966 = vmul.f32 %v1300, %v1682
  %v1967 = vmul.f32 %v1319, %v1697
  %v1968 = vmul.f32 %v1338, %v1712
  %v1969 = vmul.f32 %v1208, %v1727
  %v1970 = vmul.f32 %v1227, %v1742
  %v1971 = vmul.f32 %v1246, %v1757
  %v1972 = vmul.f32 %v1265, %v1772
  %v1973 = vmul.f32 %v1284, %v1787
  %v1974 = vmul.f32 %v1303, %v1802
  %v1975 = vmul.f32 %v1322, %v1817
  %v1976 = vmul.f32 %v1341, %v1832
  %v1977 = vmul.f32 %v1210, %v1847
  %v1978 = vmul.f32 %v1229, %v1862
  %v1979 = vmul.f32 %v1248, %v1877
  %v1980 = vmul.f32 %v1267, %v1892
  %v1981 = vmul.f32 %v1286, %v1907
  %v1982 = vmul.f32 %v1305, %v1922
  %v1983 = vmul.f32 %v1324, %v1937
  %v1984 = vmul.f32 %v1343, %v1952
  %v1985 = vadd.f32 %v136, %v1953
  %v1986 = vadd.f32 %v155, %v1954
  %v1987 = vadd.f32 %v174, %v1955
  %v1988 = vadd.f32 %v193, %v1956
  %v1989 = vadd.f32 %v212, %v1957
  %v1990 = vadd.f32 %v231, %v1958
  %v1991 = vadd.f32 %v250, %v1959
  %v1992 = vadd.f32 %v269, %v1960
  %v1993 = vadd.f32 %v138, %v1961
  %v1994 = vadd.f32 %v157, %v1962
  %v1995 = vadd.f32 %v176, %v1963
  %v1996 = vadd.f32 %v195, %v1964
  %v1997 = vadd.f32 %v214, %v1965
  %v1998 = vadd.f32 %v233, %v1966
  %v1999 = vadd.f32 %v252, %v1967
  %v2000 = vadd.f32 %v271, %v1968
  %v2001 = vadd.f32 %v141, %v1969
  %v2002 = vadd.f32 %v160, %v1970
  %v2003 = vadd.f32 %v179, %v1971
  %v2004 = vadd.f32 %v198, %v1972
  %v2005 = vadd.f32 %v217, %v1973
  %v2006 = vadd.f32 %v236, %v1974
  %v2007 = vadd.f32 %v255, %v1975
  %v2008 = vadd.f32 %v274, %v1976
  %v2009 = vadd.f32 %v143, %v1977
  %v2010 = vadd.f32 %v162, %v1978
  %v2011 = vadd.f32 %v181, %v1979
  %v2012 = vadd.f32 %v200, %v1980
  %v2013 = vadd.f32 %v219, %v1981
  %v2014 = vadd.f32 %v238, %v1982
  %v2015 = vadd.f32 %v257, %v1983
  %v2016 = vadd.f32 %v276, %v1984
  %s2017 = scalar_lea.vmem %s3, 32
  %v2018 = vld [vmem:[%s2017] sm:$0xf]
  %v2019 = vld [vmem:[%s2017 + $0x4] sm:$0xf]
  %v2020 = vld [vmem:[%s2017 + $0x8] sm:$0xf]
  %v2021 = vld [vmem:[%s2017 + $0xc] sm:$0xf]
  %s2022 = scalar_lea.vmem %s4, 64
  %v2023 = vld [vmem:[%s2022] sm:$0xff]
  %v2024 = vld [vmem:[%s2022 + $0x8] sm:$0xff]
  %v2025 = vld [vmem:[%s2022 + $0x10] sm:$0xff]
  %v2026 = vld [vmem:[%s2022 + $0x18] sm:$0xff]
  %v2027 = vpack.c.bf16 %v1993, %v1985
  %v2028 = vpack.c.bf16 %v1994, %v1986
  %v2029 = vpack.c.bf16 %v1995, %v1987
  %v2030 = vpack.c.bf16 %v1996, %v1988
  %v2031 = vpack.c.bf16 %v1997, %v1989
  %v2032 = vpack.c.bf16 %v1998, %v1990
  %v2033 = vpack.c.bf16 %v1999, %v1991
  %v2034 = vpack.c.bf16 %v2000, %v1992
  %v2035 = vpack.c.bf16 %v2009, %v2001
  %v2036 = vpack.c.bf16 %v2010, %v2002
  %v2037 = vpack.c.bf16 %v2011, %v2003
  %v2038 = vpack.c.bf16 %v2012, %v2004
  %v2039 = vpack.c.bf16 %v2013, %v2005
  %v2040 = vpack.c.bf16 %v2014, %v2006
  %v2041 = vpack.c.bf16 %v2015, %v2007
  %v2042 = vpack.c.bf16 %v2016, %v2008
  %2044 = vset.pattern.permute.xlu0 0
  %2045 = vperm.xlu0 %2044, %v2023
  %v2046 = vpop.permute.xlu0 %2045
  %2049 = vset.pattern.permute.xlu0 0
  %2050 = vperm.xlu0 %2049, %v2024
  %v2051 = vpop.permute.xlu0 %2050
  %2054 = vset.pattern.permute.xlu0 0
  %2055 = vperm.xlu0 %2054, %v2025
  %v2056 = vpop.permute.xlu0 %2055
  %2059 = vset.pattern.permute.xlu0 0
  %2060 = vperm.xlu0 %2059, %v2026
  %v2061 = vpop.permute.xlu0 %2060
  %v2067 = vunpack.c.l.b16 %v2018
  %v2068 = vunpack.c.l.b16 %v2019
  %v2069 = vunpack.c.l.b16 %v2020
  %v2070 = vunpack.c.l.b16 %v2021
  %v2071 = vpack.c.b16 %v2068, %v2067
  %v2072 = vpack.c.b16 %v2070, %v2069
  %v2074 = vsel %vm332, %v2071, 0
  %v2077 = vsel %vm332, %v2072, 0
  %2079 = vmatpush.bf16.msra.mxu0 0
  %2080 = vmatpush.bf16.msra.mxu0 0
  %2081 = vmatpush.bf16.msra.mxu0 0
  %2082 = vmatpush.bf16.msra.mxu0 0
  %2083 = vmatpush.bf16.msra.mxu0 0
  %2084 = vmatpush.bf16.msra.mxu0 0
  %2085 = vmatpush.bf16.msra.mxu0 %v2035
  %2086 = vmatpush.bf16.msra.mxu0 %v2027
  %2087 = vmatmul.bf16.gmra.mxu0 %v2074
  %v2088 = vpop.f32.mrf.mxu0
  %v2089 = vadd.f32 %v2046, %v2088
  %v2090 = vpop.f32.mrf.mxu0
  %v2091 = vadd.f32 %v2051, %v2090
  %2092 = vmatmul.bf16.gmra.mxu0 %v2077
  %v2093 = vpop.f32.mrf.mxu0
  %v2094 = vadd.f32 %v2056, %v2093
  %v2095 = vpop.f32.mrf.mxu0
  %v2096 = vadd.f32 %v2061, %v2095
  %2097 = vdwg.mxu0
  %2098 = vmatpush.bf16.msra.mxu0 0
  %2099 = vmatpush.bf16.msra.mxu0 0
  %2100 = vmatpush.bf16.msra.mxu0 0
  %2101 = vmatpush.bf16.msra.mxu0 0
  %2102 = vmatpush.bf16.msra.mxu0 0
  %2103 = vmatpush.bf16.msra.mxu0 0
  %2104 = vmatpush.bf16.msra.mxu0 %v2036
  %2105 = vmatpush.bf16.msra.mxu0 %v2028
  %2106 = vmatmul.bf16.gmra.mxu0 %v2074
  %v2107 = vpop.f32.mrf.mxu0
  %v2108 = vadd.f32 %v2046, %v2107
  %v2109 = vpop.f32.mrf.mxu0
  %v2110 = vadd.f32 %v2051, %v2109
  %2111 = vmatmul.bf16.gmra.mxu0 %v2077
  %v2112 = vpop.f32.mrf.mxu0
  %v2113 = vadd.f32 %v2056, %v2112
  %v2114 = vpop.f32.mrf.mxu0
  %v2115 = vadd.f32 %v2061, %v2114
  %2116 = vdwg.mxu0
  %2117 = vmatpush.bf16.msra.mxu0 0
  %2118 = vmatpush.bf16.msra.mxu0 0
  %2119 = vmatpush.bf16.msra.mxu0 0
  %2120 = vmatpush.bf16.msra.mxu0 0
  %2121 = vmatpush.bf16.msra.mxu0 0
  %2122 = vmatpush.bf16.msra.mxu0 0
  %2123 = vmatpush.bf16.msra.mxu0 %v2037
  %2124 = vmatpush.bf16.msra.mxu0 %v2029
  %2125 = vmatmul.bf16.gmra.mxu0 %v2074
  %v2126 = vpop.f32.mrf.mxu0
  %v2127 = vadd.f32 %v2046, %v2126
  %v2128 = vpop.f32.mrf.mxu0
  %v2129 = vadd.f32 %v2051, %v2128
  %2130 = vmatmul.bf16.gmra.mxu0 %v2077
  %v2131 = vpop.f32.mrf.mxu0
  %v2132 = vadd.f32 %v2056, %v2131
  %v2133 = vpop.f32.mrf.mxu0
  %v2134 = vadd.f32 %v2061, %v2133
  %2135 = vdwg.mxu0
  %2136 = vmatpush.bf16.msra.mxu0 0
  %2137 = vmatpush.bf16.msra.mxu0 0
  %2138 = vmatpush.bf16.msra.mxu0 0
  %2139 = vmatpush.bf16.msra.mxu0 0
  %2140 = vmatpush.bf16.msra.mxu0 0
  %2141 = vmatpush.bf16.msra.mxu0 0
  %2142 = vmatpush.bf16.msra.mxu0 %v2038
  %2143 = vmatpush.bf16.msra.mxu0 %v2030
  %2144 = vmatmul.bf16.gmra.mxu0 %v2074
  %v2145 = vpop.f32.mrf.mxu0
  %v2146 = vadd.f32 %v2046, %v2145
  %v2147 = vpop.f32.mrf.mxu0
  %v2148 = vadd.f32 %v2051, %v2147
  %2149 = vmatmul.bf16.gmra.mxu0 %v2077
  %v2150 = vpop.f32.mrf.mxu0
  %v2151 = vadd.f32 %v2056, %v2150
  %v2152 = vpop.f32.mrf.mxu0
  %v2153 = vadd.f32 %v2061, %v2152
  %2154 = vdwg.mxu0
  %2155 = vmatpush.bf16.msra.mxu0 0
  %2156 = vmatpush.bf16.msra.mxu0 0
  %2157 = vmatpush.bf16.msra.mxu0 0
  %2158 = vmatpush.bf16.msra.mxu0 0
  %2159 = vmatpush.bf16.msra.mxu0 0
  %2160 = vmatpush.bf16.msra.mxu0 0
  %2161 = vmatpush.bf16.msra.mxu0 %v2039
  %2162 = vmatpush.bf16.msra.mxu0 %v2031
  %2163 = vmatmul.bf16.gmra.mxu0 %v2074
  %v2164 = vpop.f32.mrf.mxu0
  %v2165 = vadd.f32 %v2046, %v2164
  %v2166 = vpop.f32.mrf.mxu0
  %v2167 = vadd.f32 %v2051, %v2166
  %2168 = vmatmul.bf16.gmra.mxu0 %v2077
  %v2169 = vpop.f32.mrf.mxu0
  %v2170 = vadd.f32 %v2056, %v2169
  %v2171 = vpop.f32.mrf.mxu0
  %v2172 = vadd.f32 %v2061, %v2171
  %2173 = vdwg.mxu0
  %2174 = vmatpush.bf16.msra.mxu0 0
  %2175 = vmatpush.bf16.msra.mxu0 0
  %2176 = vmatpush.bf16.msra.mxu0 0
  %2177 = vmatpush.bf16.msra.mxu0 0
  %2178 = vmatpush.bf16.msra.mxu0 0
  %2179 = vmatpush.bf16.msra.mxu0 0
  %2180 = vmatpush.bf16.msra.mxu0 %v2040
  %2181 = vmatpush.bf16.msra.mxu0 %v2032
  %2182 = vmatmul.bf16.gmra.mxu0 %v2074
  %v2183 = vpop.f32.mrf.mxu0
  %v2184 = vadd.f32 %v2046, %v2183
  %v2185 = vpop.f32.mrf.mxu0
  %v2186 = vadd.f32 %v2051, %v2185
  %2187 = vmatmul.bf16.gmra.mxu0 %v2077
  %v2188 = vpop.f32.mrf.mxu0
  %v2189 = vadd.f32 %v2056, %v2188
  %v2190 = vpop.f32.mrf.mxu0
  %v2191 = vadd.f32 %v2061, %v2190
  %2192 = vdwg.mxu0
  %2193 = vmatpush.bf16.msra.mxu0 0
  %2194 = vmatpush.bf16.msra.mxu0 0
  %2195 = vmatpush.bf16.msra.mxu0 0
  %2196 = vmatpush.bf16.msra.mxu0 0
  %2197 = vmatpush.bf16.msra.mxu0 0
  %2198 = vmatpush.bf16.msra.mxu0 0
  %2199 = vmatpush.bf16.msra.mxu0 %v2041
  %2200 = vmatpush.bf16.msra.mxu0 %v2033
  %2201 = vmatmul.bf16.gmra.mxu0 %v2074
  %v2202 = vpop.f32.mrf.mxu0
  %v2203 = vadd.f32 %v2046, %v2202
  %v2204 = vpop.f32.mrf.mxu0
  %v2205 = vadd.f32 %v2051, %v2204
  %2206 = vmatmul.bf16.gmra.mxu0 %v2077
  %v2207 = vpop.f32.mrf.mxu0
  %v2208 = vadd.f32 %v2056, %v2207
  %v2209 = vpop.f32.mrf.mxu0
  %v2210 = vadd.f32 %v2061, %v2209
  %2211 = vdwg.mxu0
  %2212 = vmatpush.bf16.msra.mxu0 0
  %2213 = vmatpush.bf16.msra.mxu0 0
  %2214 = vmatpush.bf16.msra.mxu0 0
  %2215 = vmatpush.bf16.msra.mxu0 0
  %2216 = vmatpush.bf16.msra.mxu0 0
  %2217 = vmatpush.bf16.msra.mxu0 0
  %2218 = vmatpush.bf16.msra.mxu0 %v2042
  %2219 = vmatpush.bf16.msra.mxu0 %v2034
  %2220 = vmatmul.bf16.gmra.mxu0 %v2074
  %v2221 = vpop.f32.mrf.mxu0
  %v2222 = vadd.f32 %v2046, %v2221
  %v2223 = vpop.f32.mrf.mxu0
  %v2224 = vadd.f32 %v2051, %v2223
  %2225 = vmatmul.bf16.gmra.mxu0 %v2077
  %v2226 = vpop.f32.mrf.mxu0
  %v2227 = vadd.f32 %v2056, %v2226
  %v2228 = vpop.f32.mrf.mxu0
  %v2229 = vadd.f32 %v2061, %v2228
  %2230 = vdwg.mxu0
  %v2231 = vxor.u32 %v2089, 2147483648
  %v2232 = vxor.u32 %v2108, 2147483648
  %v2233 = vxor.u32 %v2127, 2147483648
  %v2234 = vxor.u32 %v2146, 2147483648
  %v2235 = vxor.u32 %v2165, 2147483648
  %v2236 = vxor.u32 %v2184, 2147483648
  %v2237 = vxor.u32 %v2203, 2147483648
  %v2238 = vxor.u32 %v2222, 2147483648
  %v2239 = vxor.u32 %v2091, 2147483648
  %v2240 = vxor.u32 %v2110, 2147483648
  %v2241 = vxor.u32 %v2129, 2147483648
  %v2242 = vxor.u32 %v2148, 2147483648
  %v2243 = vxor.u32 %v2167, 2147483648
  %v2244 = vxor.u32 %v2186, 2147483648
  %v2245 = vxor.u32 %v2205, 2147483648
  %v2246 = vxor.u32 %v2224, 2147483648
  %v2247 = vxor.u32 %v2094, 2147483648
  %v2248 = vxor.u32 %v2113, 2147483648
  %v2249 = vxor.u32 %v2132, 2147483648
  %v2250 = vxor.u32 %v2151, 2147483648
  %v2251 = vxor.u32 %v2170, 2147483648
  %v2252 = vxor.u32 %v2189, 2147483648
  %v2253 = vxor.u32 %v2208, 2147483648
  %v2254 = vxor.u32 %v2227, 2147483648
  %v2255 = vxor.u32 %v2096, 2147483648
  %v2256 = vxor.u32 %v2115, 2147483648
  %v2257 = vxor.u32 %v2134, 2147483648
  %v2258 = vxor.u32 %v2153, 2147483648
  %v2259 = vxor.u32 %v2172, 2147483648
  %v2260 = vxor.u32 %v2191, 2147483648
  %v2261 = vxor.u32 %v2210, 2147483648
  %v2262 = vxor.u32 %v2229, 2147483648
  %v2263 = vmul.f32 %v2231, 1.442695
  %v2264 = vpow.pop %v2263
  %v2265 = vmul.f32 %v2232, 1.442695
  %v2266 = vpow.pop %v2265
  %v2267 = vmul.f32 %v2233, 1.442695
  %v2268 = vpow.pop %v2267
  %v2269 = vmul.f32 %v2234, 1.442695
  %v2270 = vpow.pop %v2269
  %v2271 = vmul.f32 %v2235, 1.442695
  %v2272 = vpow.pop %v2271
  %v2273 = vmul.f32 %v2236, 1.442695
  %v2274 = vpow.pop %v2273
  %v2275 = vmul.f32 %v2237, 1.442695
  %v2276 = vpow.pop %v2275
  %v2277 = vmul.f32 %v2238, 1.442695
  %v2278 = vpow.pop %v2277
  %v2279 = vmul.f32 %v2239, 1.442695
  %v2280 = vpow.pop %v2279
  %v2281 = vmul.f32 %v2240, 1.442695
  %v2282 = vpow.pop %v2281
  %v2283 = vmul.f32 %v2241, 1.442695
  %v2284 = vpow.pop %v2283
  %v2285 = vmul.f32 %v2242, 1.442695
  %v2286 = vpow.pop %v2285
  %v2287 = vmul.f32 %v2243, 1.442695
  %v2288 = vpow.pop %v2287
  %v2289 = vmul.f32 %v2244, 1.442695
  %v2290 = vpow.pop %v2289
  %v2291 = vmul.f32 %v2245, 1.442695
  %v2292 = vpow.pop %v2291
  %v2293 = vmul.f32 %v2246, 1.442695
  %v2294 = vpow.pop %v2293
  %v2295 = vmul.f32 %v2247, 1.442695
  %v2296 = vpow.pop %v2295
  %v2297 = vmul.f32 %v2248, 1.442695
  %v2298 = vpow.pop %v2297
  %v2299 = vmul.f32 %v2249, 1.442695
  %v2300 = vpow.pop %v2299
  %v2301 = vmul.f32 %v2250, 1.442695
  %v2302 = vpow.pop %v2301
  %v2303 = vmul.f32 %v2251, 1.442695
  %v2304 = vpow.pop %v2303
  %v2305 = vmul.f32 %v2252, 1.442695
  %v2306 = vpow.pop %v2305
  %v2307 = vmul.f32 %v2253, 1.442695
  %v2308 = vpow.pop %v2307
  %v2309 = vmul.f32 %v2254, 1.442695
  %v2310 = vpow.pop %v2309
  %v2311 = vmul.f32 %v2255, 1.442695
  %v2312 = vpow.pop %v2311
  %v2313 = vmul.f32 %v2256, 1.442695
  %v2314 = vpow.pop %v2313
  %v2315 = vmul.f32 %v2257, 1.442695
  %v2316 = vpow.pop %v2315
  %v2317 = vmul.f32 %v2258, 1.442695
  %v2318 = vpow.pop %v2317
  %v2319 = vmul.f32 %v2259, 1.442695
  %v2320 = vpow.pop %v2319
  %v2321 = vmul.f32 %v2260, 1.442695
  %v2322 = vpow.pop %v2321
  %v2323 = vmul.f32 %v2261, 1.442695
  %v2324 = vpow.pop %v2323
  %v2325 = vmul.f32 %v2262, 1.442695
  %v2326 = vpow.pop %v2325
  %v2327 = vadd.f32 %v2264, 1.0
  %v2328 = vadd.f32 %v2266, 1.0
  %v2329 = vadd.f32 %v2268, 1.0
  %v2330 = vadd.f32 %v2270, 1.0
  %v2331 = vadd.f32 %v2272, 1.0
  %v2332 = vadd.f32 %v2274, 1.0
  %v2333 = vadd.f32 %v2276, 1.0
  %v2334 = vadd.f32 %v2278, 1.0
  %v2335 = vadd.f32 %v2280, 1.0
  %v2336 = vadd.f32 %v2282, 1.0
  %v2337 = vadd.f32 %v2284, 1.0
  %v2338 = vadd.f32 %v2286, 1.0
  %v2339 = vadd.f32 %v2288, 1.0
  %v2340 = vadd.f32 %v2290, 1.0
  %v2341 = vadd.f32 %v2292, 1.0
  %v2342 = vadd.f32 %v2294, 1.0
  %v2343 = vadd.f32 %v2296, 1.0
  %v2344 = vadd.f32 %v2298, 1.0
  %v2345 = vadd.f32 %v2300, 1.0
  %v2346 = vadd.f32 %v2302, 1.0
  %v2347 = vadd.f32 %v2304, 1.0
  %v2348 = vadd.f32 %v2306, 1.0
  %v2349 = vadd.f32 %v2308, 1.0
  %v2350 = vadd.f32 %v2310, 1.0
  %v2351 = vadd.f32 %v2312, 1.0
  %v2352 = vadd.f32 %v2314, 1.0
  %v2353 = vadd.f32 %v2316, 1.0
  %v2354 = vadd.f32 %v2318, 1.0
  %v2355 = vadd.f32 %v2320, 1.0
  %v2356 = vadd.f32 %v2322, 1.0
  %v2357 = vadd.f32 %v2324, 1.0
  %v2358 = vadd.f32 %v2326, 1.0
  %v2359 = vrcp.pop %v2327
  %v2360 = vmul.f32 %v2327, %v2359
  %v2361 = vsub.f32 1.0, %v2360
  %v2362 = vmul.f32 %v2359, %v2361
  %v2363 = vadd.f32 %v2359, %v2362
  %vm2364 = vweird.f32 %v2327
  %vm2365 = vweird.f32 %v2359
  %vm2366 = vmor %vm2364, %vm2365
  %v2367 = vsel %vm2366, %v2359, %v2363
  %v2368 = vand.u32 2147483647, %v2327
  %vm2369 = vcmp.eq.f32.partialorder %v2368, 8.507059e+37
  %v2370 = vand.u32 %v2327, 2147483648
  %v2371 = vor.u32 1.1754944e-38, %v2370
  %v2372 = vsel %vm2369, %v2371, %v2367
  %v2373 = vmul.f32 1.0, %v2372
  %v2374 = vrcp.pop %v2328
  %v2375 = vmul.f32 %v2328, %v2374
  %v2376 = vsub.f32 1.0, %v2375
  %v2377 = vmul.f32 %v2374, %v2376
  %v2378 = vadd.f32 %v2374, %v2377
  %vm2379 = vweird.f32 %v2328
  %vm2380 = vweird.f32 %v2374
  %vm2381 = vmor %vm2379, %vm2380
  %v2382 = vsel %vm2381, %v2374, %v2378
  %v2383 = vand.u32 2147483647, %v2328
  %vm2384 = vcmp.eq.f32.partialorder %v2383, 8.507059e+37
  %v2385 = vand.u32 %v2328, 2147483648
  %v2386 = vor.u32 1.1754944e-38, %v2385
  %v2387 = vsel %vm2384, %v2386, %v2382
  %v2388 = vmul.f32 1.0, %v2387
  %v2389 = vrcp.pop %v2329
  %v2390 = vmul.f32 %v2329, %v2389
  %v2391 = vsub.f32 1.0, %v2390
  %v2392 = vmul.f32 %v2389, %v2391
  %v2393 = vadd.f32 %v2389, %v2392
  %vm2394 = vweird.f32 %v2329
  %vm2395 = vweird.f32 %v2389
  %vm2396 = vmor %vm2394, %vm2395
  %v2397 = vsel %vm2396, %v2389, %v2393
  %v2398 = vand.u32 2147483647, %v2329
  %vm2399 = vcmp.eq.f32.partialorder %v2398, 8.507059e+37
  %v2400 = vand.u32 %v2329, 2147483648
  %v2401 = vor.u32 1.1754944e-38, %v2400
  %v2402 = vsel %vm2399, %v2401, %v2397
  %v2403 = vmul.f32 1.0, %v2402
  %v2404 = vrcp.pop %v2330
  %v2405 = vmul.f32 %v2330, %v2404
  %v2406 = vsub.f32 1.0, %v2405
  %v2407 = vmul.f32 %v2404, %v2406
  %v2408 = vadd.f32 %v2404, %v2407
  %vm2409 = vweird.f32 %v2330
  %vm2410 = vweird.f32 %v2404
  %vm2411 = vmor %vm2409, %vm2410
  %v2412 = vsel %vm2411, %v2404, %v2408
  %v2413 = vand.u32 2147483647, %v2330
  %vm2414 = vcmp.eq.f32.partialorder %v2413, 8.507059e+37
  %v2415 = vand.u32 %v2330, 2147483648
  %v2416 = vor.u32 1.1754944e-38, %v2415
  %v2417 = vsel %vm2414, %v2416, %v2412
  %v2418 = vmul.f32 1.0, %v2417
  %v2419 = vrcp.pop %v2331
  %v2420 = vmul.f32 %v2331, %v2419
  %v2421 = vsub.f32 1.0, %v2420
  %v2422 = vmul.f32 %v2419, %v2421
  %v2423 = vadd.f32 %v2419, %v2422
  %vm2424 = vweird.f32 %v2331
  %vm2425 = vweird.f32 %v2419
  %vm2426 = vmor %vm2424, %vm2425
  %v2427 = vsel %vm2426, %v2419, %v2423
  %v2428 = vand.u32 2147483647, %v2331
  %vm2429 = vcmp.eq.f32.partialorder %v2428, 8.507059e+37
  %v2430 = vand.u32 %v2331, 2147483648
  %v2431 = vor.u32 1.1754944e-38, %v2430
  %v2432 = vsel %vm2429, %v2431, %v2427
  %v2433 = vmul.f32 1.0, %v2432
  %v2434 = vrcp.pop %v2332
  %v2435 = vmul.f32 %v2332, %v2434
  %v2436 = vsub.f32 1.0, %v2435
  %v2437 = vmul.f32 %v2434, %v2436
  %v2438 = vadd.f32 %v2434, %v2437
  %vm2439 = vweird.f32 %v2332
  %vm2440 = vweird.f32 %v2434
  %vm2441 = vmor %vm2439, %vm2440
  %v2442 = vsel %vm2441, %v2434, %v2438
  %v2443 = vand.u32 2147483647, %v2332
  %vm2444 = vcmp.eq.f32.partialorder %v2443, 8.507059e+37
  %v2445 = vand.u32 %v2332, 2147483648
  %v2446 = vor.u32 1.1754944e-38, %v2445
  %v2447 = vsel %vm2444, %v2446, %v2442
  %v2448 = vmul.f32 1.0, %v2447
  %v2449 = vrcp.pop %v2333
  %v2450 = vmul.f32 %v2333, %v2449
  %v2451 = vsub.f32 1.0, %v2450
  %v2452 = vmul.f32 %v2449, %v2451
  %v2453 = vadd.f32 %v2449, %v2452
  %vm2454 = vweird.f32 %v2333
  %vm2455 = vweird.f32 %v2449
  %vm2456 = vmor %vm2454, %vm2455
  %v2457 = vsel %vm2456, %v2449, %v2453
  %v2458 = vand.u32 2147483647, %v2333
  %vm2459 = vcmp.eq.f32.partialorder %v2458, 8.507059e+37
  %v2460 = vand.u32 %v2333, 2147483648
  %v2461 = vor.u32 1.1754944e-38, %v2460
  %v2462 = vsel %vm2459, %v2461, %v2457
  %v2463 = vmul.f32 1.0, %v2462
  %v2464 = vrcp.pop %v2334
  %v2465 = vmul.f32 %v2334, %v2464
  %v2466 = vsub.f32 1.0, %v2465
  %v2467 = vmul.f32 %v2464, %v2466
  %v2468 = vadd.f32 %v2464, %v2467
  %vm2469 = vweird.f32 %v2334
  %vm2470 = vweird.f32 %v2464
  %vm2471 = vmor %vm2469, %vm2470
  %v2472 = vsel %vm2471, %v2464, %v2468
  %v2473 = vand.u32 2147483647, %v2334
  %vm2474 = vcmp.eq.f32.partialorder %v2473, 8.507059e+37
  %v2475 = vand.u32 %v2334, 2147483648
  %v2476 = vor.u32 1.1754944e-38, %v2475
  %v2477 = vsel %vm2474, %v2476, %v2472
  %v2478 = vmul.f32 1.0, %v2477
  %v2479 = vrcp.pop %v2335
  %v2480 = vmul.f32 %v2335, %v2479
  %v2481 = vsub.f32 1.0, %v2480
  %v2482 = vmul.f32 %v2479, %v2481
  %v2483 = vadd.f32 %v2479, %v2482
  %vm2484 = vweird.f32 %v2335
  %vm2485 = vweird.f32 %v2479
  %vm2486 = vmor %vm2484, %vm2485
  %v2487 = vsel %vm2486, %v2479, %v2483
  %v2488 = vand.u32 2147483647, %v2335
  %vm2489 = vcmp.eq.f32.partialorder %v2488, 8.507059e+37
  %v2490 = vand.u32 %v2335, 2147483648
  %v2491 = vor.u32 1.1754944e-38, %v2490
  %v2492 = vsel %vm2489, %v2491, %v2487
  %v2493 = vmul.f32 1.0, %v2492
  %v2494 = vrcp.pop %v2336
  %v2495 = vmul.f32 %v2336, %v2494
  %v2496 = vsub.f32 1.0, %v2495
  %v2497 = vmul.f32 %v2494, %v2496
  %v2498 = vadd.f32 %v2494, %v2497
  %vm2499 = vweird.f32 %v2336
  %vm2500 = vweird.f32 %v2494
  %vm2501 = vmor %vm2499, %vm2500
  %v2502 = vsel %vm2501, %v2494, %v2498
  %v2503 = vand.u32 2147483647, %v2336
  %vm2504 = vcmp.eq.f32.partialorder %v2503, 8.507059e+37
  %v2505 = vand.u32 %v2336, 2147483648
  %v2506 = vor.u32 1.1754944e-38, %v2505
  %v2507 = vsel %vm2504, %v2506, %v2502
  %v2508 = vmul.f32 1.0, %v2507
  %v2509 = vrcp.pop %v2337
  %v2510 = vmul.f32 %v2337, %v2509
  %v2511 = vsub.f32 1.0, %v2510
  %v2512 = vmul.f32 %v2509, %v2511
  %v2513 = vadd.f32 %v2509, %v2512
  %vm2514 = vweird.f32 %v2337
  %vm2515 = vweird.f32 %v2509
  %vm2516 = vmor %vm2514, %vm2515
  %v2517 = vsel %vm2516, %v2509, %v2513
  %v2518 = vand.u32 2147483647, %v2337
  %vm2519 = vcmp.eq.f32.partialorder %v2518, 8.507059e+37
  %v2520 = vand.u32 %v2337, 2147483648
  %v2521 = vor.u32 1.1754944e-38, %v2520
  %v2522 = vsel %vm2519, %v2521, %v2517
  %v2523 = vmul.f32 1.0, %v2522
  %v2524 = vrcp.pop %v2338
  %v2525 = vmul.f32 %v2338, %v2524
  %v2526 = vsub.f32 1.0, %v2525
  %v2527 = vmul.f32 %v2524, %v2526
  %v2528 = vadd.f32 %v2524, %v2527
  %vm2529 = vweird.f32 %v2338
  %vm2530 = vweird.f32 %v2524
  %vm2531 = vmor %vm2529, %vm2530
  %v2532 = vsel %vm2531, %v2524, %v2528
  %v2533 = vand.u32 2147483647, %v2338
  %vm2534 = vcmp.eq.f32.partialorder %v2533, 8.507059e+37
  %v2535 = vand.u32 %v2338, 2147483648
  %v2536 = vor.u32 1.1754944e-38, %v2535
  %v2537 = vsel %vm2534, %v2536, %v2532
  %v2538 = vmul.f32 1.0, %v2537
  %v2539 = vrcp.pop %v2339
  %v2540 = vmul.f32 %v2339, %v2539
  %v2541 = vsub.f32 1.0, %v2540
  %v2542 = vmul.f32 %v2539, %v2541
  %v2543 = vadd.f32 %v2539, %v2542
  %vm2544 = vweird.f32 %v2339
  %vm2545 = vweird.f32 %v2539
  %vm2546 = vmor %vm2544, %vm2545
  %v2547 = vsel %vm2546, %v2539, %v2543
  %v2548 = vand.u32 2147483647, %v2339
  %vm2549 = vcmp.eq.f32.partialorder %v2548, 8.507059e+37
  %v2550 = vand.u32 %v2339, 2147483648
  %v2551 = vor.u32 1.1754944e-38, %v2550
  %v2552 = vsel %vm2549, %v2551, %v2547
  %v2553 = vmul.f32 1.0, %v2552
  %v2554 = vrcp.pop %v2340
  %v2555 = vmul.f32 %v2340, %v2554
  %v2556 = vsub.f32 1.0, %v2555
  %v2557 = vmul.f32 %v2554, %v2556
  %v2558 = vadd.f32 %v2554, %v2557
  %vm2559 = vweird.f32 %v2340
  %vm2560 = vweird.f32 %v2554
  %vm2561 = vmor %vm2559, %vm2560
  %v2562 = vsel %vm2561, %v2554, %v2558
  %v2563 = vand.u32 2147483647, %v2340
  %vm2564 = vcmp.eq.f32.partialorder %v2563, 8.507059e+37
  %v2565 = vand.u32 %v2340, 2147483648
  %v2566 = vor.u32 1.1754944e-38, %v2565
  %v2567 = vsel %vm2564, %v2566, %v2562
  %v2568 = vmul.f32 1.0, %v2567
  %v2569 = vrcp.pop %v2341
  %v2570 = vmul.f32 %v2341, %v2569
  %v2571 = vsub.f32 1.0, %v2570
  %v2572 = vmul.f32 %v2569, %v2571
  %v2573 = vadd.f32 %v2569, %v2572
  %vm2574 = vweird.f32 %v2341
  %vm2575 = vweird.f32 %v2569
  %vm2576 = vmor %vm2574, %vm2575
  %v2577 = vsel %vm2576, %v2569, %v2573
  %v2578 = vand.u32 2147483647, %v2341
  %vm2579 = vcmp.eq.f32.partialorder %v2578, 8.507059e+37
  %v2580 = vand.u32 %v2341, 2147483648
  %v2581 = vor.u32 1.1754944e-38, %v2580
  %v2582 = vsel %vm2579, %v2581, %v2577
  %v2583 = vmul.f32 1.0, %v2582
  %v2584 = vrcp.pop %v2342
  %v2585 = vmul.f32 %v2342, %v2584
  %v2586 = vsub.f32 1.0, %v2585
  %v2587 = vmul.f32 %v2584, %v2586
  %v2588 = vadd.f32 %v2584, %v2587
  %vm2589 = vweird.f32 %v2342
  %vm2590 = vweird.f32 %v2584
  %vm2591 = vmor %vm2589, %vm2590
  %v2592 = vsel %vm2591, %v2584, %v2588
  %v2593 = vand.u32 2147483647, %v2342
  %vm2594 = vcmp.eq.f32.partialorder %v2593, 8.507059e+37
  %v2595 = vand.u32 %v2342, 2147483648
  %v2596 = vor.u32 1.1754944e-38, %v2595
  %v2597 = vsel %vm2594, %v2596, %v2592
  %v2598 = vmul.f32 1.0, %v2597
  %v2599 = vrcp.pop %v2343
  %v2600 = vmul.f32 %v2343, %v2599
  %v2601 = vsub.f32 1.0, %v2600
  %v2602 = vmul.f32 %v2599, %v2601
  %v2603 = vadd.f32 %v2599, %v2602
  %vm2604 = vweird.f32 %v2343
  %vm2605 = vweird.f32 %v2599
  %vm2606 = vmor %vm2604, %vm2605
  %v2607 = vsel %vm2606, %v2599, %v2603
  %v2608 = vand.u32 2147483647, %v2343
  %vm2609 = vcmp.eq.f32.partialorder %v2608, 8.507059e+37
  %v2610 = vand.u32 %v2343, 2147483648
  %v2611 = vor.u32 1.1754944e-38, %v2610
  %v2612 = vsel %vm2609, %v2611, %v2607
  %v2613 = vmul.f32 1.0, %v2612
  %v2614 = vrcp.pop %v2344
  %v2615 = vmul.f32 %v2344, %v2614
  %v2616 = vsub.f32 1.0, %v2615
  %v2617 = vmul.f32 %v2614, %v2616
  %v2618 = vadd.f32 %v2614, %v2617
  %vm2619 = vweird.f32 %v2344
  %vm2620 = vweird.f32 %v2614
  %vm2621 = vmor %vm2619, %vm2620
  %v2622 = vsel %vm2621, %v2614, %v2618
  %v2623 = vand.u32 2147483647, %v2344
  %vm2624 = vcmp.eq.f32.partialorder %v2623, 8.507059e+37
  %v2625 = vand.u32 %v2344, 2147483648
  %v2626 = vor.u32 1.1754944e-38, %v2625
  %v2627 = vsel %vm2624, %v2626, %v2622
  %v2628 = vmul.f32 1.0, %v2627
  %v2629 = vrcp.pop %v2345
  %v2630 = vmul.f32 %v2345, %v2629
  %v2631 = vsub.f32 1.0, %v2630
  %v2632 = vmul.f32 %v2629, %v2631
  %v2633 = vadd.f32 %v2629, %v2632
  %vm2634 = vweird.f32 %v2345
  %vm2635 = vweird.f32 %v2629
  %vm2636 = vmor %vm2634, %vm2635
  %v2637 = vsel %vm2636, %v2629, %v2633
  %v2638 = vand.u32 2147483647, %v2345
  %vm2639 = vcmp.eq.f32.partialorder %v2638, 8.507059e+37
  %v2640 = vand.u32 %v2345, 2147483648
  %v2641 = vor.u32 1.1754944e-38, %v2640
  %v2642 = vsel %vm2639, %v2641, %v2637
  %v2643 = vmul.f32 1.0, %v2642
  %v2644 = vrcp.pop %v2346
  %v2645 = vmul.f32 %v2346, %v2644
  %v2646 = vsub.f32 1.0, %v2645
  %v2647 = vmul.f32 %v2644, %v2646
  %v2648 = vadd.f32 %v2644, %v2647
  %vm2649 = vweird.f32 %v2346
  %vm2650 = vweird.f32 %v2644
  %vm2651 = vmor %vm2649, %vm2650
  %v2652 = vsel %vm2651, %v2644, %v2648
  %v2653 = vand.u32 2147483647, %v2346
  %vm2654 = vcmp.eq.f32.partialorder %v2653, 8.507059e+37
  %v2655 = vand.u32 %v2346, 2147483648
  %v2656 = vor.u32 1.1754944e-38, %v2655
  %v2657 = vsel %vm2654, %v2656, %v2652
  %v2658 = vmul.f32 1.0, %v2657
  %v2659 = vrcp.pop %v2347
  %v2660 = vmul.f32 %v2347, %v2659
  %v2661 = vsub.f32 1.0, %v2660
  %v2662 = vmul.f32 %v2659, %v2661
  %v2663 = vadd.f32 %v2659, %v2662
  %vm2664 = vweird.f32 %v2347
  %vm2665 = vweird.f32 %v2659
  %vm2666 = vmor %vm2664, %vm2665
  %v2667 = vsel %vm2666, %v2659, %v2663
  %v2668 = vand.u32 2147483647, %v2347
  %vm2669 = vcmp.eq.f32.partialorder %v2668, 8.507059e+37
  %v2670 = vand.u32 %v2347, 2147483648
  %v2671 = vor.u32 1.1754944e-38, %v2670
  %v2672 = vsel %vm2669, %v2671, %v2667
  %v2673 = vmul.f32 1.0, %v2672
  %v2674 = vrcp.pop %v2348
  %v2675 = vmul.f32 %v2348, %v2674
  %v2676 = vsub.f32 1.0, %v2675
  %v2677 = vmul.f32 %v2674, %v2676
  %v2678 = vadd.f32 %v2674, %v2677
  %vm2679 = vweird.f32 %v2348
  %vm2680 = vweird.f32 %v2674
  %vm2681 = vmor %vm2679, %vm2680
  %v2682 = vsel %vm2681, %v2674, %v2678
  %v2683 = vand.u32 2147483647, %v2348
  %vm2684 = vcmp.eq.f32.partialorder %v2683, 8.507059e+37
  %v2685 = vand.u32 %v2348, 2147483648
  %v2686 = vor.u32 1.1754944e-38, %v2685
  %v2687 = vsel %vm2684, %v2686, %v2682
  %v2688 = vmul.f32 1.0, %v2687
  %v2689 = vrcp.pop %v2349
  %v2690 = vmul.f32 %v2349, %v2689
  %v2691 = vsub.f32 1.0, %v2690
  %v2692 = vmul.f32 %v2689, %v2691
  %v2693 = vadd.f32 %v2689, %v2692
  %vm2694 = vweird.f32 %v2349
  %vm2695 = vweird.f32 %v2689
  %vm2696 = vmor %vm2694, %vm2695
  %v2697 = vsel %vm2696, %v2689, %v2693
  %v2698 = vand.u32 2147483647, %v2349
  %vm2699 = vcmp.eq.f32.partialorder %v2698, 8.507059e+37
  %v2700 = vand.u32 %v2349, 2147483648
  %v2701 = vor.u32 1.1754944e-38, %v2700
  %v2702 = vsel %vm2699, %v2701, %v2697
  %v2703 = vmul.f32 1.0, %v2702
  %v2704 = vrcp.pop %v2350
  %v2705 = vmul.f32 %v2350, %v2704
  %v2706 = vsub.f32 1.0, %v2705
  %v2707 = vmul.f32 %v2704, %v2706
  %v2708 = vadd.f32 %v2704, %v2707
  %vm2709 = vweird.f32 %v2350
  %vm2710 = vweird.f32 %v2704
  %vm2711 = vmor %vm2709, %vm2710
  %v2712 = vsel %vm2711, %v2704, %v2708
  %v2713 = vand.u32 2147483647, %v2350
  %vm2714 = vcmp.eq.f32.partialorder %v2713, 8.507059e+37
  %v2715 = vand.u32 %v2350, 2147483648
  %v2716 = vor.u32 1.1754944e-38, %v2715
  %v2717 = vsel %vm2714, %v2716, %v2712
  %v2718 = vmul.f32 1.0, %v2717
  %v2719 = vrcp.pop %v2351
  %v2720 = vmul.f32 %v2351, %v2719
  %v2721 = vsub.f32 1.0, %v2720
  %v2722 = vmul.f32 %v2719, %v2721
  %v2723 = vadd.f32 %v2719, %v2722
  %vm2724 = vweird.f32 %v2351
  %vm2725 = vweird.f32 %v2719
  %vm2726 = vmor %vm2724, %vm2725
  %v2727 = vsel %vm2726, %v2719, %v2723
  %v2728 = vand.u32 2147483647, %v2351
  %vm2729 = vcmp.eq.f32.partialorder %v2728, 8.507059e+37
  %v2730 = vand.u32 %v2351, 2147483648
  %v2731 = vor.u32 1.1754944e-38, %v2730
  %v2732 = vsel %vm2729, %v2731, %v2727
  %v2733 = vmul.f32 1.0, %v2732
  %v2734 = vrcp.pop %v2352
  %v2735 = vmul.f32 %v2352, %v2734
  %v2736 = vsub.f32 1.0, %v2735
  %v2737 = vmul.f32 %v2734, %v2736
  %v2738 = vadd.f32 %v2734, %v2737
  %vm2739 = vweird.f32 %v2352
  %vm2740 = vweird.f32 %v2734
  %vm2741 = vmor %vm2739, %vm2740
  %v2742 = vsel %vm2741, %v2734, %v2738
  %v2743 = vand.u32 2147483647, %v2352
  %vm2744 = vcmp.eq.f32.partialorder %v2743, 8.507059e+37
  %v2745 = vand.u32 %v2352, 2147483648
  %v2746 = vor.u32 1.1754944e-38, %v2745
  %v2747 = vsel %vm2744, %v2746, %v2742
  %v2748 = vmul.f32 1.0, %v2747
  %v2749 = vrcp.pop %v2353
  %v2750 = vmul.f32 %v2353, %v2749
  %v2751 = vsub.f32 1.0, %v2750
  %v2752 = vmul.f32 %v2749, %v2751
  %v2753 = vadd.f32 %v2749, %v2752
  %vm2754 = vweird.f32 %v2353
  %vm2755 = vweird.f32 %v2749
  %vm2756 = vmor %vm2754, %vm2755
  %v2757 = vsel %vm2756, %v2749, %v2753
  %v2758 = vand.u32 2147483647, %v2353
  %vm2759 = vcmp.eq.f32.partialorder %v2758, 8.507059e+37
  %v2760 = vand.u32 %v2353, 2147483648
  %v2761 = vor.u32 1.1754944e-38, %v2760
  %v2762 = vsel %vm2759, %v2761, %v2757
  %v2763 = vmul.f32 1.0, %v2762
  %v2764 = vrcp.pop %v2354
  %v2765 = vmul.f32 %v2354, %v2764
  %v2766 = vsub.f32 1.0, %v2765
  %v2767 = vmul.f32 %v2764, %v2766
  %v2768 = vadd.f32 %v2764, %v2767
  %vm2769 = vweird.f32 %v2354
  %vm2770 = vweird.f32 %v2764
  %vm2771 = vmor %vm2769, %vm2770
  %v2772 = vsel %vm2771, %v2764, %v2768
  %v2773 = vand.u32 2147483647, %v2354
  %vm2774 = vcmp.eq.f32.partialorder %v2773, 8.507059e+37
  %v2775 = vand.u32 %v2354, 2147483648
  %v2776 = vor.u32 1.1754944e-38, %v2775
  %v2777 = vsel %vm2774, %v2776, %v2772
  %v2778 = vmul.f32 1.0, %v2777
  %v2779 = vrcp.pop %v2355
  %v2780 = vmul.f32 %v2355, %v2779
  %v2781 = vsub.f32 1.0, %v2780
  %v2782 = vmul.f32 %v2779, %v2781
  %v2783 = vadd.f32 %v2779, %v2782
  %vm2784 = vweird.f32 %v2355
  %vm2785 = vweird.f32 %v2779
  %vm2786 = vmor %vm2784, %vm2785
  %v2787 = vsel %vm2786, %v2779, %v2783
  %v2788 = vand.u32 2147483647, %v2355
  %vm2789 = vcmp.eq.f32.partialorder %v2788, 8.507059e+37
  %v2790 = vand.u32 %v2355, 2147483648
  %v2791 = vor.u32 1.1754944e-38, %v2790
  %v2792 = vsel %vm2789, %v2791, %v2787
  %v2793 = vmul.f32 1.0, %v2792
  %v2794 = vrcp.pop %v2356
  %v2795 = vmul.f32 %v2356, %v2794
  %v2796 = vsub.f32 1.0, %v2795
  %v2797 = vmul.f32 %v2794, %v2796
  %v2798 = vadd.f32 %v2794, %v2797
  %vm2799 = vweird.f32 %v2356
  %vm2800 = vweird.f32 %v2794
  %vm2801 = vmor %vm2799, %vm2800
  %v2802 = vsel %vm2801, %v2794, %v2798
  %v2803 = vand.u32 2147483647, %v2356
  %vm2804 = vcmp.eq.f32.partialorder %v2803, 8.507059e+37
  %v2805 = vand.u32 %v2356, 2147483648
  %v2806 = vor.u32 1.1754944e-38, %v2805
  %v2807 = vsel %vm2804, %v2806, %v2802
  %v2808 = vmul.f32 1.0, %v2807
  %v2809 = vrcp.pop %v2357
  %v2810 = vmul.f32 %v2357, %v2809
  %v2811 = vsub.f32 1.0, %v2810
  %v2812 = vmul.f32 %v2809, %v2811
  %v2813 = vadd.f32 %v2809, %v2812
  %vm2814 = vweird.f32 %v2357
  %vm2815 = vweird.f32 %v2809
  %vm2816 = vmor %vm2814, %vm2815
  %v2817 = vsel %vm2816, %v2809, %v2813
  %v2818 = vand.u32 2147483647, %v2357
  %vm2819 = vcmp.eq.f32.partialorder %v2818, 8.507059e+37
  %v2820 = vand.u32 %v2357, 2147483648
  %v2821 = vor.u32 1.1754944e-38, %v2820
  %v2822 = vsel %vm2819, %v2821, %v2817
  %v2823 = vmul.f32 1.0, %v2822
  %v2824 = vrcp.pop %v2358
  %v2825 = vmul.f32 %v2358, %v2824
  %v2826 = vsub.f32 1.0, %v2825
  %v2827 = vmul.f32 %v2824, %v2826
  %v2828 = vadd.f32 %v2824, %v2827
  %vm2829 = vweird.f32 %v2358
  %vm2830 = vweird.f32 %v2824
  %vm2831 = vmor %vm2829, %vm2830
  %v2832 = vsel %vm2831, %v2824, %v2828
  %v2833 = vand.u32 2147483647, %v2358
  %vm2834 = vcmp.eq.f32.partialorder %v2833, 8.507059e+37
  %v2835 = vand.u32 %v2358, 2147483648
  %v2836 = vor.u32 1.1754944e-38, %v2835
  %v2837 = vsel %vm2834, %v2836, %v2832
  %v2838 = vmul.f32 1.0, %v2837
  %v2839 = vmul.f32 %v2089, %v2373
  %v2840 = vmul.f32 %v2108, %v2388
  %v2841 = vmul.f32 %v2127, %v2403
  %v2842 = vmul.f32 %v2146, %v2418
  %v2843 = vmul.f32 %v2165, %v2433
  %v2844 = vmul.f32 %v2184, %v2448
  %v2845 = vmul.f32 %v2203, %v2463
  %v2846 = vmul.f32 %v2222, %v2478
  %v2847 = vmul.f32 %v2091, %v2493
  %v2848 = vmul.f32 %v2110, %v2508
  %v2849 = vmul.f32 %v2129, %v2523
  %v2850 = vmul.f32 %v2148, %v2538
  %v2851 = vmul.f32 %v2167, %v2553
  %v2852 = vmul.f32 %v2186, %v2568
  %v2853 = vmul.f32 %v2205, %v2583
  %v2854 = vmul.f32 %v2224, %v2598
  %v2855 = vmul.f32 %v2094, %v2613
  %v2856 = vmul.f32 %v2113, %v2628
  %v2857 = vmul.f32 %v2132, %v2643
  %v2858 = vmul.f32 %v2151, %v2658
  %v2859 = vmul.f32 %v2170, %v2673
  %v2860 = vmul.f32 %v2189, %v2688
  %v2861 = vmul.f32 %v2208, %v2703
  %v2862 = vmul.f32 %v2227, %v2718
  %v2863 = vmul.f32 %v2096, %v2733
  %v2864 = vmul.f32 %v2115, %v2748
  %v2865 = vmul.f32 %v2134, %v2763
  %v2866 = vmul.f32 %v2153, %v2778
  %v2867 = vmul.f32 %v2172, %v2793
  %v2868 = vmul.f32 %v2191, %v2808
  %v2869 = vmul.f32 %v2210, %v2823
  %v2870 = vmul.f32 %v2229, %v2838
  %s2871 = scalar_lea.vmem %s3, 48
  %v2872 = vld [vmem:[%s2871] sm:$0xf]
  %v2873 = vld [vmem:[%s2871 + $0x4] sm:$0xf]
  %v2874 = vld [vmem:[%s2871 + $0x8] sm:$0xf]
  %v2875 = vld [vmem:[%s2871 + $0xc] sm:$0xf]
  %s2876 = scalar_lea.vmem %s4, 96
  %v2877 = vld [vmem:[%s2876] sm:$0xff]
  %v2878 = vld [vmem:[%s2876 + $0x8] sm:$0xff]
  %v2879 = vld [vmem:[%s2876 + $0x10] sm:$0xff]
  %v2880 = vld [vmem:[%s2876 + $0x18] sm:$0xff]
  %v2881 = vpack.c.bf16 %v2847, %v2839
  %v2882 = vpack.c.bf16 %v2848, %v2840
  %v2883 = vpack.c.bf16 %v2849, %v2841
  %v2884 = vpack.c.bf16 %v2850, %v2842
  %v2885 = vpack.c.bf16 %v2851, %v2843
  %v2886 = vpack.c.bf16 %v2852, %v2844
  %v2887 = vpack.c.bf16 %v2853, %v2845
  %v2888 = vpack.c.bf16 %v2854, %v2846
  %v2889 = vpack.c.bf16 %v2863, %v2855
  %v2890 = vpack.c.bf16 %v2864, %v2856
  %v2891 = vpack.c.bf16 %v2865, %v2857
  %v2892 = vpack.c.bf16 %v2866, %v2858
  %v2893 = vpack.c.bf16 %v2867, %v2859
  %v2894 = vpack.c.bf16 %v2868, %v2860
  %v2895 = vpack.c.bf16 %v2869, %v2861
  %v2896 = vpack.c.bf16 %v2870, %v2862
  %2898 = vset.pattern.permute.xlu0 0
  %2899 = vperm.xlu0 %2898, %v2877
  %v2900 = vpop.permute.xlu0 %2899
  %2903 = vset.pattern.permute.xlu0 0
  %2904 = vperm.xlu0 %2903, %v2878
  %v2905 = vpop.permute.xlu0 %2904
  %2908 = vset.pattern.permute.xlu0 0
  %2909 = vperm.xlu0 %2908, %v2879
  %v2910 = vpop.permute.xlu0 %2909
  %2913 = vset.pattern.permute.xlu0 0
  %2914 = vperm.xlu0 %2913, %v2880
  %v2915 = vpop.permute.xlu0 %2914
  %v2921 = vunpack.c.l.b16 %v2872
  %v2922 = vunpack.c.l.b16 %v2873
  %v2923 = vunpack.c.l.b16 %v2874
  %v2924 = vunpack.c.l.b16 %v2875
  %v2925 = vpack.c.b16 %v2922, %v2921
  %v2926 = vpack.c.b16 %v2924, %v2923
  %v2928 = vsel %vm332, %v2925, 0
  %v2931 = vsel %vm332, %v2926, 0
  %2933 = vmatpush.bf16.msra.mxu0 0
  %2934 = vmatpush.bf16.msra.mxu0 0
  %2935 = vmatpush.bf16.msra.mxu0 0
  %2936 = vmatpush.bf16.msra.mxu0 0
  %2937 = vmatpush.bf16.msra.mxu0 0
  %2938 = vmatpush.bf16.msra.mxu0 0
  %2939 = vmatpush.bf16.msra.mxu0 %v2889
  %2940 = vmatpush.bf16.msra.mxu0 %v2881
  %2941 = vmatmul.bf16.gmra.mxu0 %v2928
  %v2942 = vpop.f32.mrf.mxu0
  %v2943 = vadd.f32 %v2900, %v2942
  %v2944 = vpop.f32.mrf.mxu0
  %v2945 = vadd.f32 %v2905, %v2944
  %2946 = vmatmul.bf16.gmra.mxu0 %v2931
  %v2947 = vpop.f32.mrf.mxu0
  %v2948 = vadd.f32 %v2910, %v2947
  %v2949 = vpop.f32.mrf.mxu0
  %v2950 = vadd.f32 %v2915, %v2949
  %2951 = vdwg.mxu0
  %2952 = vmatpush.bf16.msra.mxu0 0
  %2953 = vmatpush.bf16.msra.mxu0 0
  %2954 = vmatpush.bf16.msra.mxu0 0
  %2955 = vmatpush.bf16.msra.mxu0 0
  %2956 = vmatpush.bf16.msra.mxu0 0
  %2957 = vmatpush.bf16.msra.mxu0 0
  %2958 = vmatpush.bf16.msra.mxu0 %v2890
  %2959 = vmatpush.bf16.msra.mxu0 %v2882
  %2960 = vmatmul.bf16.gmra.mxu0 %v2928
  %v2961 = vpop.f32.mrf.mxu0
  %v2962 = vadd.f32 %v2900, %v2961
  %v2963 = vpop.f32.mrf.mxu0
  %v2964 = vadd.f32 %v2905, %v2963
  %2965 = vmatmul.bf16.gmra.mxu0 %v2931
  %v2966 = vpop.f32.mrf.mxu0
  %v2967 = vadd.f32 %v2910, %v2966
  %v2968 = vpop.f32.mrf.mxu0
  %v2969 = vadd.f32 %v2915, %v2968
  %2970 = vdwg.mxu0
  %2971 = vmatpush.bf16.msra.mxu0 0
  %2972 = vmatpush.bf16.msra.mxu0 0
  %2973 = vmatpush.bf16.msra.mxu0 0
  %2974 = vmatpush.bf16.msra.mxu0 0
  %2975 = vmatpush.bf16.msra.mxu0 0
  %2976 = vmatpush.bf16.msra.mxu0 0
  %2977 = vmatpush.bf16.msra.mxu0 %v2891
  %2978 = vmatpush.bf16.msra.mxu0 %v2883
  %2979 = vmatmul.bf16.gmra.mxu0 %v2928
  %v2980 = vpop.f32.mrf.mxu0
  %v2981 = vadd.f32 %v2900, %v2980
  %v2982 = vpop.f32.mrf.mxu0
  %v2983 = vadd.f32 %v2905, %v2982
  %2984 = vmatmul.bf16.gmra.mxu0 %v2931
  %v2985 = vpop.f32.mrf.mxu0
  %v2986 = vadd.f32 %v2910, %v2985
  %v2987 = vpop.f32.mrf.mxu0
  %v2988 = vadd.f32 %v2915, %v2987
  %2989 = vdwg.mxu0
  %2990 = vmatpush.bf16.msra.mxu0 0
  %2991 = vmatpush.bf16.msra.mxu0 0
  %2992 = vmatpush.bf16.msra.mxu0 0
  %2993 = vmatpush.bf16.msra.mxu0 0
  %2994 = vmatpush.bf16.msra.mxu0 0
  %2995 = vmatpush.bf16.msra.mxu0 0
  %2996 = vmatpush.bf16.msra.mxu0 %v2892
  %2997 = vmatpush.bf16.msra.mxu0 %v2884
  %2998 = vmatmul.bf16.gmra.mxu0 %v2928
  %v2999 = vpop.f32.mrf.mxu0
  %v3000 = vadd.f32 %v2900, %v2999
  %v3001 = vpop.f32.mrf.mxu0
  %v3002 = vadd.f32 %v2905, %v3001
  %3003 = vmatmul.bf16.gmra.mxu0 %v2931
  %v3004 = vpop.f32.mrf.mxu0
  %v3005 = vadd.f32 %v2910, %v3004
  %v3006 = vpop.f32.mrf.mxu0
  %v3007 = vadd.f32 %v2915, %v3006
  %3008 = vdwg.mxu0
  %3009 = vmatpush.bf16.msra.mxu0 0
  %3010 = vmatpush.bf16.msra.mxu0 0
  %3011 = vmatpush.bf16.msra.mxu0 0
  %3012 = vmatpush.bf16.msra.mxu0 0
  %3013 = vmatpush.bf16.msra.mxu0 0
  %3014 = vmatpush.bf16.msra.mxu0 0
  %3015 = vmatpush.bf16.msra.mxu0 %v2893
  %3016 = vmatpush.bf16.msra.mxu0 %v2885
  %3017 = vmatmul.bf16.gmra.mxu0 %v2928
  %v3018 = vpop.f32.mrf.mxu0
  %v3019 = vadd.f32 %v2900, %v3018
  %v3020 = vpop.f32.mrf.mxu0
  %v3021 = vadd.f32 %v2905, %v3020
  %3022 = vmatmul.bf16.gmra.mxu0 %v2931
  %v3023 = vpop.f32.mrf.mxu0
  %v3024 = vadd.f32 %v2910, %v3023
  %v3025 = vpop.f32.mrf.mxu0
  %v3026 = vadd.f32 %v2915, %v3025
  %3027 = vdwg.mxu0
  %3028 = vmatpush.bf16.msra.mxu0 0
  %3029 = vmatpush.bf16.msra.mxu0 0
  %3030 = vmatpush.bf16.msra.mxu0 0
  %3031 = vmatpush.bf16.msra.mxu0 0
  %3032 = vmatpush.bf16.msra.mxu0 0
  %3033 = vmatpush.bf16.msra.mxu0 0
  %3034 = vmatpush.bf16.msra.mxu0 %v2894
  %3035 = vmatpush.bf16.msra.mxu0 %v2886
  %3036 = vmatmul.bf16.gmra.mxu0 %v2928
  %v3037 = vpop.f32.mrf.mxu0
  %v3038 = vadd.f32 %v2900, %v3037
  %v3039 = vpop.f32.mrf.mxu0
  %v3040 = vadd.f32 %v2905, %v3039
  %3041 = vmatmul.bf16.gmra.mxu0 %v2931
  %v3042 = vpop.f32.mrf.mxu0
  %v3043 = vadd.f32 %v2910, %v3042
  %v3044 = vpop.f32.mrf.mxu0
  %v3045 = vadd.f32 %v2915, %v3044
  %3046 = vdwg.mxu0
  %3047 = vmatpush.bf16.msra.mxu0 0
  %3048 = vmatpush.bf16.msra.mxu0 0
  %3049 = vmatpush.bf16.msra.mxu0 0
  %3050 = vmatpush.bf16.msra.mxu0 0
  %3051 = vmatpush.bf16.msra.mxu0 0
  %3052 = vmatpush.bf16.msra.mxu0 0
  %3053 = vmatpush.bf16.msra.mxu0 %v2895
  %3054 = vmatpush.bf16.msra.mxu0 %v2887
  %3055 = vmatmul.bf16.gmra.mxu0 %v2928
  %v3056 = vpop.f32.mrf.mxu0
  %v3057 = vadd.f32 %v2900, %v3056
  %v3058 = vpop.f32.mrf.mxu0
  %v3059 = vadd.f32 %v2905, %v3058
  %3060 = vmatmul.bf16.gmra.mxu0 %v2931
  %v3061 = vpop.f32.mrf.mxu0
  %v3062 = vadd.f32 %v2910, %v3061
  %v3063 = vpop.f32.mrf.mxu0
  %v3064 = vadd.f32 %v2915, %v3063
  %3065 = vdwg.mxu0
  %3066 = vmatpush.bf16.msra.mxu0 0
  %3067 = vmatpush.bf16.msra.mxu0 0
  %3068 = vmatpush.bf16.msra.mxu0 0
  %3069 = vmatpush.bf16.msra.mxu0 0
  %3070 = vmatpush.bf16.msra.mxu0 0
  %3071 = vmatpush.bf16.msra.mxu0 0
  %3072 = vmatpush.bf16.msra.mxu0 %v2896
  %3073 = vmatpush.bf16.msra.mxu0 %v2888
  %3074 = vmatmul.bf16.gmra.mxu0 %v2928
  %v3075 = vpop.f32.mrf.mxu0
  %v3076 = vadd.f32 %v2900, %v3075
  %v3077 = vpop.f32.mrf.mxu0
  %v3078 = vadd.f32 %v2905, %v3077
  %3079 = vmatmul.bf16.gmra.mxu0 %v2931
  %v3080 = vpop.f32.mrf.mxu0
  %v3081 = vadd.f32 %v2910, %v3080
  %v3082 = vpop.f32.mrf.mxu0
  %v3083 = vadd.f32 %v2915, %v3082
  %3084 = vdwg.mxu0
  %v3085 = vxor.u32 %v2943, 2147483648
  %v3086 = vxor.u32 %v2962, 2147483648
  %v3087 = vxor.u32 %v2981, 2147483648
  %v3088 = vxor.u32 %v3000, 2147483648
  %v3089 = vxor.u32 %v3019, 2147483648
  %v3090 = vxor.u32 %v3038, 2147483648
  %v3091 = vxor.u32 %v3057, 2147483648
  %v3092 = vxor.u32 %v3076, 2147483648
  %v3093 = vxor.u32 %v2945, 2147483648
  %v3094 = vxor.u32 %v2964, 2147483648
  %v3095 = vxor.u32 %v2983, 2147483648
  %v3096 = vxor.u32 %v3002, 2147483648
  %v3097 = vxor.u32 %v3021, 2147483648
  %v3098 = vxor.u32 %v3040, 2147483648
  %v3099 = vxor.u32 %v3059, 2147483648
  %v3100 = vxor.u32 %v3078, 2147483648
  %v3101 = vxor.u32 %v2948, 2147483648
  %v3102 = vxor.u32 %v2967, 2147483648
  %v3103 = vxor.u32 %v2986, 2147483648
  %v3104 = vxor.u32 %v3005, 2147483648
  %v3105 = vxor.u32 %v3024, 2147483648
  %v3106 = vxor.u32 %v3043, 2147483648
  %v3107 = vxor.u32 %v3062, 2147483648
  %v3108 = vxor.u32 %v3081, 2147483648
  %v3109 = vxor.u32 %v2950, 2147483648
  %v3110 = vxor.u32 %v2969, 2147483648
  %v3111 = vxor.u32 %v2988, 2147483648
  %v3112 = vxor.u32 %v3007, 2147483648
  %v3113 = vxor.u32 %v3026, 2147483648
  %v3114 = vxor.u32 %v3045, 2147483648
  %v3115 = vxor.u32 %v3064, 2147483648
  %v3116 = vxor.u32 %v3083, 2147483648
  %v3117 = vmul.f32 %v3085, 1.442695
  %v3118 = vpow.pop %v3117
  %v3119 = vmul.f32 %v3086, 1.442695
  %v3120 = vpow.pop %v3119
  %v3121 = vmul.f32 %v3087, 1.442695
  %v3122 = vpow.pop %v3121
  %v3123 = vmul.f32 %v3088, 1.442695
  %v3124 = vpow.pop %v3123
  %v3125 = vmul.f32 %v3089, 1.442695
  %v3126 = vpow.pop %v3125
  %v3127 = vmul.f32 %v3090, 1.442695
  %v3128 = vpow.pop %v3127
  %v3129 = vmul.f32 %v3091, 1.442695
  %v3130 = vpow.pop %v3129
  %v3131 = vmul.f32 %v3092, 1.442695
  %v3132 = vpow.pop %v3131
  %v3133 = vmul.f32 %v3093, 1.442695
  %v3134 = vpow.pop %v3133
  %v3135 = vmul.f32 %v3094, 1.442695
  %v3136 = vpow.pop %v3135
  %v3137 = vmul.f32 %v3095, 1.442695
  %v3138 = vpow.pop %v3137
  %v3139 = vmul.f32 %v3096, 1.442695
  %v3140 = vpow.pop %v3139
  %v3141 = vmul.f32 %v3097, 1.442695
  %v3142 = vpow.pop %v3141
  %v3143 = vmul.f32 %v3098, 1.442695
  %v3144 = vpow.pop %v3143
  %v3145 = vmul.f32 %v3099, 1.442695
  %v3146 = vpow.pop %v3145
  %v3147 = vmul.f32 %v3100, 1.442695
  %v3148 = vpow.pop %v3147
  %v3149 = vmul.f32 %v3101, 1.442695
  %v3150 = vpow.pop %v3149
  %v3151 = vmul.f32 %v3102, 1.442695
  %v3152 = vpow.pop %v3151
  %v3153 = vmul.f32 %v3103, 1.442695
  %v3154 = vpow.pop %v3153
  %v3155 = vmul.f32 %v3104, 1.442695
  %v3156 = vpow.pop %v3155
  %v3157 = vmul.f32 %v3105, 1.442695
  %v3158 = vpow.pop %v3157
  %v3159 = vmul.f32 %v3106, 1.442695
  %v3160 = vpow.pop %v3159
  %v3161 = vmul.f32 %v3107, 1.442695
  %v3162 = vpow.pop %v3161
  %v3163 = vmul.f32 %v3108, 1.442695
  %v3164 = vpow.pop %v3163
  %v3165 = vmul.f32 %v3109, 1.442695
  %v3166 = vpow.pop %v3165
  %v3167 = vmul.f32 %v3110, 1.442695
  %v3168 = vpow.pop %v3167
  %v3169 = vmul.f32 %v3111, 1.442695
  %v3170 = vpow.pop %v3169
  %v3171 = vmul.f32 %v3112, 1.442695
  %v3172 = vpow.pop %v3171
  %v3173 = vmul.f32 %v3113, 1.442695
  %v3174 = vpow.pop %v3173
  %v3175 = vmul.f32 %v3114, 1.442695
  %v3176 = vpow.pop %v3175
  %v3177 = vmul.f32 %v3115, 1.442695
  %v3178 = vpow.pop %v3177
  %v3179 = vmul.f32 %v3116, 1.442695
  %v3180 = vpow.pop %v3179
  %v3181 = vadd.f32 %v3118, 1.0
  %v3182 = vadd.f32 %v3120, 1.0
  %v3183 = vadd.f32 %v3122, 1.0
  %v3184 = vadd.f32 %v3124, 1.0
  %v3185 = vadd.f32 %v3126, 1.0
  %v3186 = vadd.f32 %v3128, 1.0
  %v3187 = vadd.f32 %v3130, 1.0
  %v3188 = vadd.f32 %v3132, 1.0
  %v3189 = vadd.f32 %v3134, 1.0
  %v3190 = vadd.f32 %v3136, 1.0
  %v3191 = vadd.f32 %v3138, 1.0
  %v3192 = vadd.f32 %v3140, 1.0
  %v3193 = vadd.f32 %v3142, 1.0
  %v3194 = vadd.f32 %v3144, 1.0
  %v3195 = vadd.f32 %v3146, 1.0
  %v3196 = vadd.f32 %v3148, 1.0
  %v3197 = vadd.f32 %v3150, 1.0
  %v3198 = vadd.f32 %v3152, 1.0
  %v3199 = vadd.f32 %v3154, 1.0
  %v3200 = vadd.f32 %v3156, 1.0
  %v3201 = vadd.f32 %v3158, 1.0
  %v3202 = vadd.f32 %v3160, 1.0
  %v3203 = vadd.f32 %v3162, 1.0
  %v3204 = vadd.f32 %v3164, 1.0
  %v3205 = vadd.f32 %v3166, 1.0
  %v3206 = vadd.f32 %v3168, 1.0
  %v3207 = vadd.f32 %v3170, 1.0
  %v3208 = vadd.f32 %v3172, 1.0
  %v3209 = vadd.f32 %v3174, 1.0
  %v3210 = vadd.f32 %v3176, 1.0
  %v3211 = vadd.f32 %v3178, 1.0
  %v3212 = vadd.f32 %v3180, 1.0
  %v3213 = vrcp.pop %v3181
  %v3214 = vmul.f32 %v3181, %v3213
  %v3215 = vsub.f32 1.0, %v3214
  %v3216 = vmul.f32 %v3213, %v3215
  %v3217 = vadd.f32 %v3213, %v3216
  %vm3218 = vweird.f32 %v3181
  %vm3219 = vweird.f32 %v3213
  %vm3220 = vmor %vm3218, %vm3219
  %v3221 = vsel %vm3220, %v3213, %v3217
  %v3222 = vand.u32 2147483647, %v3181
  %vm3223 = vcmp.eq.f32.partialorder %v3222, 8.507059e+37
  %v3224 = vand.u32 %v3181, 2147483648
  %v3225 = vor.u32 1.1754944e-38, %v3224
  %v3226 = vsel %vm3223, %v3225, %v3221
  %v3227 = vmul.f32 1.0, %v3226
  %v3228 = vrcp.pop %v3182
  %v3229 = vmul.f32 %v3182, %v3228
  %v3230 = vsub.f32 1.0, %v3229
  %v3231 = vmul.f32 %v3228, %v3230
  %v3232 = vadd.f32 %v3228, %v3231
  %vm3233 = vweird.f32 %v3182
  %vm3234 = vweird.f32 %v3228
  %vm3235 = vmor %vm3233, %vm3234
  %v3236 = vsel %vm3235, %v3228, %v3232
  %v3237 = vand.u32 2147483647, %v3182
  %vm3238 = vcmp.eq.f32.partialorder %v3237, 8.507059e+37
  %v3239 = vand.u32 %v3182, 2147483648
  %v3240 = vor.u32 1.1754944e-38, %v3239
  %v3241 = vsel %vm3238, %v3240, %v3236
  %v3242 = vmul.f32 1.0, %v3241
  %v3243 = vrcp.pop %v3183
  %v3244 = vmul.f32 %v3183, %v3243
  %v3245 = vsub.f32 1.0, %v3244
  %v3246 = vmul.f32 %v3243, %v3245
  %v3247 = vadd.f32 %v3243, %v3246
  %vm3248 = vweird.f32 %v3183
  %vm3249 = vweird.f32 %v3243
  %vm3250 = vmor %vm3248, %vm3249
  %v3251 = vsel %vm3250, %v3243, %v3247
  %v3252 = vand.u32 2147483647, %v3183
  %vm3253 = vcmp.eq.f32.partialorder %v3252, 8.507059e+37
  %v3254 = vand.u32 %v3183, 2147483648
  %v3255 = vor.u32 1.1754944e-38, %v3254
  %v3256 = vsel %vm3253, %v3255, %v3251
  %v3257 = vmul.f32 1.0, %v3256
  %v3258 = vrcp.pop %v3184
  %v3259 = vmul.f32 %v3184, %v3258
  %v3260 = vsub.f32 1.0, %v3259
  %v3261 = vmul.f32 %v3258, %v3260
  %v3262 = vadd.f32 %v3258, %v3261
  %vm3263 = vweird.f32 %v3184
  %vm3264 = vweird.f32 %v3258
  %vm3265 = vmor %vm3263, %vm3264
  %v3266 = vsel %vm3265, %v3258, %v3262
  %v3267 = vand.u32 2147483647, %v3184
  %vm3268 = vcmp.eq.f32.partialorder %v3267, 8.507059e+37
  %v3269 = vand.u32 %v3184, 2147483648
  %v3270 = vor.u32 1.1754944e-38, %v3269
  %v3271 = vsel %vm3268, %v3270, %v3266
  %v3272 = vmul.f32 1.0, %v3271
  %v3273 = vrcp.pop %v3185
  %v3274 = vmul.f32 %v3185, %v3273
  %v3275 = vsub.f32 1.0, %v3274
  %v3276 = vmul.f32 %v3273, %v3275
  %v3277 = vadd.f32 %v3273, %v3276
  %vm3278 = vweird.f32 %v3185
  %vm3279 = vweird.f32 %v3273
  %vm3280 = vmor %vm3278, %vm3279
  %v3281 = vsel %vm3280, %v3273, %v3277
  %v3282 = vand.u32 2147483647, %v3185
  %vm3283 = vcmp.eq.f32.partialorder %v3282, 8.507059e+37
  %v3284 = vand.u32 %v3185, 2147483648
  %v3285 = vor.u32 1.1754944e-38, %v3284
  %v3286 = vsel %vm3283, %v3285, %v3281
  %v3287 = vmul.f32 1.0, %v3286
  %v3288 = vrcp.pop %v3186
  %v3289 = vmul.f32 %v3186, %v3288
  %v3290 = vsub.f32 1.0, %v3289
  %v3291 = vmul.f32 %v3288, %v3290
  %v3292 = vadd.f32 %v3288, %v3291
  %vm3293 = vweird.f32 %v3186
  %vm3294 = vweird.f32 %v3288
  %vm3295 = vmor %vm3293, %vm3294
  %v3296 = vsel %vm3295, %v3288, %v3292
  %v3297 = vand.u32 2147483647, %v3186
  %vm3298 = vcmp.eq.f32.partialorder %v3297, 8.507059e+37
  %v3299 = vand.u32 %v3186, 2147483648
  %v3300 = vor.u32 1.1754944e-38, %v3299
  %v3301 = vsel %vm3298, %v3300, %v3296
  %v3302 = vmul.f32 1.0, %v3301
  %v3303 = vrcp.pop %v3187
  %v3304 = vmul.f32 %v3187, %v3303
  %v3305 = vsub.f32 1.0, %v3304
  %v3306 = vmul.f32 %v3303, %v3305
  %v3307 = vadd.f32 %v3303, %v3306
  %vm3308 = vweird.f32 %v3187
  %vm3309 = vweird.f32 %v3303
  %vm3310 = vmor %vm3308, %vm3309
  %v3311 = vsel %vm3310, %v3303, %v3307
  %v3312 = vand.u32 2147483647, %v3187
  %vm3313 = vcmp.eq.f32.partialorder %v3312, 8.507059e+37
  %v3314 = vand.u32 %v3187, 2147483648
  %v3315 = vor.u32 1.1754944e-38, %v3314
  %v3316 = vsel %vm3313, %v3315, %v3311
  %v3317 = vmul.f32 1.0, %v3316
  %v3318 = vrcp.pop %v3188
  %v3319 = vmul.f32 %v3188, %v3318
  %v3320 = vsub.f32 1.0, %v3319
  %v3321 = vmul.f32 %v3318, %v3320
  %v3322 = vadd.f32 %v3318, %v3321
  %vm3323 = vweird.f32 %v3188
  %vm3324 = vweird.f32 %v3318
  %vm3325 = vmor %vm3323, %vm3324
  %v3326 = vsel %vm3325, %v3318, %v3322
  %v3327 = vand.u32 2147483647, %v3188
  %vm3328 = vcmp.eq.f32.partialorder %v3327, 8.507059e+37
  %v3329 = vand.u32 %v3188, 2147483648
  %v3330 = vor.u32 1.1754944e-38, %v3329
  %v3331 = vsel %vm3328, %v3330, %v3326
  %v3332 = vmul.f32 1.0, %v3331
  %v3333 = vrcp.pop %v3189
  %v3334 = vmul.f32 %v3189, %v3333
  %v3335 = vsub.f32 1.0, %v3334
  %v3336 = vmul.f32 %v3333, %v3335
  %v3337 = vadd.f32 %v3333, %v3336
  %vm3338 = vweird.f32 %v3189
  %vm3339 = vweird.f32 %v3333
  %vm3340 = vmor %vm3338, %vm3339
  %v3341 = vsel %vm3340, %v3333, %v3337
  %v3342 = vand.u32 2147483647, %v3189
  %vm3343 = vcmp.eq.f32.partialorder %v3342, 8.507059e+37
  %v3344 = vand.u32 %v3189, 2147483648
  %v3345 = vor.u32 1.1754944e-38, %v3344
  %v3346 = vsel %vm3343, %v3345, %v3341
  %v3347 = vmul.f32 1.0, %v3346
  %v3348 = vrcp.pop %v3190
  %v3349 = vmul.f32 %v3190, %v3348
  %v3350 = vsub.f32 1.0, %v3349
  %v3351 = vmul.f32 %v3348, %v3350
  %v3352 = vadd.f32 %v3348, %v3351
  %vm3353 = vweird.f32 %v3190
  %vm3354 = vweird.f32 %v3348
  %vm3355 = vmor %vm3353, %vm3354
  %v3356 = vsel %vm3355, %v3348, %v3352
  %v3357 = vand.u32 2147483647, %v3190
  %vm3358 = vcmp.eq.f32.partialorder %v3357, 8.507059e+37
  %v3359 = vand.u32 %v3190, 2147483648
  %v3360 = vor.u32 1.1754944e-38, %v3359
  %v3361 = vsel %vm3358, %v3360, %v3356
  %v3362 = vmul.f32 1.0, %v3361
  %v3363 = vrcp.pop %v3191
  %v3364 = vmul.f32 %v3191, %v3363
  %v3365 = vsub.f32 1.0, %v3364
  %v3366 = vmul.f32 %v3363, %v3365
  %v3367 = vadd.f32 %v3363, %v3366
  %vm3368 = vweird.f32 %v3191
  %vm3369 = vweird.f32 %v3363
  %vm3370 = vmor %vm3368, %vm3369
  %v3371 = vsel %vm3370, %v3363, %v3367
  %v3372 = vand.u32 2147483647, %v3191
  %vm3373 = vcmp.eq.f32.partialorder %v3372, 8.507059e+37
  %v3374 = vand.u32 %v3191, 2147483648
  %v3375 = vor.u32 1.1754944e-38, %v3374
  %v3376 = vsel %vm3373, %v3375, %v3371
  %v3377 = vmul.f32 1.0, %v3376
  %v3378 = vrcp.pop %v3192
  %v3379 = vmul.f32 %v3192, %v3378
  %v3380 = vsub.f32 1.0, %v3379
  %v3381 = vmul.f32 %v3378, %v3380
  %v3382 = vadd.f32 %v3378, %v3381
  %vm3383 = vweird.f32 %v3192
  %vm3384 = vweird.f32 %v3378
  %vm3385 = vmor %vm3383, %vm3384
  %v3386 = vsel %vm3385, %v3378, %v3382
  %v3387 = vand.u32 2147483647, %v3192
  %vm3388 = vcmp.eq.f32.partialorder %v3387, 8.507059e+37
  %v3389 = vand.u32 %v3192, 2147483648
  %v3390 = vor.u32 1.1754944e-38, %v3389
  %v3391 = vsel %vm3388, %v3390, %v3386
  %v3392 = vmul.f32 1.0, %v3391
  %v3393 = vrcp.pop %v3193
  %v3394 = vmul.f32 %v3193, %v3393
  %v3395 = vsub.f32 1.0, %v3394
  %v3396 = vmul.f32 %v3393, %v3395
  %v3397 = vadd.f32 %v3393, %v3396
  %vm3398 = vweird.f32 %v3193
  %vm3399 = vweird.f32 %v3393
  %vm3400 = vmor %vm3398, %vm3399
  %v3401 = vsel %vm3400, %v3393, %v3397
  %v3402 = vand.u32 2147483647, %v3193
  %vm3403 = vcmp.eq.f32.partialorder %v3402, 8.507059e+37
  %v3404 = vand.u32 %v3193, 2147483648
  %v3405 = vor.u32 1.1754944e-38, %v3404
  %v3406 = vsel %vm3403, %v3405, %v3401
  %v3407 = vmul.f32 1.0, %v3406
  %v3408 = vrcp.pop %v3194
  %v3409 = vmul.f32 %v3194, %v3408
  %v3410 = vsub.f32 1.0, %v3409
  %v3411 = vmul.f32 %v3408, %v3410
  %v3412 = vadd.f32 %v3408, %v3411
  %vm3413 = vweird.f32 %v3194
  %vm3414 = vweird.f32 %v3408
  %vm3415 = vmor %vm3413, %vm3414
  %v3416 = vsel %vm3415, %v3408, %v3412
  %v3417 = vand.u32 2147483647, %v3194
  %vm3418 = vcmp.eq.f32.partialorder %v3417, 8.507059e+37
  %v3419 = vand.u32 %v3194, 2147483648
  %v3420 = vor.u32 1.1754944e-38, %v3419
  %v3421 = vsel %vm3418, %v3420, %v3416
  %v3422 = vmul.f32 1.0, %v3421
  %v3423 = vrcp.pop %v3195
  %v3424 = vmul.f32 %v3195, %v3423
  %v3425 = vsub.f32 1.0, %v3424
  %v3426 = vmul.f32 %v3423, %v3425
  %v3427 = vadd.f32 %v3423, %v3426
  %vm3428 = vweird.f32 %v3195
  %vm3429 = vweird.f32 %v3423
  %vm3430 = vmor %vm3428, %vm3429
  %v3431 = vsel %vm3430, %v3423, %v3427
  %v3432 = vand.u32 2147483647, %v3195
  %vm3433 = vcmp.eq.f32.partialorder %v3432, 8.507059e+37
  %v3434 = vand.u32 %v3195, 2147483648
  %v3435 = vor.u32 1.1754944e-38, %v3434
  %v3436 = vsel %vm3433, %v3435, %v3431
  %v3437 = vmul.f32 1.0, %v3436
  %v3438 = vrcp.pop %v3196
  %v3439 = vmul.f32 %v3196, %v3438
  %v3440 = vsub.f32 1.0, %v3439
  %v3441 = vmul.f32 %v3438, %v3440
  %v3442 = vadd.f32 %v3438, %v3441
  %vm3443 = vweird.f32 %v3196
  %vm3444 = vweird.f32 %v3438
  %vm3445 = vmor %vm3443, %vm3444
  %v3446 = vsel %vm3445, %v3438, %v3442
  %v3447 = vand.u32 2147483647, %v3196
  %vm3448 = vcmp.eq.f32.partialorder %v3447, 8.507059e+37
  %v3449 = vand.u32 %v3196, 2147483648
  %v3450 = vor.u32 1.1754944e-38, %v3449
  %v3451 = vsel %vm3448, %v3450, %v3446
  %v3452 = vmul.f32 1.0, %v3451
  %v3453 = vrcp.pop %v3197
  %v3454 = vmul.f32 %v3197, %v3453
  %v3455 = vsub.f32 1.0, %v3454
  %v3456 = vmul.f32 %v3453, %v3455
  %v3457 = vadd.f32 %v3453, %v3456
  %vm3458 = vweird.f32 %v3197
  %vm3459 = vweird.f32 %v3453
  %vm3460 = vmor %vm3458, %vm3459
  %v3461 = vsel %vm3460, %v3453, %v3457
  %v3462 = vand.u32 2147483647, %v3197
  %vm3463 = vcmp.eq.f32.partialorder %v3462, 8.507059e+37
  %v3464 = vand.u32 %v3197, 2147483648
  %v3465 = vor.u32 1.1754944e-38, %v3464
  %v3466 = vsel %vm3463, %v3465, %v3461
  %v3467 = vmul.f32 1.0, %v3466
  %v3468 = vrcp.pop %v3198
  %v3469 = vmul.f32 %v3198, %v3468
  %v3470 = vsub.f32 1.0, %v3469
  %v3471 = vmul.f32 %v3468, %v3470
  %v3472 = vadd.f32 %v3468, %v3471
  %vm3473 = vweird.f32 %v3198
  %vm3474 = vweird.f32 %v3468
  %vm3475 = vmor %vm3473, %vm3474
  %v3476 = vsel %vm3475, %v3468, %v3472
  %v3477 = vand.u32 2147483647, %v3198
  %vm3478 = vcmp.eq.f32.partialorder %v3477, 8.507059e+37
  %v3479 = vand.u32 %v3198, 2147483648
  %v3480 = vor.u32 1.1754944e-38, %v3479
  %v3481 = vsel %vm3478, %v3480, %v3476
  %v3482 = vmul.f32 1.0, %v3481
  %v3483 = vrcp.pop %v3199
  %v3484 = vmul.f32 %v3199, %v3483
  %v3485 = vsub.f32 1.0, %v3484
  %v3486 = vmul.f32 %v3483, %v3485
  %v3487 = vadd.f32 %v3483, %v3486
  %vm3488 = vweird.f32 %v3199
  %vm3489 = vweird.f32 %v3483
  %vm3490 = vmor %vm3488, %vm3489
  %v3491 = vsel %vm3490, %v3483, %v3487
  %v3492 = vand.u32 2147483647, %v3199
  %vm3493 = vcmp.eq.f32.partialorder %v3492, 8.507059e+37
  %v3494 = vand.u32 %v3199, 2147483648
  %v3495 = vor.u32 1.1754944e-38, %v3494
  %v3496 = vsel %vm3493, %v3495, %v3491
  %v3497 = vmul.f32 1.0, %v3496
  %v3498 = vrcp.pop %v3200
  %v3499 = vmul.f32 %v3200, %v3498
  %v3500 = vsub.f32 1.0, %v3499
  %v3501 = vmul.f32 %v3498, %v3500
  %v3502 = vadd.f32 %v3498, %v3501
  %vm3503 = vweird.f32 %v3200
  %vm3504 = vweird.f32 %v3498
  %vm3505 = vmor %vm3503, %vm3504
  %v3506 = vsel %vm3505, %v3498, %v3502
  %v3507 = vand.u32 2147483647, %v3200
  %vm3508 = vcmp.eq.f32.partialorder %v3507, 8.507059e+37
  %v3509 = vand.u32 %v3200, 2147483648
  %v3510 = vor.u32 1.1754944e-38, %v3509
  %v3511 = vsel %vm3508, %v3510, %v3506
  %v3512 = vmul.f32 1.0, %v3511
  %v3513 = vrcp.pop %v3201
  %v3514 = vmul.f32 %v3201, %v3513
  %v3515 = vsub.f32 1.0, %v3514
  %v3516 = vmul.f32 %v3513, %v3515
  %v3517 = vadd.f32 %v3513, %v3516
  %vm3518 = vweird.f32 %v3201
  %vm3519 = vweird.f32 %v3513
  %vm3520 = vmor %vm3518, %vm3519
  %v3521 = vsel %vm3520, %v3513, %v3517
  %v3522 = vand.u32 2147483647, %v3201
  %vm3523 = vcmp.eq.f32.partialorder %v3522, 8.507059e+37
  %v3524 = vand.u32 %v3201, 2147483648
  %v3525 = vor.u32 1.1754944e-38, %v3524
  %v3526 = vsel %vm3523, %v3525, %v3521
  %v3527 = vmul.f32 1.0, %v3526
  %v3528 = vrcp.pop %v3202
  %v3529 = vmul.f32 %v3202, %v3528
  %v3530 = vsub.f32 1.0, %v3529
  %v3531 = vmul.f32 %v3528, %v3530
  %v3532 = vadd.f32 %v3528, %v3531
  %vm3533 = vweird.f32 %v3202
  %vm3534 = vweird.f32 %v3528
  %vm3535 = vmor %vm3533, %vm3534
  %v3536 = vsel %vm3535, %v3528, %v3532
  %v3537 = vand.u32 2147483647, %v3202
  %vm3538 = vcmp.eq.f32.partialorder %v3537, 8.507059e+37
  %v3539 = vand.u32 %v3202, 2147483648
  %v3540 = vor.u32 1.1754944e-38, %v3539
  %v3541 = vsel %vm3538, %v3540, %v3536
  %v3542 = vmul.f32 1.0, %v3541
  %v3543 = vrcp.pop %v3203
  %v3544 = vmul.f32 %v3203, %v3543
  %v3545 = vsub.f32 1.0, %v3544
  %v3546 = vmul.f32 %v3543, %v3545
  %v3547 = vadd.f32 %v3543, %v3546
  %vm3548 = vweird.f32 %v3203
  %vm3549 = vweird.f32 %v3543
  %vm3550 = vmor %vm3548, %vm3549
  %v3551 = vsel %vm3550, %v3543, %v3547
  %v3552 = vand.u32 2147483647, %v3203
  %vm3553 = vcmp.eq.f32.partialorder %v3552, 8.507059e+37
  %v3554 = vand.u32 %v3203, 2147483648
  %v3555 = vor.u32 1.1754944e-38, %v3554
  %v3556 = vsel %vm3553, %v3555, %v3551
  %v3557 = vmul.f32 1.0, %v3556
  %v3558 = vrcp.pop %v3204
  %v3559 = vmul.f32 %v3204, %v3558
  %v3560 = vsub.f32 1.0, %v3559
  %v3561 = vmul.f32 %v3558, %v3560
  %v3562 = vadd.f32 %v3558, %v3561
  %vm3563 = vweird.f32 %v3204
  %vm3564 = vweird.f32 %v3558
  %vm3565 = vmor %vm3563, %vm3564
  %v3566 = vsel %vm3565, %v3558, %v3562
  %v3567 = vand.u32 2147483647, %v3204
  %vm3568 = vcmp.eq.f32.partialorder %v3567, 8.507059e+37
  %v3569 = vand.u32 %v3204, 2147483648
  %v3570 = vor.u32 1.1754944e-38, %v3569
  %v3571 = vsel %vm3568, %v3570, %v3566
  %v3572 = vmul.f32 1.0, %v3571
  %v3573 = vrcp.pop %v3205
  %v3574 = vmul.f32 %v3205, %v3573
  %v3575 = vsub.f32 1.0, %v3574
  %v3576 = vmul.f32 %v3573, %v3575
  %v3577 = vadd.f32 %v3573, %v3576
  %vm3578 = vweird.f32 %v3205
  %vm3579 = vweird.f32 %v3573
  %vm3580 = vmor %vm3578, %vm3579
  %v3581 = vsel %vm3580, %v3573, %v3577
  %v3582 = vand.u32 2147483647, %v3205
  %vm3583 = vcmp.eq.f32.partialorder %v3582, 8.507059e+37
  %v3584 = vand.u32 %v3205, 2147483648
  %v3585 = vor.u32 1.1754944e-38, %v3584
  %v3586 = vsel %vm3583, %v3585, %v3581
  %v3587 = vmul.f32 1.0, %v3586
  %v3588 = vrcp.pop %v3206
  %v3589 = vmul.f32 %v3206, %v3588
  %v3590 = vsub.f32 1.0, %v3589
  %v3591 = vmul.f32 %v3588, %v3590
  %v3592 = vadd.f32 %v3588, %v3591
  %vm3593 = vweird.f32 %v3206
  %vm3594 = vweird.f32 %v3588
  %vm3595 = vmor %vm3593, %vm3594
  %v3596 = vsel %vm3595, %v3588, %v3592
  %v3597 = vand.u32 2147483647, %v3206
  %vm3598 = vcmp.eq.f32.partialorder %v3597, 8.507059e+37
  %v3599 = vand.u32 %v3206, 2147483648
  %v3600 = vor.u32 1.1754944e-38, %v3599
  %v3601 = vsel %vm3598, %v3600, %v3596
  %v3602 = vmul.f32 1.0, %v3601
  %v3603 = vrcp.pop %v3207
  %v3604 = vmul.f32 %v3207, %v3603
  %v3605 = vsub.f32 1.0, %v3604
  %v3606 = vmul.f32 %v3603, %v3605
  %v3607 = vadd.f32 %v3603, %v3606
  %vm3608 = vweird.f32 %v3207
  %vm3609 = vweird.f32 %v3603
  %vm3610 = vmor %vm3608, %vm3609
  %v3611 = vsel %vm3610, %v3603, %v3607
  %v3612 = vand.u32 2147483647, %v3207
  %vm3613 = vcmp.eq.f32.partialorder %v3612, 8.507059e+37
  %v3614 = vand.u32 %v3207, 2147483648
  %v3615 = vor.u32 1.1754944e-38, %v3614
  %v3616 = vsel %vm3613, %v3615, %v3611
  %v3617 = vmul.f32 1.0, %v3616
  %v3618 = vrcp.pop %v3208
  %v3619 = vmul.f32 %v3208, %v3618
  %v3620 = vsub.f32 1.0, %v3619
  %v3621 = vmul.f32 %v3618, %v3620
  %v3622 = vadd.f32 %v3618, %v3621
  %vm3623 = vweird.f32 %v3208
  %vm3624 = vweird.f32 %v3618
  %vm3625 = vmor %vm3623, %vm3624
  %v3626 = vsel %vm3625, %v3618, %v3622
  %v3627 = vand.u32 2147483647, %v3208
  %vm3628 = vcmp.eq.f32.partialorder %v3627, 8.507059e+37
  %v3629 = vand.u32 %v3208, 2147483648
  %v3630 = vor.u32 1.1754944e-38, %v3629
  %v3631 = vsel %vm3628, %v3630, %v3626
  %v3632 = vmul.f32 1.0, %v3631
  %v3633 = vrcp.pop %v3209
  %v3634 = vmul.f32 %v3209, %v3633
  %v3635 = vsub.f32 1.0, %v3634
  %v3636 = vmul.f32 %v3633, %v3635
  %v3637 = vadd.f32 %v3633, %v3636
  %vm3638 = vweird.f32 %v3209
  %vm3639 = vweird.f32 %v3633
  %vm3640 = vmor %vm3638, %vm3639
  %v3641 = vsel %vm3640, %v3633, %v3637
  %v3642 = vand.u32 2147483647, %v3209
  %vm3643 = vcmp.eq.f32.partialorder %v3642, 8.507059e+37
  %v3644 = vand.u32 %v3209, 2147483648
  %v3645 = vor.u32 1.1754944e-38, %v3644
  %v3646 = vsel %vm3643, %v3645, %v3641
  %v3647 = vmul.f32 1.0, %v3646
  %v3648 = vrcp.pop %v3210
  %v3649 = vmul.f32 %v3210, %v3648
  %v3650 = vsub.f32 1.0, %v3649
  %v3651 = vmul.f32 %v3648, %v3650
  %v3652 = vadd.f32 %v3648, %v3651
  %vm3653 = vweird.f32 %v3210
  %vm3654 = vweird.f32 %v3648
  %vm3655 = vmor %vm3653, %vm3654
  %v3656 = vsel %vm3655, %v3648, %v3652
  %v3657 = vand.u32 2147483647, %v3210
  %vm3658 = vcmp.eq.f32.partialorder %v3657, 8.507059e+37
  %v3659 = vand.u32 %v3210, 2147483648
  %v3660 = vor.u32 1.1754944e-38, %v3659
  %v3661 = vsel %vm3658, %v3660, %v3656
  %v3662 = vmul.f32 1.0, %v3661
  %v3663 = vrcp.pop %v3211
  %v3664 = vmul.f32 %v3211, %v3663
  %v3665 = vsub.f32 1.0, %v3664
  %v3666 = vmul.f32 %v3663, %v3665
  %v3667 = vadd.f32 %v3663, %v3666
  %vm3668 = vweird.f32 %v3211
  %vm3669 = vweird.f32 %v3663
  %vm3670 = vmor %vm3668, %vm3669
  %v3671 = vsel %vm3670, %v3663, %v3667
  %v3672 = vand.u32 2147483647, %v3211
  %vm3673 = vcmp.eq.f32.partialorder %v3672, 8.507059e+37
  %v3674 = vand.u32 %v3211, 2147483648
  %v3675 = vor.u32 1.1754944e-38, %v3674
  %v3676 = vsel %vm3673, %v3675, %v3671
  %v3677 = vmul.f32 1.0, %v3676
  %v3678 = vrcp.pop %v3212
  %v3679 = vmul.f32 %v3212, %v3678
  %v3680 = vsub.f32 1.0, %v3679
  %v3681 = vmul.f32 %v3678, %v3680
  %v3682 = vadd.f32 %v3678, %v3681
  %vm3683 = vweird.f32 %v3212
  %vm3684 = vweird.f32 %v3678
  %vm3685 = vmor %vm3683, %vm3684
  %v3686 = vsel %vm3685, %v3678, %v3682
  %v3687 = vand.u32 2147483647, %v3212
  %vm3688 = vcmp.eq.f32.partialorder %v3687, 8.507059e+37
  %v3689 = vand.u32 %v3212, 2147483648
  %v3690 = vor.u32 1.1754944e-38, %v3689
  %v3691 = vsel %vm3688, %v3690, %v3686
  %v3692 = vmul.f32 1.0, %v3691
  %v3693 = vmul.f32 %v2943, %v3227
  %v3694 = vmul.f32 %v2962, %v3242
  %v3695 = vmul.f32 %v2981, %v3257
  %v3696 = vmul.f32 %v3000, %v3272
  %v3697 = vmul.f32 %v3019, %v3287
  %v3698 = vmul.f32 %v3038, %v3302
  %v3699 = vmul.f32 %v3057, %v3317
  %v3700 = vmul.f32 %v3076, %v3332
  %v3701 = vmul.f32 %v2945, %v3347
  %v3702 = vmul.f32 %v2964, %v3362
  %v3703 = vmul.f32 %v2983, %v3377
  %v3704 = vmul.f32 %v3002, %v3392
  %v3705 = vmul.f32 %v3021, %v3407
  %v3706 = vmul.f32 %v3040, %v3422
  %v3707 = vmul.f32 %v3059, %v3437
  %v3708 = vmul.f32 %v3078, %v3452
  %v3709 = vmul.f32 %v2948, %v3467
  %v3710 = vmul.f32 %v2967, %v3482
  %v3711 = vmul.f32 %v2986, %v3497
  %v3712 = vmul.f32 %v3005, %v3512
  %v3713 = vmul.f32 %v3024, %v3527
  %v3714 = vmul.f32 %v3043, %v3542
  %v3715 = vmul.f32 %v3062, %v3557
  %v3716 = vmul.f32 %v3081, %v3572
  %v3717 = vmul.f32 %v2950, %v3587
  %v3718 = vmul.f32 %v2969, %v3602
  %v3719 = vmul.f32 %v2988, %v3617
  %v3720 = vmul.f32 %v3007, %v3632
  %v3721 = vmul.f32 %v3026, %v3647
  %v3722 = vmul.f32 %v3045, %v3662
  %v3723 = vmul.f32 %v3064, %v3677
  %v3724 = vmul.f32 %v3083, %v3692
  %v3725 = vadd.f32 %v1985, %v3693
  %v3726 = vadd.f32 %v1986, %v3694
  %v3727 = vadd.f32 %v1987, %v3695
  %v3728 = vadd.f32 %v1988, %v3696
  %v3729 = vadd.f32 %v1989, %v3697
  %v3730 = vadd.f32 %v1990, %v3698
  %v3731 = vadd.f32 %v1991, %v3699
  %v3732 = vadd.f32 %v1992, %v3700
  %v3733 = vadd.f32 %v1993, %v3701
  %v3734 = vadd.f32 %v1994, %v3702
  %v3735 = vadd.f32 %v1995, %v3703
  %v3736 = vadd.f32 %v1996, %v3704
  %v3737 = vadd.f32 %v1997, %v3705
  %v3738 = vadd.f32 %v1998, %v3706
  %v3739 = vadd.f32 %v1999, %v3707
  %v3740 = vadd.f32 %v2000, %v3708
  %v3741 = vadd.f32 %v2001, %v3709
  %v3742 = vadd.f32 %v2002, %v3710
  %v3743 = vadd.f32 %v2003, %v3711
  %v3744 = vadd.f32 %v2004, %v3712
  %v3745 = vadd.f32 %v2005, %v3713
  %v3746 = vadd.f32 %v2006, %v3714
  %v3747 = vadd.f32 %v2007, %v3715
  %v3748 = vadd.f32 %v2008, %v3716
  %v3749 = vadd.f32 %v2009, %v3717
  %v3750 = vadd.f32 %v2010, %v3718
  %v3751 = vadd.f32 %v2011, %v3719
  %v3752 = vadd.f32 %v2012, %v3720
  %v3753 = vadd.f32 %v2013, %v3721
  %v3754 = vadd.f32 %v2014, %v3722
  %v3755 = vadd.f32 %v2015, %v3723
  %v3756 = vadd.f32 %v2016, %v3724
  %s3757 = scalar_lea.vmem %s3, 64
  %v3758 = vld [vmem:[%s3757] sm:$0xf]
  %v3759 = vld [vmem:[%s3757 + $0x4] sm:$0xf]
  %v3760 = vld [vmem:[%s3757 + $0x8] sm:$0xf]
  %v3761 = vld [vmem:[%s3757 + $0xc] sm:$0xf]
  %s3762 = scalar_lea.vmem %s4, 128
  %v3763 = vld [vmem:[%s3762] sm:$0xff]
  %v3764 = vld [vmem:[%s3762 + $0x8] sm:$0xff]
  %v3765 = vld [vmem:[%s3762 + $0x10] sm:$0xff]
  %v3766 = vld [vmem:[%s3762 + $0x18] sm:$0xff]
  %v3767 = vpack.c.bf16 %v3733, %v3725
  %v3768 = vpack.c.bf16 %v3734, %v3726
  %v3769 = vpack.c.bf16 %v3735, %v3727
  %v3770 = vpack.c.bf16 %v3736, %v3728
  %v3771 = vpack.c.bf16 %v3737, %v3729
  %v3772 = vpack.c.bf16 %v3738, %v3730
  %v3773 = vpack.c.bf16 %v3739, %v3731
  %v3774 = vpack.c.bf16 %v3740, %v3732
  %v3775 = vpack.c.bf16 %v3749, %v3741
  %v3776 = vpack.c.bf16 %v3750, %v3742
  %v3777 = vpack.c.bf16 %v3751, %v3743
  %v3778 = vpack.c.bf16 %v3752, %v3744
  %v3779 = vpack.c.bf16 %v3753, %v3745
  %v3780 = vpack.c.bf16 %v3754, %v3746
  %v3781 = vpack.c.bf16 %v3755, %v3747
  %v3782 = vpack.c.bf16 %v3756, %v3748
  %3784 = vset.pattern.permute.xlu0 0
  %3785 = vperm.xlu0 %3784, %v3763
  %v3786 = vpop.permute.xlu0 %3785
  %3789 = vset.pattern.permute.xlu0 0
  %3790 = vperm.xlu0 %3789, %v3764
  %v3791 = vpop.permute.xlu0 %3790
  %3794 = vset.pattern.permute.xlu0 0
  %3795 = vperm.xlu0 %3794, %v3765
  %v3796 = vpop.permute.xlu0 %3795
  %3799 = vset.pattern.permute.xlu0 0
  %3800 = vperm.xlu0 %3799, %v3766
  %v3801 = vpop.permute.xlu0 %3800
  %v3807 = vunpack.c.l.b16 %v3758
  %v3808 = vunpack.c.l.b16 %v3759
  %v3809 = vunpack.c.l.b16 %v3760
  %v3810 = vunpack.c.l.b16 %v3761
  %v3811 = vpack.c.b16 %v3808, %v3807
  %v3812 = vpack.c.b16 %v3810, %v3809
  %v3814 = vsel %vm332, %v3811, 0
  %v3817 = vsel %vm332, %v3812, 0
  %3819 = vmatpush.bf16.msra.mxu0 0
  %3820 = vmatpush.bf16.msra.mxu0 0
  %3821 = vmatpush.bf16.msra.mxu0 0
  %3822 = vmatpush.bf16.msra.mxu0 0
  %3823 = vmatpush.bf16.msra.mxu0 0
  %3824 = vmatpush.bf16.msra.mxu0 0
  %3825 = vmatpush.bf16.msra.mxu0 %v3775
  %3826 = vmatpush.bf16.msra.mxu0 %v3767
  %3827 = vmatmul.bf16.gmra.mxu0 %v3814
  %v3828 = vpop.f32.mrf.mxu0
  %v3829 = vadd.f32 %v3786, %v3828
  %v3830 = vpop.f32.mrf.mxu0
  %v3831 = vadd.f32 %v3791, %v3830
  %3832 = vmatmul.bf16.gmra.mxu0 %v3817
  %v3833 = vpop.f32.mrf.mxu0
  %v3834 = vadd.f32 %v3796, %v3833
  %v3835 = vpop.f32.mrf.mxu0
  %v3836 = vadd.f32 %v3801, %v3835
  %3837 = vdwg.mxu0
  %3838 = vmatpush.bf16.msra.mxu0 0
  %3839 = vmatpush.bf16.msra.mxu0 0
  %3840 = vmatpush.bf16.msra.mxu0 0
  %3841 = vmatpush.bf16.msra.mxu0 0
  %3842 = vmatpush.bf16.msra.mxu0 0
  %3843 = vmatpush.bf16.msra.mxu0 0
  %3844 = vmatpush.bf16.msra.mxu0 %v3776
  %3845 = vmatpush.bf16.msra.mxu0 %v3768
  %3846 = vmatmul.bf16.gmra.mxu0 %v3814
  %v3847 = vpop.f32.mrf.mxu0
  %v3848 = vadd.f32 %v3786, %v3847
  %v3849 = vpop.f32.mrf.mxu0
  %v3850 = vadd.f32 %v3791, %v3849
  %3851 = vmatmul.bf16.gmra.mxu0 %v3817
  %v3852 = vpop.f32.mrf.mxu0
  %v3853 = vadd.f32 %v3796, %v3852
  %v3854 = vpop.f32.mrf.mxu0
  %v3855 = vadd.f32 %v3801, %v3854
  %3856 = vdwg.mxu0
  %3857 = vmatpush.bf16.msra.mxu0 0
  %3858 = vmatpush.bf16.msra.mxu0 0
  %3859 = vmatpush.bf16.msra.mxu0 0
  %3860 = vmatpush.bf16.msra.mxu0 0
  %3861 = vmatpush.bf16.msra.mxu0 0
  %3862 = vmatpush.bf16.msra.mxu0 0
  %3863 = vmatpush.bf16.msra.mxu0 %v3777
  %3864 = vmatpush.bf16.msra.mxu0 %v3769
  %3865 = vmatmul.bf16.gmra.mxu0 %v3814
  %v3866 = vpop.f32.mrf.mxu0
  %v3867 = vadd.f32 %v3786, %v3866
  %v3868 = vpop.f32.mrf.mxu0
  %v3869 = vadd.f32 %v3791, %v3868
  %3870 = vmatmul.bf16.gmra.mxu0 %v3817
  %v3871 = vpop.f32.mrf.mxu0
  %v3872 = vadd.f32 %v3796, %v3871
  %v3873 = vpop.f32.mrf.mxu0
  %v3874 = vadd.f32 %v3801, %v3873
  %3875 = vdwg.mxu0
  %3876 = vmatpush.bf16.msra.mxu0 0
  %3877 = vmatpush.bf16.msra.mxu0 0
  %3878 = vmatpush.bf16.msra.mxu0 0
  %3879 = vmatpush.bf16.msra.mxu0 0
  %3880 = vmatpush.bf16.msra.mxu0 0
  %3881 = vmatpush.bf16.msra.mxu0 0
  %3882 = vmatpush.bf16.msra.mxu0 %v3778
  %3883 = vmatpush.bf16.msra.mxu0 %v3770
  %3884 = vmatmul.bf16.gmra.mxu0 %v3814
  %v3885 = vpop.f32.mrf.mxu0
  %v3886 = vadd.f32 %v3786, %v3885
  %v3887 = vpop.f32.mrf.mxu0
  %v3888 = vadd.f32 %v3791, %v3887
  %3889 = vmatmul.bf16.gmra.mxu0 %v3817
  %v3890 = vpop.f32.mrf.mxu0
  %v3891 = vadd.f32 %v3796, %v3890
  %v3892 = vpop.f32.mrf.mxu0
  %v3893 = vadd.f32 %v3801, %v3892
  %3894 = vdwg.mxu0
  %3895 = vmatpush.bf16.msra.mxu0 0
  %3896 = vmatpush.bf16.msra.mxu0 0
  %3897 = vmatpush.bf16.msra.mxu0 0
  %3898 = vmatpush.bf16.msra.mxu0 0
  %3899 = vmatpush.bf16.msra.mxu0 0
  %3900 = vmatpush.bf16.msra.mxu0 0
  %3901 = vmatpush.bf16.msra.mxu0 %v3779
  %3902 = vmatpush.bf16.msra.mxu0 %v3771
  %3903 = vmatmul.bf16.gmra.mxu0 %v3814
  %v3904 = vpop.f32.mrf.mxu0
  %v3905 = vadd.f32 %v3786, %v3904
  %v3906 = vpop.f32.mrf.mxu0
  %v3907 = vadd.f32 %v3791, %v3906
  %3908 = vmatmul.bf16.gmra.mxu0 %v3817
  %v3909 = vpop.f32.mrf.mxu0
  %v3910 = vadd.f32 %v3796, %v3909
  %v3911 = vpop.f32.mrf.mxu0
  %v3912 = vadd.f32 %v3801, %v3911
  %3913 = vdwg.mxu0
  %3914 = vmatpush.bf16.msra.mxu0 0
  %3915 = vmatpush.bf16.msra.mxu0 0
  %3916 = vmatpush.bf16.msra.mxu0 0
  %3917 = vmatpush.bf16.msra.mxu0 0
  %3918 = vmatpush.bf16.msra.mxu0 0
  %3919 = vmatpush.bf16.msra.mxu0 0
  %3920 = vmatpush.bf16.msra.mxu0 %v3780
  %3921 = vmatpush.bf16.msra.mxu0 %v3772
  %3922 = vmatmul.bf16.gmra.mxu0 %v3814
  %v3923 = vpop.f32.mrf.mxu0
  %v3924 = vadd.f32 %v3786, %v3923
  %v3925 = vpop.f32.mrf.mxu0
  %v3926 = vadd.f32 %v3791, %v3925
  %3927 = vmatmul.bf16.gmra.mxu0 %v3817
  %v3928 = vpop.f32.mrf.mxu0
  %v3929 = vadd.f32 %v3796, %v3928
  %v3930 = vpop.f32.mrf.mxu0
  %v3931 = vadd.f32 %v3801, %v3930
  %3932 = vdwg.mxu0
  %3933 = vmatpush.bf16.msra.mxu0 0
  %3934 = vmatpush.bf16.msra.mxu0 0
  %3935 = vmatpush.bf16.msra.mxu0 0
  %3936 = vmatpush.bf16.msra.mxu0 0
  %3937 = vmatpush.bf16.msra.mxu0 0
  %3938 = vmatpush.bf16.msra.mxu0 0
  %3939 = vmatpush.bf16.msra.mxu0 %v3781
  %3940 = vmatpush.bf16.msra.mxu0 %v3773
  %3941 = vmatmul.bf16.gmra.mxu0 %v3814
  %v3942 = vpop.f32.mrf.mxu0
  %v3943 = vadd.f32 %v3786, %v3942
  %v3944 = vpop.f32.mrf.mxu0
  %v3945 = vadd.f32 %v3791, %v3944
  %3946 = vmatmul.bf16.gmra.mxu0 %v3817
  %v3947 = vpop.f32.mrf.mxu0
  %v3948 = vadd.f32 %v3796, %v3947
  %v3949 = vpop.f32.mrf.mxu0
  %v3950 = vadd.f32 %v3801, %v3949
  %3951 = vdwg.mxu0
  %3952 = vmatpush.bf16.msra.mxu0 0
  %3953 = vmatpush.bf16.msra.mxu0 0
  %3954 = vmatpush.bf16.msra.mxu0 0
  %3955 = vmatpush.bf16.msra.mxu0 0
  %3956 = vmatpush.bf16.msra.mxu0 0
  %3957 = vmatpush.bf16.msra.mxu0 0
  %3958 = vmatpush.bf16.msra.mxu0 %v3782
  %3959 = vmatpush.bf16.msra.mxu0 %v3774
  %3960 = vmatmul.bf16.gmra.mxu0 %v3814
  %v3961 = vpop.f32.mrf.mxu0
  %v3962 = vadd.f32 %v3786, %v3961
  %v3963 = vpop.f32.mrf.mxu0
  %v3964 = vadd.f32 %v3791, %v3963
  %3965 = vmatmul.bf16.gmra.mxu0 %v3817
  %v3966 = vpop.f32.mrf.mxu0
  %v3967 = vadd.f32 %v3796, %v3966
  %v3968 = vpop.f32.mrf.mxu0
  %v3969 = vadd.f32 %v3801, %v3968
  %3970 = vdwg.mxu0
  %v3971 = vxor.u32 %v3829, 2147483648
  %v3972 = vxor.u32 %v3848, 2147483648
  %v3973 = vxor.u32 %v3867, 2147483648
  %v3974 = vxor.u32 %v3886, 2147483648
  %v3975 = vxor.u32 %v3905, 2147483648
  %v3976 = vxor.u32 %v3924, 2147483648
  %v3977 = vxor.u32 %v3943, 2147483648
  %v3978 = vxor.u32 %v3962, 2147483648
  %v3979 = vxor.u32 %v3831, 2147483648
  %v3980 = vxor.u32 %v3850, 2147483648
  %v3981 = vxor.u32 %v3869, 2147483648
  %v3982 = vxor.u32 %v3888, 2147483648
  %v3983 = vxor.u32 %v3907, 2147483648
  %v3984 = vxor.u32 %v3926, 2147483648
  %v3985 = vxor.u32 %v3945, 2147483648
  %v3986 = vxor.u32 %v3964, 2147483648
  %v3987 = vxor.u32 %v3834, 2147483648
  %v3988 = vxor.u32 %v3853, 2147483648
  %v3989 = vxor.u32 %v3872, 2147483648
  %v3990 = vxor.u32 %v3891, 2147483648
  %v3991 = vxor.u32 %v3910, 2147483648
  %v3992 = vxor.u32 %v3929, 2147483648
  %v3993 = vxor.u32 %v3948, 2147483648
  %v3994 = vxor.u32 %v3967, 2147483648
  %v3995 = vxor.u32 %v3836, 2147483648
  %v3996 = vxor.u32 %v3855, 2147483648
  %v3997 = vxor.u32 %v3874, 2147483648
  %v3998 = vxor.u32 %v3893, 2147483648
  %v3999 = vxor.u32 %v3912, 2147483648
  %v4000 = vxor.u32 %v3931, 2147483648
  %v4001 = vxor.u32 %v3950, 2147483648
  %v4002 = vxor.u32 %v3969, 2147483648
  %v4003 = vmul.f32 %v3971, 1.442695
  %v4004 = vpow.pop %v4003
  %v4005 = vmul.f32 %v3972, 1.442695
  %v4006 = vpow.pop %v4005
  %v4007 = vmul.f32 %v3973, 1.442695
  %v4008 = vpow.pop %v4007
  %v4009 = vmul.f32 %v3974, 1.442695
  %v4010 = vpow.pop %v4009
  %v4011 = vmul.f32 %v3975, 1.442695
  %v4012 = vpow.pop %v4011
  %v4013 = vmul.f32 %v3976, 1.442695
  %v4014 = vpow.pop %v4013
  %v4015 = vmul.f32 %v3977, 1.442695
  %v4016 = vpow.pop %v4015
  %v4017 = vmul.f32 %v3978, 1.442695
  %v4018 = vpow.pop %v4017
  %v4019 = vmul.f32 %v3979, 1.442695
  %v4020 = vpow.pop %v4019
  %v4021 = vmul.f32 %v3980, 1.442695
  %v4022 = vpow.pop %v4021
  %v4023 = vmul.f32 %v3981, 1.442695
  %v4024 = vpow.pop %v4023
  %v4025 = vmul.f32 %v3982, 1.442695
  %v4026 = vpow.pop %v4025
  %v4027 = vmul.f32 %v3983, 1.442695
  %v4028 = vpow.pop %v4027
  %v4029 = vmul.f32 %v3984, 1.442695
  %v4030 = vpow.pop %v4029
  %v4031 = vmul.f32 %v3985, 1.442695
  %v4032 = vpow.pop %v4031
  %v4033 = vmul.f32 %v3986, 1.442695
  %v4034 = vpow.pop %v4033
  %v4035 = vmul.f32 %v3987, 1.442695
  %v4036 = vpow.pop %v4035
  %v4037 = vmul.f32 %v3988, 1.442695
  %v4038 = vpow.pop %v4037
  %v4039 = vmul.f32 %v3989, 1.442695
  %v4040 = vpow.pop %v4039
  %v4041 = vmul.f32 %v3990, 1.442695
  %v4042 = vpow.pop %v4041
  %v4043 = vmul.f32 %v3991, 1.442695
  %v4044 = vpow.pop %v4043
  %v4045 = vmul.f32 %v3992, 1.442695
  %v4046 = vpow.pop %v4045
  %v4047 = vmul.f32 %v3993, 1.442695
  %v4048 = vpow.pop %v4047
  %v4049 = vmul.f32 %v3994, 1.442695
  %v4050 = vpow.pop %v4049
  %v4051 = vmul.f32 %v3995, 1.442695
  %v4052 = vpow.pop %v4051
  %v4053 = vmul.f32 %v3996, 1.442695
  %v4054 = vpow.pop %v4053
  %v4055 = vmul.f32 %v3997, 1.442695
  %v4056 = vpow.pop %v4055
  %v4057 = vmul.f32 %v3998, 1.442695
  %v4058 = vpow.pop %v4057
  %v4059 = vmul.f32 %v3999, 1.442695
  %v4060 = vpow.pop %v4059
  %v4061 = vmul.f32 %v4000, 1.442695
  %v4062 = vpow.pop %v4061
  %v4063 = vmul.f32 %v4001, 1.442695
  %v4064 = vpow.pop %v4063
  %v4065 = vmul.f32 %v4002, 1.442695
  %v4066 = vpow.pop %v4065
  %v4067 = vadd.f32 %v4004, 1.0
  %v4068 = vadd.f32 %v4006, 1.0
  %v4069 = vadd.f32 %v4008, 1.0
  %v4070 = vadd.f32 %v4010, 1.0
  %v4071 = vadd.f32 %v4012, 1.0
  %v4072 = vadd.f32 %v4014, 1.0
  %v4073 = vadd.f32 %v4016, 1.0
  %v4074 = vadd.f32 %v4018, 1.0
  %v4075 = vadd.f32 %v4020, 1.0
  %v4076 = vadd.f32 %v4022, 1.0
  %v4077 = vadd.f32 %v4024, 1.0
  %v4078 = vadd.f32 %v4026, 1.0
  %v4079 = vadd.f32 %v4028, 1.0
  %v4080 = vadd.f32 %v4030, 1.0
  %v4081 = vadd.f32 %v4032, 1.0
  %v4082 = vadd.f32 %v4034, 1.0
  %v4083 = vadd.f32 %v4036, 1.0
  %v4084 = vadd.f32 %v4038, 1.0
  %v4085 = vadd.f32 %v4040, 1.0
  %v4086 = vadd.f32 %v4042, 1.0
  %v4087 = vadd.f32 %v4044, 1.0
  %v4088 = vadd.f32 %v4046, 1.0
  %v4089 = vadd.f32 %v4048, 1.0
  %v4090 = vadd.f32 %v4050, 1.0
  %v4091 = vadd.f32 %v4052, 1.0
  %v4092 = vadd.f32 %v4054, 1.0
  %v4093 = vadd.f32 %v4056, 1.0
  %v4094 = vadd.f32 %v4058, 1.0
  %v4095 = vadd.f32 %v4060, 1.0
  %v4096 = vadd.f32 %v4062, 1.0
  %v4097 = vadd.f32 %v4064, 1.0
  %v4098 = vadd.f32 %v4066, 1.0
  %v4099 = vrcp.pop %v4067
  %v4100 = vmul.f32 %v4067, %v4099
  %v4101 = vsub.f32 1.0, %v4100
  %v4102 = vmul.f32 %v4099, %v4101
  %v4103 = vadd.f32 %v4099, %v4102
  %vm4104 = vweird.f32 %v4067
  %vm4105 = vweird.f32 %v4099
  %vm4106 = vmor %vm4104, %vm4105
  %v4107 = vsel %vm4106, %v4099, %v4103
  %v4108 = vand.u32 2147483647, %v4067
  %vm4109 = vcmp.eq.f32.partialorder %v4108, 8.507059e+37
  %v4110 = vand.u32 %v4067, 2147483648
  %v4111 = vor.u32 1.1754944e-38, %v4110
  %v4112 = vsel %vm4109, %v4111, %v4107
  %v4113 = vmul.f32 1.0, %v4112
  %v4114 = vrcp.pop %v4068
  %v4115 = vmul.f32 %v4068, %v4114
  %v4116 = vsub.f32 1.0, %v4115
  %v4117 = vmul.f32 %v4114, %v4116
  %v4118 = vadd.f32 %v4114, %v4117
  %vm4119 = vweird.f32 %v4068
  %vm4120 = vweird.f32 %v4114
  %vm4121 = vmor %vm4119, %vm4120
  %v4122 = vsel %vm4121, %v4114, %v4118
  %v4123 = vand.u32 2147483647, %v4068
  %vm4124 = vcmp.eq.f32.partialorder %v4123, 8.507059e+37
  %v4125 = vand.u32 %v4068, 2147483648
  %v4126 = vor.u32 1.1754944e-38, %v4125
  %v4127 = vsel %vm4124, %v4126, %v4122
  %v4128 = vmul.f32 1.0, %v4127
  %v4129 = vrcp.pop %v4069
  %v4130 = vmul.f32 %v4069, %v4129
  %v4131 = vsub.f32 1.0, %v4130
  %v4132 = vmul.f32 %v4129, %v4131
  %v4133 = vadd.f32 %v4129, %v4132
  %vm4134 = vweird.f32 %v4069
  %vm4135 = vweird.f32 %v4129
  %vm4136 = vmor %vm4134, %vm4135
  %v4137 = vsel %vm4136, %v4129, %v4133
  %v4138 = vand.u32 2147483647, %v4069
  %vm4139 = vcmp.eq.f32.partialorder %v4138, 8.507059e+37
  %v4140 = vand.u32 %v4069, 2147483648
  %v4141 = vor.u32 1.1754944e-38, %v4140
  %v4142 = vsel %vm4139, %v4141, %v4137
  %v4143 = vmul.f32 1.0, %v4142
  %v4144 = vrcp.pop %v4070
  %v4145 = vmul.f32 %v4070, %v4144
  %v4146 = vsub.f32 1.0, %v4145
  %v4147 = vmul.f32 %v4144, %v4146
  %v4148 = vadd.f32 %v4144, %v4147
  %vm4149 = vweird.f32 %v4070
  %vm4150 = vweird.f32 %v4144
  %vm4151 = vmor %vm4149, %vm4150
  %v4152 = vsel %vm4151, %v4144, %v4148
  %v4153 = vand.u32 2147483647, %v4070
  %vm4154 = vcmp.eq.f32.partialorder %v4153, 8.507059e+37
  %v4155 = vand.u32 %v4070, 2147483648
  %v4156 = vor.u32 1.1754944e-38, %v4155
  %v4157 = vsel %vm4154, %v4156, %v4152
  %v4158 = vmul.f32 1.0, %v4157
  %v4159 = vrcp.pop %v4071
  %v4160 = vmul.f32 %v4071, %v4159
  %v4161 = vsub.f32 1.0, %v4160
  %v4162 = vmul.f32 %v4159, %v4161
  %v4163 = vadd.f32 %v4159, %v4162
  %vm4164 = vweird.f32 %v4071
  %vm4165 = vweird.f32 %v4159
  %vm4166 = vmor %vm4164, %vm4165
  %v4167 = vsel %vm4166, %v4159, %v4163
  %v4168 = vand.u32 2147483647, %v4071
  %vm4169 = vcmp.eq.f32.partialorder %v4168, 8.507059e+37
  %v4170 = vand.u32 %v4071, 2147483648
  %v4171 = vor.u32 1.1754944e-38, %v4170
  %v4172 = vsel %vm4169, %v4171, %v4167
  %v4173 = vmul.f32 1.0, %v4172
  %v4174 = vrcp.pop %v4072
  %v4175 = vmul.f32 %v4072, %v4174
  %v4176 = vsub.f32 1.0, %v4175
  %v4177 = vmul.f32 %v4174, %v4176
  %v4178 = vadd.f32 %v4174, %v4177
  %vm4179 = vweird.f32 %v4072
  %vm4180 = vweird.f32 %v4174
  %vm4181 = vmor %vm4179, %vm4180
  %v4182 = vsel %vm4181, %v4174, %v4178
  %v4183 = vand.u32 2147483647, %v4072
  %vm4184 = vcmp.eq.f32.partialorder %v4183, 8.507059e+37
  %v4185 = vand.u32 %v4072, 2147483648
  %v4186 = vor.u32 1.1754944e-38, %v4185
  %v4187 = vsel %vm4184, %v4186, %v4182
  %v4188 = vmul.f32 1.0, %v4187
  %v4189 = vrcp.pop %v4073
  %v4190 = vmul.f32 %v4073, %v4189
  %v4191 = vsub.f32 1.0, %v4190
  %v4192 = vmul.f32 %v4189, %v4191
  %v4193 = vadd.f32 %v4189, %v4192
  %vm4194 = vweird.f32 %v4073
  %vm4195 = vweird.f32 %v4189
  %vm4196 = vmor %vm4194, %vm4195
  %v4197 = vsel %vm4196, %v4189, %v4193
  %v4198 = vand.u32 2147483647, %v4073
  %vm4199 = vcmp.eq.f32.partialorder %v4198, 8.507059e+37
  %v4200 = vand.u32 %v4073, 2147483648
  %v4201 = vor.u32 1.1754944e-38, %v4200
  %v4202 = vsel %vm4199, %v4201, %v4197
  %v4203 = vmul.f32 1.0, %v4202
  %v4204 = vrcp.pop %v4074
  %v4205 = vmul.f32 %v4074, %v4204
  %v4206 = vsub.f32 1.0, %v4205
  %v4207 = vmul.f32 %v4204, %v4206
  %v4208 = vadd.f32 %v4204, %v4207
  %vm4209 = vweird.f32 %v4074
  %vm4210 = vweird.f32 %v4204
  %vm4211 = vmor %vm4209, %vm4210
  %v4212 = vsel %vm4211, %v4204, %v4208
  %v4213 = vand.u32 2147483647, %v4074
  %vm4214 = vcmp.eq.f32.partialorder %v4213, 8.507059e+37
  %v4215 = vand.u32 %v4074, 2147483648
  %v4216 = vor.u32 1.1754944e-38, %v4215
  %v4217 = vsel %vm4214, %v4216, %v4212
  %v4218 = vmul.f32 1.0, %v4217
  %v4219 = vrcp.pop %v4075
  %v4220 = vmul.f32 %v4075, %v4219
  %v4221 = vsub.f32 1.0, %v4220
  %v4222 = vmul.f32 %v4219, %v4221
  %v4223 = vadd.f32 %v4219, %v4222
  %vm4224 = vweird.f32 %v4075
  %vm4225 = vweird.f32 %v4219
  %vm4226 = vmor %vm4224, %vm4225
  %v4227 = vsel %vm4226, %v4219, %v4223
  %v4228 = vand.u32 2147483647, %v4075
  %vm4229 = vcmp.eq.f32.partialorder %v4228, 8.507059e+37
  %v4230 = vand.u32 %v4075, 2147483648
  %v4231 = vor.u32 1.1754944e-38, %v4230
  %v4232 = vsel %vm4229, %v4231, %v4227
  %v4233 = vmul.f32 1.0, %v4232
  %v4234 = vrcp.pop %v4076
  %v4235 = vmul.f32 %v4076, %v4234
  %v4236 = vsub.f32 1.0, %v4235
  %v4237 = vmul.f32 %v4234, %v4236
  %v4238 = vadd.f32 %v4234, %v4237
  %vm4239 = vweird.f32 %v4076
  %vm4240 = vweird.f32 %v4234
  %vm4241 = vmor %vm4239, %vm4240
  %v4242 = vsel %vm4241, %v4234, %v4238
  %v4243 = vand.u32 2147483647, %v4076
  %vm4244 = vcmp.eq.f32.partialorder %v4243, 8.507059e+37
  %v4245 = vand.u32 %v4076, 2147483648
  %v4246 = vor.u32 1.1754944e-38, %v4245
  %v4247 = vsel %vm4244, %v4246, %v4242
  %v4248 = vmul.f32 1.0, %v4247
  %v4249 = vrcp.pop %v4077
  %v4250 = vmul.f32 %v4077, %v4249
  %v4251 = vsub.f32 1.0, %v4250
  %v4252 = vmul.f32 %v4249, %v4251
  %v4253 = vadd.f32 %v4249, %v4252
  %vm4254 = vweird.f32 %v4077
  %vm4255 = vweird.f32 %v4249
  %vm4256 = vmor %vm4254, %vm4255
  %v4257 = vsel %vm4256, %v4249, %v4253
  %v4258 = vand.u32 2147483647, %v4077
  %vm4259 = vcmp.eq.f32.partialorder %v4258, 8.507059e+37
  %v4260 = vand.u32 %v4077, 2147483648
  %v4261 = vor.u32 1.1754944e-38, %v4260
  %v4262 = vsel %vm4259, %v4261, %v4257
  %v4263 = vmul.f32 1.0, %v4262
  %v4264 = vrcp.pop %v4078
  %v4265 = vmul.f32 %v4078, %v4264
  %v4266 = vsub.f32 1.0, %v4265
  %v4267 = vmul.f32 %v4264, %v4266
  %v4268 = vadd.f32 %v4264, %v4267
  %vm4269 = vweird.f32 %v4078
  %vm4270 = vweird.f32 %v4264
  %vm4271 = vmor %vm4269, %vm4270
  %v4272 = vsel %vm4271, %v4264, %v4268
  %v4273 = vand.u32 2147483647, %v4078
  %vm4274 = vcmp.eq.f32.partialorder %v4273, 8.507059e+37
  %v4275 = vand.u32 %v4078, 2147483648
  %v4276 = vor.u32 1.1754944e-38, %v4275
  %v4277 = vsel %vm4274, %v4276, %v4272
  %v4278 = vmul.f32 1.0, %v4277
  %v4279 = vrcp.pop %v4079
  %v4280 = vmul.f32 %v4079, %v4279
  %v4281 = vsub.f32 1.0, %v4280
  %v4282 = vmul.f32 %v4279, %v4281
  %v4283 = vadd.f32 %v4279, %v4282
  %vm4284 = vweird.f32 %v4079
  %vm4285 = vweird.f32 %v4279
  %vm4286 = vmor %vm4284, %vm4285
  %v4287 = vsel %vm4286, %v4279, %v4283
  %v4288 = vand.u32 2147483647, %v4079
  %vm4289 = vcmp.eq.f32.partialorder %v4288, 8.507059e+37
  %v4290 = vand.u32 %v4079, 2147483648
  %v4291 = vor.u32 1.1754944e-38, %v4290
  %v4292 = vsel %vm4289, %v4291, %v4287
  %v4293 = vmul.f32 1.0, %v4292
  %v4294 = vrcp.pop %v4080
  %v4295 = vmul.f32 %v4080, %v4294
  %v4296 = vsub.f32 1.0, %v4295
  %v4297 = vmul.f32 %v4294, %v4296
  %v4298 = vadd.f32 %v4294, %v4297
  %vm4299 = vweird.f32 %v4080
  %vm4300 = vweird.f32 %v4294
  %vm4301 = vmor %vm4299, %vm4300
  %v4302 = vsel %vm4301, %v4294, %v4298
  %v4303 = vand.u32 2147483647, %v4080
  %vm4304 = vcmp.eq.f32.partialorder %v4303, 8.507059e+37
  %v4305 = vand.u32 %v4080, 2147483648
  %v4306 = vor.u32 1.1754944e-38, %v4305
  %v4307 = vsel %vm4304, %v4306, %v4302
  %v4308 = vmul.f32 1.0, %v4307
  %v4309 = vrcp.pop %v4081
  %v4310 = vmul.f32 %v4081, %v4309
  %v4311 = vsub.f32 1.0, %v4310
  %v4312 = vmul.f32 %v4309, %v4311
  %v4313 = vadd.f32 %v4309, %v4312
  %vm4314 = vweird.f32 %v4081
  %vm4315 = vweird.f32 %v4309
  %vm4316 = vmor %vm4314, %vm4315
  %v4317 = vsel %vm4316, %v4309, %v4313
  %v4318 = vand.u32 2147483647, %v4081
  %vm4319 = vcmp.eq.f32.partialorder %v4318, 8.507059e+37
  %v4320 = vand.u32 %v4081, 2147483648
  %v4321 = vor.u32 1.1754944e-38, %v4320
  %v4322 = vsel %vm4319, %v4321, %v4317
  %v4323 = vmul.f32 1.0, %v4322
  %v4324 = vrcp.pop %v4082
  %v4325 = vmul.f32 %v4082, %v4324
  %v4326 = vsub.f32 1.0, %v4325
  %v4327 = vmul.f32 %v4324, %v4326
  %v4328 = vadd.f32 %v4324, %v4327
  %vm4329 = vweird.f32 %v4082
  %vm4330 = vweird.f32 %v4324
  %vm4331 = vmor %vm4329, %vm4330
  %v4332 = vsel %vm4331, %v4324, %v4328
  %v4333 = vand.u32 2147483647, %v4082
  %vm4334 = vcmp.eq.f32.partialorder %v4333, 8.507059e+37
  %v4335 = vand.u32 %v4082, 2147483648
  %v4336 = vor.u32 1.1754944e-38, %v4335
  %v4337 = vsel %vm4334, %v4336, %v4332
  %v4338 = vmul.f32 1.0, %v4337
  %v4339 = vrcp.pop %v4083
  %v4340 = vmul.f32 %v4083, %v4339
  %v4341 = vsub.f32 1.0, %v4340
  %v4342 = vmul.f32 %v4339, %v4341
  %v4343 = vadd.f32 %v4339, %v4342
  %vm4344 = vweird.f32 %v4083
  %vm4345 = vweird.f32 %v4339
  %vm4346 = vmor %vm4344, %vm4345
  %v4347 = vsel %vm4346, %v4339, %v4343
  %v4348 = vand.u32 2147483647, %v4083
  %vm4349 = vcmp.eq.f32.partialorder %v4348, 8.507059e+37
  %v4350 = vand.u32 %v4083, 2147483648
  %v4351 = vor.u32 1.1754944e-38, %v4350
  %v4352 = vsel %vm4349, %v4351, %v4347
  %v4353 = vmul.f32 1.0, %v4352
  %v4354 = vrcp.pop %v4084
  %v4355 = vmul.f32 %v4084, %v4354
  %v4356 = vsub.f32 1.0, %v4355
  %v4357 = vmul.f32 %v4354, %v4356
  %v4358 = vadd.f32 %v4354, %v4357
  %vm4359 = vweird.f32 %v4084
  %vm4360 = vweird.f32 %v4354
  %vm4361 = vmor %vm4359, %vm4360
  %v4362 = vsel %vm4361, %v4354, %v4358
  %v4363 = vand.u32 2147483647, %v4084
  %vm4364 = vcmp.eq.f32.partialorder %v4363, 8.507059e+37
  %v4365 = vand.u32 %v4084, 2147483648
  %v4366 = vor.u32 1.1754944e-38, %v4365
  %v4367 = vsel %vm4364, %v4366, %v4362
  %v4368 = vmul.f32 1.0, %v4367
  %v4369 = vrcp.pop %v4085
  %v4370 = vmul.f32 %v4085, %v4369
  %v4371 = vsub.f32 1.0, %v4370
  %v4372 = vmul.f32 %v4369, %v4371
  %v4373 = vadd.f32 %v4369, %v4372
  %vm4374 = vweird.f32 %v4085
  %vm4375 = vweird.f32 %v4369
  %vm4376 = vmor %vm4374, %vm4375
  %v4377 = vsel %vm4376, %v4369, %v4373
  %v4378 = vand.u32 2147483647, %v4085
  %vm4379 = vcmp.eq.f32.partialorder %v4378, 8.507059e+37
  %v4380 = vand.u32 %v4085, 2147483648
  %v4381 = vor.u32 1.1754944e-38, %v4380
  %v4382 = vsel %vm4379, %v4381, %v4377
  %v4383 = vmul.f32 1.0, %v4382
  %v4384 = vrcp.pop %v4086
  %v4385 = vmul.f32 %v4086, %v4384
  %v4386 = vsub.f32 1.0, %v4385
  %v4387 = vmul.f32 %v4384, %v4386
  %v4388 = vadd.f32 %v4384, %v4387
  %vm4389 = vweird.f32 %v4086
  %vm4390 = vweird.f32 %v4384
  %vm4391 = vmor %vm4389, %vm4390
  %v4392 = vsel %vm4391, %v4384, %v4388
  %v4393 = vand.u32 2147483647, %v4086
  %vm4394 = vcmp.eq.f32.partialorder %v4393, 8.507059e+37
  %v4395 = vand.u32 %v4086, 2147483648
  %v4396 = vor.u32 1.1754944e-38, %v4395
  %v4397 = vsel %vm4394, %v4396, %v4392
  %v4398 = vmul.f32 1.0, %v4397
  %v4399 = vrcp.pop %v4087
  %v4400 = vmul.f32 %v4087, %v4399
  %v4401 = vsub.f32 1.0, %v4400
  %v4402 = vmul.f32 %v4399, %v4401
  %v4403 = vadd.f32 %v4399, %v4402
  %vm4404 = vweird.f32 %v4087
  %vm4405 = vweird.f32 %v4399
  %vm4406 = vmor %vm4404, %vm4405
  %v4407 = vsel %vm4406, %v4399, %v4403
  %v4408 = vand.u32 2147483647, %v4087
  %vm4409 = vcmp.eq.f32.partialorder %v4408, 8.507059e+37
  %v4410 = vand.u32 %v4087, 2147483648
  %v4411 = vor.u32 1.1754944e-38, %v4410
  %v4412 = vsel %vm4409, %v4411, %v4407
  %v4413 = vmul.f32 1.0, %v4412
  %v4414 = vrcp.pop %v4088
  %v4415 = vmul.f32 %v4088, %v4414
  %v4416 = vsub.f32 1.0, %v4415
  %v4417 = vmul.f32 %v4414, %v4416
  %v4418 = vadd.f32 %v4414, %v4417
  %vm4419 = vweird.f32 %v4088
  %vm4420 = vweird.f32 %v4414
  %vm4421 = vmor %vm4419, %vm4420
  %v4422 = vsel %vm4421, %v4414, %v4418
  %v4423 = vand.u32 2147483647, %v4088
  %vm4424 = vcmp.eq.f32.partialorder %v4423, 8.507059e+37
  %v4425 = vand.u32 %v4088, 2147483648
  %v4426 = vor.u32 1.1754944e-38, %v4425
  %v4427 = vsel %vm4424, %v4426, %v4422
  %v4428 = vmul.f32 1.0, %v4427
  %v4429 = vrcp.pop %v4089
  %v4430 = vmul.f32 %v4089, %v4429
  %v4431 = vsub.f32 1.0, %v4430
  %v4432 = vmul.f32 %v4429, %v4431
  %v4433 = vadd.f32 %v4429, %v4432
  %vm4434 = vweird.f32 %v4089
  %vm4435 = vweird.f32 %v4429
  %vm4436 = vmor %vm4434, %vm4435
  %v4437 = vsel %vm4436, %v4429, %v4433
  %v4438 = vand.u32 2147483647, %v4089
  %vm4439 = vcmp.eq.f32.partialorder %v4438, 8.507059e+37
  %v4440 = vand.u32 %v4089, 2147483648
  %v4441 = vor.u32 1.1754944e-38, %v4440
  %v4442 = vsel %vm4439, %v4441, %v4437
  %v4443 = vmul.f32 1.0, %v4442
  %v4444 = vrcp.pop %v4090
  %v4445 = vmul.f32 %v4090, %v4444
  %v4446 = vsub.f32 1.0, %v4445
  %v4447 = vmul.f32 %v4444, %v4446
  %v4448 = vadd.f32 %v4444, %v4447
  %vm4449 = vweird.f32 %v4090
  %vm4450 = vweird.f32 %v4444
  %vm4451 = vmor %vm4449, %vm4450
  %v4452 = vsel %vm4451, %v4444, %v4448
  %v4453 = vand.u32 2147483647, %v4090
  %vm4454 = vcmp.eq.f32.partialorder %v4453, 8.507059e+37
  %v4455 = vand.u32 %v4090, 2147483648
  %v4456 = vor.u32 1.1754944e-38, %v4455
  %v4457 = vsel %vm4454, %v4456, %v4452
  %v4458 = vmul.f32 1.0, %v4457
  %v4459 = vrcp.pop %v4091
  %v4460 = vmul.f32 %v4091, %v4459
  %v4461 = vsub.f32 1.0, %v4460
  %v4462 = vmul.f32 %v4459, %v4461
  %v4463 = vadd.f32 %v4459, %v4462
  %vm4464 = vweird.f32 %v4091
  %vm4465 = vweird.f32 %v4459
  %vm4466 = vmor %vm4464, %vm4465
  %v4467 = vsel %vm4466, %v4459, %v4463
  %v4468 = vand.u32 2147483647, %v4091
  %vm4469 = vcmp.eq.f32.partialorder %v4468, 8.507059e+37
  %v4470 = vand.u32 %v4091, 2147483648
  %v4471 = vor.u32 1.1754944e-38, %v4470
  %v4472 = vsel %vm4469, %v4471, %v4467
  %v4473 = vmul.f32 1.0, %v4472
  %v4474 = vrcp.pop %v4092
  %v4475 = vmul.f32 %v4092, %v4474
  %v4476 = vsub.f32 1.0, %v4475
  %v4477 = vmul.f32 %v4474, %v4476
  %v4478 = vadd.f32 %v4474, %v4477
  %vm4479 = vweird.f32 %v4092
  %vm4480 = vweird.f32 %v4474
  %vm4481 = vmor %vm4479, %vm4480
  %v4482 = vsel %vm4481, %v4474, %v4478
  %v4483 = vand.u32 2147483647, %v4092
  %vm4484 = vcmp.eq.f32.partialorder %v4483, 8.507059e+37
  %v4485 = vand.u32 %v4092, 2147483648
  %v4486 = vor.u32 1.1754944e-38, %v4485
  %v4487 = vsel %vm4484, %v4486, %v4482
  %v4488 = vmul.f32 1.0, %v4487
  %v4489 = vrcp.pop %v4093
  %v4490 = vmul.f32 %v4093, %v4489
  %v4491 = vsub.f32 1.0, %v4490
  %v4492 = vmul.f32 %v4489, %v4491
  %v4493 = vadd.f32 %v4489, %v4492
  %vm4494 = vweird.f32 %v4093
  %vm4495 = vweird.f32 %v4489
  %vm4496 = vmor %vm4494, %vm4495
  %v4497 = vsel %vm4496, %v4489, %v4493
  %v4498 = vand.u32 2147483647, %v4093
  %vm4499 = vcmp.eq.f32.partialorder %v4498, 8.507059e+37
  %v4500 = vand.u32 %v4093, 2147483648
  %v4501 = vor.u32 1.1754944e-38, %v4500
  %v4502 = vsel %vm4499, %v4501, %v4497
  %v4503 = vmul.f32 1.0, %v4502
  %v4504 = vrcp.pop %v4094
  %v4505 = vmul.f32 %v4094, %v4504
  %v4506 = vsub.f32 1.0, %v4505
  %v4507 = vmul.f32 %v4504, %v4506
  %v4508 = vadd.f32 %v4504, %v4507
  %vm4509 = vweird.f32 %v4094
  %vm4510 = vweird.f32 %v4504
  %vm4511 = vmor %vm4509, %vm4510
  %v4512 = vsel %vm4511, %v4504, %v4508
  %v4513 = vand.u32 2147483647, %v4094
  %vm4514 = vcmp.eq.f32.partialorder %v4513, 8.507059e+37
  %v4515 = vand.u32 %v4094, 2147483648
  %v4516 = vor.u32 1.1754944e-38, %v4515
  %v4517 = vsel %vm4514, %v4516, %v4512
  %v4518 = vmul.f32 1.0, %v4517
  %v4519 = vrcp.pop %v4095
  %v4520 = vmul.f32 %v4095, %v4519
  %v4521 = vsub.f32 1.0, %v4520
  %v4522 = vmul.f32 %v4519, %v4521
  %v4523 = vadd.f32 %v4519, %v4522
  %vm4524 = vweird.f32 %v4095
  %vm4525 = vweird.f32 %v4519
  %vm4526 = vmor %vm4524, %vm4525
  %v4527 = vsel %vm4526, %v4519, %v4523
  %v4528 = vand.u32 2147483647, %v4095
  %vm4529 = vcmp.eq.f32.partialorder %v4528, 8.507059e+37
  %v4530 = vand.u32 %v4095, 2147483648
  %v4531 = vor.u32 1.1754944e-38, %v4530
  %v4532 = vsel %vm4529, %v4531, %v4527
  %v4533 = vmul.f32 1.0, %v4532
  %v4534 = vrcp.pop %v4096
  %v4535 = vmul.f32 %v4096, %v4534
  %v4536 = vsub.f32 1.0, %v4535
  %v4537 = vmul.f32 %v4534, %v4536
  %v4538 = vadd.f32 %v4534, %v4537
  %vm4539 = vweird.f32 %v4096
  %vm4540 = vweird.f32 %v4534
  %vm4541 = vmor %vm4539, %vm4540
  %v4542 = vsel %vm4541, %v4534, %v4538
  %v4543 = vand.u32 2147483647, %v4096
  %vm4544 = vcmp.eq.f32.partialorder %v4543, 8.507059e+37
  %v4545 = vand.u32 %v4096, 2147483648
  %v4546 = vor.u32 1.1754944e-38, %v4545
  %v4547 = vsel %vm4544, %v4546, %v4542
  %v4548 = vmul.f32 1.0, %v4547
  %v4549 = vrcp.pop %v4097
  %v4550 = vmul.f32 %v4097, %v4549
  %v4551 = vsub.f32 1.0, %v4550
  %v4552 = vmul.f32 %v4549, %v4551
  %v4553 = vadd.f32 %v4549, %v4552
  %vm4554 = vweird.f32 %v4097
  %vm4555 = vweird.f32 %v4549
  %vm4556 = vmor %vm4554, %vm4555
  %v4557 = vsel %vm4556, %v4549, %v4553
  %v4558 = vand.u32 2147483647, %v4097
  %vm4559 = vcmp.eq.f32.partialorder %v4558, 8.507059e+37
  %v4560 = vand.u32 %v4097, 2147483648
  %v4561 = vor.u32 1.1754944e-38, %v4560
  %v4562 = vsel %vm4559, %v4561, %v4557
  %v4563 = vmul.f32 1.0, %v4562
  %v4564 = vrcp.pop %v4098
  %v4565 = vmul.f32 %v4098, %v4564
  %v4566 = vsub.f32 1.0, %v4565
  %v4567 = vmul.f32 %v4564, %v4566
  %v4568 = vadd.f32 %v4564, %v4567
  %vm4569 = vweird.f32 %v4098
  %vm4570 = vweird.f32 %v4564
  %vm4571 = vmor %vm4569, %vm4570
  %v4572 = vsel %vm4571, %v4564, %v4568
  %v4573 = vand.u32 2147483647, %v4098
  %vm4574 = vcmp.eq.f32.partialorder %v4573, 8.507059e+37
  %v4575 = vand.u32 %v4098, 2147483648
  %v4576 = vor.u32 1.1754944e-38, %v4575
  %v4577 = vsel %vm4574, %v4576, %v4572
  %v4578 = vmul.f32 1.0, %v4577
  %v4579 = vmul.f32 %v3829, %v4113
  %v4580 = vmul.f32 %v3848, %v4128
  %v4581 = vmul.f32 %v3867, %v4143
  %v4582 = vmul.f32 %v3886, %v4158
  %v4583 = vmul.f32 %v3905, %v4173
  %v4584 = vmul.f32 %v3924, %v4188
  %v4585 = vmul.f32 %v3943, %v4203
  %v4586 = vmul.f32 %v3962, %v4218
  %v4587 = vmul.f32 %v3831, %v4233
  %v4588 = vmul.f32 %v3850, %v4248
  %v4589 = vmul.f32 %v3869, %v4263
  %v4590 = vmul.f32 %v3888, %v4278
  %v4591 = vmul.f32 %v3907, %v4293
  %v4592 = vmul.f32 %v3926, %v4308
  %v4593 = vmul.f32 %v3945, %v4323
  %v4594 = vmul.f32 %v3964, %v4338
  %v4595 = vmul.f32 %v3834, %v4353
  %v4596 = vmul.f32 %v3853, %v4368
  %v4597 = vmul.f32 %v3872, %v4383
  %v4598 = vmul.f32 %v3891, %v4398
  %v4599 = vmul.f32 %v3910, %v4413
  %v4600 = vmul.f32 %v3929, %v4428
  %v4601 = vmul.f32 %v3948, %v4443
  %v4602 = vmul.f32 %v3967, %v4458
  %v4603 = vmul.f32 %v3836, %v4473
  %v4604 = vmul.f32 %v3855, %v4488
  %v4605 = vmul.f32 %v3874, %v4503
  %v4606 = vmul.f32 %v3893, %v4518
  %v4607 = vmul.f32 %v3912, %v4533
  %v4608 = vmul.f32 %v3931, %v4548
  %v4609 = vmul.f32 %v3950, %v4563
  %v4610 = vmul.f32 %v3969, %v4578
  %s4611 = scalar_lea.vmem %s3, 80
  %v4612 = vld [vmem:[%s4611] sm:$0xf]
  %v4613 = vld [vmem:[%s4611 + $0x4] sm:$0xf]
  %v4614 = vld [vmem:[%s4611 + $0x8] sm:$0xf]
  %v4615 = vld [vmem:[%s4611 + $0xc] sm:$0xf]
  %s4616 = scalar_lea.vmem %s4, 160
  %v4617 = vld [vmem:[%s4616] sm:$0xff]
  %v4618 = vld [vmem:[%s4616 + $0x8] sm:$0xff]
  %v4619 = vld [vmem:[%s4616 + $0x10] sm:$0xff]
  %v4620 = vld [vmem:[%s4616 + $0x18] sm:$0xff]
  %v4621 = vpack.c.bf16 %v4587, %v4579
  %v4622 = vpack.c.bf16 %v4588, %v4580
  %v4623 = vpack.c.bf16 %v4589, %v4581
  %v4624 = vpack.c.bf16 %v4590, %v4582
  %v4625 = vpack.c.bf16 %v4591, %v4583
  %v4626 = vpack.c.bf16 %v4592, %v4584
  %v4627 = vpack.c.bf16 %v4593, %v4585
  %v4628 = vpack.c.bf16 %v4594, %v4586
  %v4629 = vpack.c.bf16 %v4603, %v4595
  %v4630 = vpack.c.bf16 %v4604, %v4596
  %v4631 = vpack.c.bf16 %v4605, %v4597
  %v4632 = vpack.c.bf16 %v4606, %v4598
  %v4633 = vpack.c.bf16 %v4607, %v4599
  %v4634 = vpack.c.bf16 %v4608, %v4600
  %v4635 = vpack.c.bf16 %v4609, %v4601
  %v4636 = vpack.c.bf16 %v4610, %v4602
  %4638 = vset.pattern.permute.xlu0 0
  %4639 = vperm.xlu0 %4638, %v4617
  %v4640 = vpop.permute.xlu0 %4639
  %4643 = vset.pattern.permute.xlu0 0
  %4644 = vperm.xlu0 %4643, %v4618
  %v4645 = vpop.permute.xlu0 %4644
  %4648 = vset.pattern.permute.xlu0 0
  %4649 = vperm.xlu0 %4648, %v4619
  %v4650 = vpop.permute.xlu0 %4649
  %4653 = vset.pattern.permute.xlu0 0
  %4654 = vperm.xlu0 %4653, %v4620
  %v4655 = vpop.permute.xlu0 %4654
  %v4661 = vunpack.c.l.b16 %v4612
  %v4662 = vunpack.c.l.b16 %v4613
  %v4663 = vunpack.c.l.b16 %v4614
  %v4664 = vunpack.c.l.b16 %v4615
  %v4665 = vpack.c.b16 %v4662, %v4661
  %v4666 = vpack.c.b16 %v4664, %v4663
  %v4668 = vsel %vm332, %v4665, 0
  %v4671 = vsel %vm332, %v4666, 0
  %4673 = vmatpush.bf16.msra.mxu0 0
  %4674 = vmatpush.bf16.msra.mxu0 0
  %4675 = vmatpush.bf16.msra.mxu0 0
  %4676 = vmatpush.bf16.msra.mxu0 0
  %4677 = vmatpush.bf16.msra.mxu0 0
  %4678 = vmatpush.bf16.msra.mxu0 0
  %4679 = vmatpush.bf16.msra.mxu0 %v4629
  %4680 = vmatpush.bf16.msra.mxu0 %v4621
  %4681 = vmatmul.bf16.gmra.mxu0 %v4668
  %v4682 = vpop.f32.mrf.mxu0
  %v4683 = vadd.f32 %v4640, %v4682
  %v4684 = vpop.f32.mrf.mxu0
  %v4685 = vadd.f32 %v4645, %v4684
  %4686 = vmatmul.bf16.gmra.mxu0 %v4671
  %v4687 = vpop.f32.mrf.mxu0
  %v4688 = vadd.f32 %v4650, %v4687
  %v4689 = vpop.f32.mrf.mxu0
  %v4690 = vadd.f32 %v4655, %v4689
  %4691 = vdwg.mxu0
  %4692 = vmatpush.bf16.msra.mxu0 0
  %4693 = vmatpush.bf16.msra.mxu0 0
  %4694 = vmatpush.bf16.msra.mxu0 0
  %4695 = vmatpush.bf16.msra.mxu0 0
  %4696 = vmatpush.bf16.msra.mxu0 0
  %4697 = vmatpush.bf16.msra.mxu0 0
  %4698 = vmatpush.bf16.msra.mxu0 %v4630
  %4699 = vmatpush.bf16.msra.mxu0 %v4622
  %4700 = vmatmul.bf16.gmra.mxu0 %v4668
  %v4701 = vpop.f32.mrf.mxu0
  %v4702 = vadd.f32 %v4640, %v4701
  %v4703 = vpop.f32.mrf.mxu0
  %v4704 = vadd.f32 %v4645, %v4703
  %4705 = vmatmul.bf16.gmra.mxu0 %v4671
  %v4706 = vpop.f32.mrf.mxu0
  %v4707 = vadd.f32 %v4650, %v4706
  %v4708 = vpop.f32.mrf.mxu0
  %v4709 = vadd.f32 %v4655, %v4708
  %4710 = vdwg.mxu0
  %4711 = vmatpush.bf16.msra.mxu0 0
  %4712 = vmatpush.bf16.msra.mxu0 0
  %4713 = vmatpush.bf16.msra.mxu0 0
  %4714 = vmatpush.bf16.msra.mxu0 0
  %4715 = vmatpush.bf16.msra.mxu0 0
  %4716 = vmatpush.bf16.msra.mxu0 0
  %4717 = vmatpush.bf16.msra.mxu0 %v4631
  %4718 = vmatpush.bf16.msra.mxu0 %v4623
  %4719 = vmatmul.bf16.gmra.mxu0 %v4668
  %v4720 = vpop.f32.mrf.mxu0
  %v4721 = vadd.f32 %v4640, %v4720
  %v4722 = vpop.f32.mrf.mxu0
  %v4723 = vadd.f32 %v4645, %v4722
  %4724 = vmatmul.bf16.gmra.mxu0 %v4671
  %v4725 = vpop.f32.mrf.mxu0
  %v4726 = vadd.f32 %v4650, %v4725
  %v4727 = vpop.f32.mrf.mxu0
  %v4728 = vadd.f32 %v4655, %v4727
  %4729 = vdwg.mxu0
  %4730 = vmatpush.bf16.msra.mxu0 0
  %4731 = vmatpush.bf16.msra.mxu0 0
  %4732 = vmatpush.bf16.msra.mxu0 0
  %4733 = vmatpush.bf16.msra.mxu0 0
  %4734 = vmatpush.bf16.msra.mxu0 0
  %4735 = vmatpush.bf16.msra.mxu0 0
  %4736 = vmatpush.bf16.msra.mxu0 %v4632
  %4737 = vmatpush.bf16.msra.mxu0 %v4624
  %4738 = vmatmul.bf16.gmra.mxu0 %v4668
  %v4739 = vpop.f32.mrf.mxu0
  %v4740 = vadd.f32 %v4640, %v4739
  %v4741 = vpop.f32.mrf.mxu0
  %v4742 = vadd.f32 %v4645, %v4741
  %4743 = vmatmul.bf16.gmra.mxu0 %v4671
  %v4744 = vpop.f32.mrf.mxu0
  %v4745 = vadd.f32 %v4650, %v4744
  %v4746 = vpop.f32.mrf.mxu0
  %v4747 = vadd.f32 %v4655, %v4746
  %4748 = vdwg.mxu0
  %4749 = vmatpush.bf16.msra.mxu0 0
  %4750 = vmatpush.bf16.msra.mxu0 0
  %4751 = vmatpush.bf16.msra.mxu0 0
  %4752 = vmatpush.bf16.msra.mxu0 0
  %4753 = vmatpush.bf16.msra.mxu0 0
  %4754 = vmatpush.bf16.msra.mxu0 0
  %4755 = vmatpush.bf16.msra.mxu0 %v4633
  %4756 = vmatpush.bf16.msra.mxu0 %v4625
  %4757 = vmatmul.bf16.gmra.mxu0 %v4668
  %v4758 = vpop.f32.mrf.mxu0
  %v4759 = vadd.f32 %v4640, %v4758
  %v4760 = vpop.f32.mrf.mxu0
  %v4761 = vadd.f32 %v4645, %v4760
  %4762 = vmatmul.bf16.gmra.mxu0 %v4671
  %v4763 = vpop.f32.mrf.mxu0
  %v4764 = vadd.f32 %v4650, %v4763
  %v4765 = vpop.f32.mrf.mxu0
  %v4766 = vadd.f32 %v4655, %v4765
  %4767 = vdwg.mxu0
  %4768 = vmatpush.bf16.msra.mxu0 0
  %4769 = vmatpush.bf16.msra.mxu0 0
  %4770 = vmatpush.bf16.msra.mxu0 0
  %4771 = vmatpush.bf16.msra.mxu0 0
  %4772 = vmatpush.bf16.msra.mxu0 0
  %4773 = vmatpush.bf16.msra.mxu0 0
  %4774 = vmatpush.bf16.msra.mxu0 %v4634
  %4775 = vmatpush.bf16.msra.mxu0 %v4626
  %4776 = vmatmul.bf16.gmra.mxu0 %v4668
  %v4777 = vpop.f32.mrf.mxu0
  %v4778 = vadd.f32 %v4640, %v4777
  %v4779 = vpop.f32.mrf.mxu0
  %v4780 = vadd.f32 %v4645, %v4779
  %4781 = vmatmul.bf16.gmra.mxu0 %v4671
  %v4782 = vpop.f32.mrf.mxu0
  %v4783 = vadd.f32 %v4650, %v4782
  %v4784 = vpop.f32.mrf.mxu0
  %v4785 = vadd.f32 %v4655, %v4784
  %4786 = vdwg.mxu0
  %4787 = vmatpush.bf16.msra.mxu0 0
  %4788 = vmatpush.bf16.msra.mxu0 0
  %4789 = vmatpush.bf16.msra.mxu0 0
  %4790 = vmatpush.bf16.msra.mxu0 0
  %4791 = vmatpush.bf16.msra.mxu0 0
  %4792 = vmatpush.bf16.msra.mxu0 0
  %4793 = vmatpush.bf16.msra.mxu0 %v4635
  %4794 = vmatpush.bf16.msra.mxu0 %v4627
  %4795 = vmatmul.bf16.gmra.mxu0 %v4668
  %v4796 = vpop.f32.mrf.mxu0
  %v4797 = vadd.f32 %v4640, %v4796
  %v4798 = vpop.f32.mrf.mxu0
  %v4799 = vadd.f32 %v4645, %v4798
  %4800 = vmatmul.bf16.gmra.mxu0 %v4671
  %v4801 = vpop.f32.mrf.mxu0
  %v4802 = vadd.f32 %v4650, %v4801
  %v4803 = vpop.f32.mrf.mxu0
  %v4804 = vadd.f32 %v4655, %v4803
  %4805 = vdwg.mxu0
  %4806 = vmatpush.bf16.msra.mxu0 0
  %4807 = vmatpush.bf16.msra.mxu0 0
  %4808 = vmatpush.bf16.msra.mxu0 0
  %4809 = vmatpush.bf16.msra.mxu0 0
  %4810 = vmatpush.bf16.msra.mxu0 0
  %4811 = vmatpush.bf16.msra.mxu0 0
  %4812 = vmatpush.bf16.msra.mxu0 %v4636
  %4813 = vmatpush.bf16.msra.mxu0 %v4628
  %4814 = vmatmul.bf16.gmra.mxu0 %v4668
  %v4815 = vpop.f32.mrf.mxu0
  %v4816 = vadd.f32 %v4640, %v4815
  %v4817 = vpop.f32.mrf.mxu0
  %v4818 = vadd.f32 %v4645, %v4817
  %4819 = vmatmul.bf16.gmra.mxu0 %v4671
  %v4820 = vpop.f32.mrf.mxu0
  %v4821 = vadd.f32 %v4650, %v4820
  %v4822 = vpop.f32.mrf.mxu0
  %v4823 = vadd.f32 %v4655, %v4822
  %4824 = vdwg.mxu0
  %v4825 = vxor.u32 %v4683, 2147483648
  %v4826 = vxor.u32 %v4702, 2147483648
  %v4827 = vxor.u32 %v4721, 2147483648
  %v4828 = vxor.u32 %v4740, 2147483648
  %v4829 = vxor.u32 %v4759, 2147483648
  %v4830 = vxor.u32 %v4778, 2147483648
  %v4831 = vxor.u32 %v4797, 2147483648
  %v4832 = vxor.u32 %v4816, 2147483648
  %v4833 = vxor.u32 %v4685, 2147483648
  %v4834 = vxor.u32 %v4704, 2147483648
  %v4835 = vxor.u32 %v4723, 2147483648
  %v4836 = vxor.u32 %v4742, 2147483648
  %v4837 = vxor.u32 %v4761, 2147483648
  %v4838 = vxor.u32 %v4780, 2147483648
  %v4839 = vxor.u32 %v4799, 2147483648
  %v4840 = vxor.u32 %v4818, 2147483648
  %v4841 = vxor.u32 %v4688, 2147483648
  %v4842 = vxor.u32 %v4707, 2147483648
  %v4843 = vxor.u32 %v4726, 2147483648
  %v4844 = vxor.u32 %v4745, 2147483648
  %v4845 = vxor.u32 %v4764, 2147483648
  %v4846 = vxor.u32 %v4783, 2147483648
  %v4847 = vxor.u32 %v4802, 2147483648
  %v4848 = vxor.u32 %v4821, 2147483648
  %v4849 = vxor.u32 %v4690, 2147483648
  %v4850 = vxor.u32 %v4709, 2147483648
  %v4851 = vxor.u32 %v4728, 2147483648
  %v4852 = vxor.u32 %v4747, 2147483648
  %v4853 = vxor.u32 %v4766, 2147483648
  %v4854 = vxor.u32 %v4785, 2147483648
  %v4855 = vxor.u32 %v4804, 2147483648
  %v4856 = vxor.u32 %v4823, 2147483648
  %v4857 = vmul.f32 %v4825, 1.442695
  %v4858 = vpow.pop %v4857
  %v4859 = vmul.f32 %v4826, 1.442695
  %v4860 = vpow.pop %v4859
  %v4861 = vmul.f32 %v4827, 1.442695
  %v4862 = vpow.pop %v4861
  %v4863 = vmul.f32 %v4828, 1.442695
  %v4864 = vpow.pop %v4863
  %v4865 = vmul.f32 %v4829, 1.442695
  %v4866 = vpow.pop %v4865
  %v4867 = vmul.f32 %v4830, 1.442695
  %v4868 = vpow.pop %v4867
  %v4869 = vmul.f32 %v4831, 1.442695
  %v4870 = vpow.pop %v4869
  %v4871 = vmul.f32 %v4832, 1.442695
  %v4872 = vpow.pop %v4871
  %v4873 = vmul.f32 %v4833, 1.442695
  %v4874 = vpow.pop %v4873
  %v4875 = vmul.f32 %v4834, 1.442695
  %v4876 = vpow.pop %v4875
  %v4877 = vmul.f32 %v4835, 1.442695
  %v4878 = vpow.pop %v4877
  %v4879 = vmul.f32 %v4836, 1.442695
  %v4880 = vpow.pop %v4879
  %v4881 = vmul.f32 %v4837, 1.442695
  %v4882 = vpow.pop %v4881
  %v4883 = vmul.f32 %v4838, 1.442695
  %v4884 = vpow.pop %v4883
  %v4885 = vmul.f32 %v4839, 1.442695
  %v4886 = vpow.pop %v4885
  %v4887 = vmul.f32 %v4840, 1.442695
  %v4888 = vpow.pop %v4887
  %v4889 = vmul.f32 %v4841, 1.442695
  %v4890 = vpow.pop %v4889
  %v4891 = vmul.f32 %v4842, 1.442695
  %v4892 = vpow.pop %v4891
  %v4893 = vmul.f32 %v4843, 1.442695
  %v4894 = vpow.pop %v4893
  %v4895 = vmul.f32 %v4844, 1.442695
  %v4896 = vpow.pop %v4895
  %v4897 = vmul.f32 %v4845, 1.442695
  %v4898 = vpow.pop %v4897
  %v4899 = vmul.f32 %v4846, 1.442695
  %v4900 = vpow.pop %v4899
  %v4901 = vmul.f32 %v4847, 1.442695
  %v4902 = vpow.pop %v4901
  %v4903 = vmul.f32 %v4848, 1.442695
  %v4904 = vpow.pop %v4903
  %v4905 = vmul.f32 %v4849, 1.442695
  %v4906 = vpow.pop %v4905
  %v4907 = vmul.f32 %v4850, 1.442695
  %v4908 = vpow.pop %v4907
  %v4909 = vmul.f32 %v4851, 1.442695
  %v4910 = vpow.pop %v4909
  %v4911 = vmul.f32 %v4852, 1.442695
  %v4912 = vpow.pop %v4911
  %v4913 = vmul.f32 %v4853, 1.442695
  %v4914 = vpow.pop %v4913
  %v4915 = vmul.f32 %v4854, 1.442695
  %v4916 = vpow.pop %v4915
  %v4917 = vmul.f32 %v4855, 1.442695
  %v4918 = vpow.pop %v4917
  %v4919 = vmul.f32 %v4856, 1.442695
  %v4920 = vpow.pop %v4919
  %v4921 = vadd.f32 %v4858, 1.0
  %v4922 = vadd.f32 %v4860, 1.0
  %v4923 = vadd.f32 %v4862, 1.0
  %v4924 = vadd.f32 %v4864, 1.0
  %v4925 = vadd.f32 %v4866, 1.0
  %v4926 = vadd.f32 %v4868, 1.0
  %v4927 = vadd.f32 %v4870, 1.0
  %v4928 = vadd.f32 %v4872, 1.0
  %v4929 = vadd.f32 %v4874, 1.0
  %v4930 = vadd.f32 %v4876, 1.0
  %v4931 = vadd.f32 %v4878, 1.0
  %v4932 = vadd.f32 %v4880, 1.0
  %v4933 = vadd.f32 %v4882, 1.0
  %v4934 = vadd.f32 %v4884, 1.0
  %v4935 = vadd.f32 %v4886, 1.0
  %v4936 = vadd.f32 %v4888, 1.0
  %v4937 = vadd.f32 %v4890, 1.0
  %v4938 = vadd.f32 %v4892, 1.0
  %v4939 = vadd.f32 %v4894, 1.0
  %v4940 = vadd.f32 %v4896, 1.0
  %v4941 = vadd.f32 %v4898, 1.0
  %v4942 = vadd.f32 %v4900, 1.0
  %v4943 = vadd.f32 %v4902, 1.0
  %v4944 = vadd.f32 %v4904, 1.0
  %v4945 = vadd.f32 %v4906, 1.0
  %v4946 = vadd.f32 %v4908, 1.0
  %v4947 = vadd.f32 %v4910, 1.0
  %v4948 = vadd.f32 %v4912, 1.0
  %v4949 = vadd.f32 %v4914, 1.0
  %v4950 = vadd.f32 %v4916, 1.0
  %v4951 = vadd.f32 %v4918, 1.0
  %v4952 = vadd.f32 %v4920, 1.0
  %v4953 = vrcp.pop %v4921
  %v4954 = vmul.f32 %v4921, %v4953
  %v4955 = vsub.f32 1.0, %v4954
  %v4956 = vmul.f32 %v4953, %v4955
  %v4957 = vadd.f32 %v4953, %v4956
  %vm4958 = vweird.f32 %v4921
  %vm4959 = vweird.f32 %v4953
  %vm4960 = vmor %vm4958, %vm4959
  %v4961 = vsel %vm4960, %v4953, %v4957
  %v4962 = vand.u32 2147483647, %v4921
  %vm4963 = vcmp.eq.f32.partialorder %v4962, 8.507059e+37
  %v4964 = vand.u32 %v4921, 2147483648
  %v4965 = vor.u32 1.1754944e-38, %v4964
  %v4966 = vsel %vm4963, %v4965, %v4961
  %v4967 = vmul.f32 1.0, %v4966
  %v4968 = vrcp.pop %v4922
  %v4969 = vmul.f32 %v4922, %v4968
  %v4970 = vsub.f32 1.0, %v4969
  %v4971 = vmul.f32 %v4968, %v4970
  %v4972 = vadd.f32 %v4968, %v4971
  %vm4973 = vweird.f32 %v4922
  %vm4974 = vweird.f32 %v4968
  %vm4975 = vmor %vm4973, %vm4974
  %v4976 = vsel %vm4975, %v4968, %v4972
  %v4977 = vand.u32 2147483647, %v4922
  %vm4978 = vcmp.eq.f32.partialorder %v4977, 8.507059e+37
  %v4979 = vand.u32 %v4922, 2147483648
  %v4980 = vor.u32 1.1754944e-38, %v4979
  %v4981 = vsel %vm4978, %v4980, %v4976
  %v4982 = vmul.f32 1.0, %v4981
  %v4983 = vrcp.pop %v4923
  %v4984 = vmul.f32 %v4923, %v4983
  %v4985 = vsub.f32 1.0, %v4984
  %v4986 = vmul.f32 %v4983, %v4985
  %v4987 = vadd.f32 %v4983, %v4986
  %vm4988 = vweird.f32 %v4923
  %vm4989 = vweird.f32 %v4983
  %vm4990 = vmor %vm4988, %vm4989
  %v4991 = vsel %vm4990, %v4983, %v4987
  %v4992 = vand.u32 2147483647, %v4923
  %vm4993 = vcmp.eq.f32.partialorder %v4992, 8.507059e+37
  %v4994 = vand.u32 %v4923, 2147483648
  %v4995 = vor.u32 1.1754944e-38, %v4994
  %v4996 = vsel %vm4993, %v4995, %v4991
  %v4997 = vmul.f32 1.0, %v4996
  %v4998 = vrcp.pop %v4924
  %v4999 = vmul.f32 %v4924, %v4998
  %v5000 = vsub.f32 1.0, %v4999
  %v5001 = vmul.f32 %v4998, %v5000
  %v5002 = vadd.f32 %v4998, %v5001
  %vm5003 = vweird.f32 %v4924
  %vm5004 = vweird.f32 %v4998
  %vm5005 = vmor %vm5003, %vm5004
  %v5006 = vsel %vm5005, %v4998, %v5002
  %v5007 = vand.u32 2147483647, %v4924
  %vm5008 = vcmp.eq.f32.partialorder %v5007, 8.507059e+37
  %v5009 = vand.u32 %v4924, 2147483648
  %v5010 = vor.u32 1.1754944e-38, %v5009
  %v5011 = vsel %vm5008, %v5010, %v5006
  %v5012 = vmul.f32 1.0, %v5011
  %v5013 = vrcp.pop %v4925
  %v5014 = vmul.f32 %v4925, %v5013
  %v5015 = vsub.f32 1.0, %v5014
  %v5016 = vmul.f32 %v5013, %v5015
  %v5017 = vadd.f32 %v5013, %v5016
  %vm5018 = vweird.f32 %v4925
  %vm5019 = vweird.f32 %v5013
  %vm5020 = vmor %vm5018, %vm5019
  %v5021 = vsel %vm5020, %v5013, %v5017
  %v5022 = vand.u32 2147483647, %v4925
  %vm5023 = vcmp.eq.f32.partialorder %v5022, 8.507059e+37
  %v5024 = vand.u32 %v4925, 2147483648
  %v5025 = vor.u32 1.1754944e-38, %v5024
  %v5026 = vsel %vm5023, %v5025, %v5021
  %v5027 = vmul.f32 1.0, %v5026
  %v5028 = vrcp.pop %v4926
  %v5029 = vmul.f32 %v4926, %v5028
  %v5030 = vsub.f32 1.0, %v5029
  %v5031 = vmul.f32 %v5028, %v5030
  %v5032 = vadd.f32 %v5028, %v5031
  %vm5033 = vweird.f32 %v4926
  %vm5034 = vweird.f32 %v5028
  %vm5035 = vmor %vm5033, %vm5034
  %v5036 = vsel %vm5035, %v5028, %v5032
  %v5037 = vand.u32 2147483647, %v4926
  %vm5038 = vcmp.eq.f32.partialorder %v5037, 8.507059e+37
  %v5039 = vand.u32 %v4926, 2147483648
  %v5040 = vor.u32 1.1754944e-38, %v5039
  %v5041 = vsel %vm5038, %v5040, %v5036
  %v5042 = vmul.f32 1.0, %v5041
  %v5043 = vrcp.pop %v4927
  %v5044 = vmul.f32 %v4927, %v5043
  %v5045 = vsub.f32 1.0, %v5044
  %v5046 = vmul.f32 %v5043, %v5045
  %v5047 = vadd.f32 %v5043, %v5046
  %vm5048 = vweird.f32 %v4927
  %vm5049 = vweird.f32 %v5043
  %vm5050 = vmor %vm5048, %vm5049
  %v5051 = vsel %vm5050, %v5043, %v5047
  %v5052 = vand.u32 2147483647, %v4927
  %vm5053 = vcmp.eq.f32.partialorder %v5052, 8.507059e+37
  %v5054 = vand.u32 %v4927, 2147483648
  %v5055 = vor.u32 1.1754944e-38, %v5054
  %v5056 = vsel %vm5053, %v5055, %v5051
  %v5057 = vmul.f32 1.0, %v5056
  %v5058 = vrcp.pop %v4928
  %v5059 = vmul.f32 %v4928, %v5058
  %v5060 = vsub.f32 1.0, %v5059
  %v5061 = vmul.f32 %v5058, %v5060
  %v5062 = vadd.f32 %v5058, %v5061
  %vm5063 = vweird.f32 %v4928
  %vm5064 = vweird.f32 %v5058
  %vm5065 = vmor %vm5063, %vm5064
  %v5066 = vsel %vm5065, %v5058, %v5062
  %v5067 = vand.u32 2147483647, %v4928
  %vm5068 = vcmp.eq.f32.partialorder %v5067, 8.507059e+37
  %v5069 = vand.u32 %v4928, 2147483648
  %v5070 = vor.u32 1.1754944e-38, %v5069
  %v5071 = vsel %vm5068, %v5070, %v5066
  %v5072 = vmul.f32 1.0, %v5071
  %v5073 = vrcp.pop %v4929
  %v5074 = vmul.f32 %v4929, %v5073
  %v5075 = vsub.f32 1.0, %v5074
  %v5076 = vmul.f32 %v5073, %v5075
  %v5077 = vadd.f32 %v5073, %v5076
  %vm5078 = vweird.f32 %v4929
  %vm5079 = vweird.f32 %v5073
  %vm5080 = vmor %vm5078, %vm5079
  %v5081 = vsel %vm5080, %v5073, %v5077
  %v5082 = vand.u32 2147483647, %v4929
  %vm5083 = vcmp.eq.f32.partialorder %v5082, 8.507059e+37
  %v5084 = vand.u32 %v4929, 2147483648
  %v5085 = vor.u32 1.1754944e-38, %v5084
  %v5086 = vsel %vm5083, %v5085, %v5081
  %v5087 = vmul.f32 1.0, %v5086
  %v5088 = vrcp.pop %v4930
  %v5089 = vmul.f32 %v4930, %v5088
  %v5090 = vsub.f32 1.0, %v5089
  %v5091 = vmul.f32 %v5088, %v5090
  %v5092 = vadd.f32 %v5088, %v5091
  %vm5093 = vweird.f32 %v4930
  %vm5094 = vweird.f32 %v5088
  %vm5095 = vmor %vm5093, %vm5094
  %v5096 = vsel %vm5095, %v5088, %v5092
  %v5097 = vand.u32 2147483647, %v4930
  %vm5098 = vcmp.eq.f32.partialorder %v5097, 8.507059e+37
  %v5099 = vand.u32 %v4930, 2147483648
  %v5100 = vor.u32 1.1754944e-38, %v5099
  %v5101 = vsel %vm5098, %v5100, %v5096
  %v5102 = vmul.f32 1.0, %v5101
  %v5103 = vrcp.pop %v4931
  %v5104 = vmul.f32 %v4931, %v5103
  %v5105 = vsub.f32 1.0, %v5104
  %v5106 = vmul.f32 %v5103, %v5105
  %v5107 = vadd.f32 %v5103, %v5106
  %vm5108 = vweird.f32 %v4931
  %vm5109 = vweird.f32 %v5103
  %vm5110 = vmor %vm5108, %vm5109
  %v5111 = vsel %vm5110, %v5103, %v5107
  %v5112 = vand.u32 2147483647, %v4931
  %vm5113 = vcmp.eq.f32.partialorder %v5112, 8.507059e+37
  %v5114 = vand.u32 %v4931, 2147483648
  %v5115 = vor.u32 1.1754944e-38, %v5114
  %v5116 = vsel %vm5113, %v5115, %v5111
  %v5117 = vmul.f32 1.0, %v5116
  %v5118 = vrcp.pop %v4932
  %v5119 = vmul.f32 %v4932, %v5118
  %v5120 = vsub.f32 1.0, %v5119
  %v5121 = vmul.f32 %v5118, %v5120
  %v5122 = vadd.f32 %v5118, %v5121
  %vm5123 = vweird.f32 %v4932
  %vm5124 = vweird.f32 %v5118
  %vm5125 = vmor %vm5123, %vm5124
  %v5126 = vsel %vm5125, %v5118, %v5122
  %v5127 = vand.u32 2147483647, %v4932
  %vm5128 = vcmp.eq.f32.partialorder %v5127, 8.507059e+37
  %v5129 = vand.u32 %v4932, 2147483648
  %v5130 = vor.u32 1.1754944e-38, %v5129
  %v5131 = vsel %vm5128, %v5130, %v5126
  %v5132 = vmul.f32 1.0, %v5131
  %v5133 = vrcp.pop %v4933
  %v5134 = vmul.f32 %v4933, %v5133
  %v5135 = vsub.f32 1.0, %v5134
  %v5136 = vmul.f32 %v5133, %v5135
  %v5137 = vadd.f32 %v5133, %v5136
  %vm5138 = vweird.f32 %v4933
  %vm5139 = vweird.f32 %v5133
  %vm5140 = vmor %vm5138, %vm5139
  %v5141 = vsel %vm5140, %v5133, %v5137
  %v5142 = vand.u32 2147483647, %v4933
  %vm5143 = vcmp.eq.f32.partialorder %v5142, 8.507059e+37
  %v5144 = vand.u32 %v4933, 2147483648
  %v5145 = vor.u32 1.1754944e-38, %v5144
  %v5146 = vsel %vm5143, %v5145, %v5141
  %v5147 = vmul.f32 1.0, %v5146
  %v5148 = vrcp.pop %v4934
  %v5149 = vmul.f32 %v4934, %v5148
  %v5150 = vsub.f32 1.0, %v5149
  %v5151 = vmul.f32 %v5148, %v5150
  %v5152 = vadd.f32 %v5148, %v5151
  %vm5153 = vweird.f32 %v4934
  %vm5154 = vweird.f32 %v5148
  %vm5155 = vmor %vm5153, %vm5154
  %v5156 = vsel %vm5155, %v5148, %v5152
  %v5157 = vand.u32 2147483647, %v4934
  %vm5158 = vcmp.eq.f32.partialorder %v5157, 8.507059e+37
  %v5159 = vand.u32 %v4934, 2147483648
  %v5160 = vor.u32 1.1754944e-38, %v5159
  %v5161 = vsel %vm5158, %v5160, %v5156
  %v5162 = vmul.f32 1.0, %v5161
  %v5163 = vrcp.pop %v4935
  %v5164 = vmul.f32 %v4935, %v5163
  %v5165 = vsub.f32 1.0, %v5164
  %v5166 = vmul.f32 %v5163, %v5165
  %v5167 = vadd.f32 %v5163, %v5166
  %vm5168 = vweird.f32 %v4935
  %vm5169 = vweird.f32 %v5163
  %vm5170 = vmor %vm5168, %vm5169
  %v5171 = vsel %vm5170, %v5163, %v5167
  %v5172 = vand.u32 2147483647, %v4935
  %vm5173 = vcmp.eq.f32.partialorder %v5172, 8.507059e+37
  %v5174 = vand.u32 %v4935, 2147483648
  %v5175 = vor.u32 1.1754944e-38, %v5174
  %v5176 = vsel %vm5173, %v5175, %v5171
  %v5177 = vmul.f32 1.0, %v5176
  %v5178 = vrcp.pop %v4936
  %v5179 = vmul.f32 %v4936, %v5178
  %v5180 = vsub.f32 1.0, %v5179
  %v5181 = vmul.f32 %v5178, %v5180
  %v5182 = vadd.f32 %v5178, %v5181
  %vm5183 = vweird.f32 %v4936
  %vm5184 = vweird.f32 %v5178
  %vm5185 = vmor %vm5183, %vm5184
  %v5186 = vsel %vm5185, %v5178, %v5182
  %v5187 = vand.u32 2147483647, %v4936
  %vm5188 = vcmp.eq.f32.partialorder %v5187, 8.507059e+37
  %v5189 = vand.u32 %v4936, 2147483648
  %v5190 = vor.u32 1.1754944e-38, %v5189
  %v5191 = vsel %vm5188, %v5190, %v5186
  %v5192 = vmul.f32 1.0, %v5191
  %v5193 = vrcp.pop %v4937
  %v5194 = vmul.f32 %v4937, %v5193
  %v5195 = vsub.f32 1.0, %v5194
  %v5196 = vmul.f32 %v5193, %v5195
  %v5197 = vadd.f32 %v5193, %v5196
  %vm5198 = vweird.f32 %v4937
  %vm5199 = vweird.f32 %v5193
  %vm5200 = vmor %vm5198, %vm5199
  %v5201 = vsel %vm5200, %v5193, %v5197
  %v5202 = vand.u32 2147483647, %v4937
  %vm5203 = vcmp.eq.f32.partialorder %v5202, 8.507059e+37
  %v5204 = vand.u32 %v4937, 2147483648
  %v5205 = vor.u32 1.1754944e-38, %v5204
  %v5206 = vsel %vm5203, %v5205, %v5201
  %v5207 = vmul.f32 1.0, %v5206
  %v5208 = vrcp.pop %v4938
  %v5209 = vmul.f32 %v4938, %v5208
  %v5210 = vsub.f32 1.0, %v5209
  %v5211 = vmul.f32 %v5208, %v5210
  %v5212 = vadd.f32 %v5208, %v5211
  %vm5213 = vweird.f32 %v4938
  %vm5214 = vweird.f32 %v5208
  %vm5215 = vmor %vm5213, %vm5214
  %v5216 = vsel %vm5215, %v5208, %v5212
  %v5217 = vand.u32 2147483647, %v4938
  %vm5218 = vcmp.eq.f32.partialorder %v5217, 8.507059e+37
  %v5219 = vand.u32 %v4938, 2147483648
  %v5220 = vor.u32 1.1754944e-38, %v5219
  %v5221 = vsel %vm5218, %v5220, %v5216
  %v5222 = vmul.f32 1.0, %v5221
  %v5223 = vrcp.pop %v4939
  %v5224 = vmul.f32 %v4939, %v5223
  %v5225 = vsub.f32 1.0, %v5224
  %v5226 = vmul.f32 %v5223, %v5225
  %v5227 = vadd.f32 %v5223, %v5226
  %vm5228 = vweird.f32 %v4939
  %vm5229 = vweird.f32 %v5223
  %vm5230 = vmor %vm5228, %vm5229
  %v5231 = vsel %vm5230, %v5223, %v5227
  %v5232 = vand.u32 2147483647, %v4939
  %vm5233 = vcmp.eq.f32.partialorder %v5232, 8.507059e+37
  %v5234 = vand.u32 %v4939, 2147483648
  %v5235 = vor.u32 1.1754944e-38, %v5234
  %v5236 = vsel %vm5233, %v5235, %v5231
  %v5237 = vmul.f32 1.0, %v5236
  %v5238 = vrcp.pop %v4940
  %v5239 = vmul.f32 %v4940, %v5238
  %v5240 = vsub.f32 1.0, %v5239
  %v5241 = vmul.f32 %v5238, %v5240
  %v5242 = vadd.f32 %v5238, %v5241
  %vm5243 = vweird.f32 %v4940
  %vm5244 = vweird.f32 %v5238
  %vm5245 = vmor %vm5243, %vm5244
  %v5246 = vsel %vm5245, %v5238, %v5242
  %v5247 = vand.u32 2147483647, %v4940
  %vm5248 = vcmp.eq.f32.partialorder %v5247, 8.507059e+37
  %v5249 = vand.u32 %v4940, 2147483648
  %v5250 = vor.u32 1.1754944e-38, %v5249
  %v5251 = vsel %vm5248, %v5250, %v5246
  %v5252 = vmul.f32 1.0, %v5251
  %v5253 = vrcp.pop %v4941
  %v5254 = vmul.f32 %v4941, %v5253
  %v5255 = vsub.f32 1.0, %v5254
  %v5256 = vmul.f32 %v5253, %v5255
  %v5257 = vadd.f32 %v5253, %v5256
  %vm5258 = vweird.f32 %v4941
  %vm5259 = vweird.f32 %v5253
  %vm5260 = vmor %vm5258, %vm5259
  %v5261 = vsel %vm5260, %v5253, %v5257
  %v5262 = vand.u32 2147483647, %v4941
  %vm5263 = vcmp.eq.f32.partialorder %v5262, 8.507059e+37
  %v5264 = vand.u32 %v4941, 2147483648
  %v5265 = vor.u32 1.1754944e-38, %v5264
  %v5266 = vsel %vm5263, %v5265, %v5261
  %v5267 = vmul.f32 1.0, %v5266
  %v5268 = vrcp.pop %v4942
  %v5269 = vmul.f32 %v4942, %v5268
  %v5270 = vsub.f32 1.0, %v5269
  %v5271 = vmul.f32 %v5268, %v5270
  %v5272 = vadd.f32 %v5268, %v5271
  %vm5273 = vweird.f32 %v4942
  %vm5274 = vweird.f32 %v5268
  %vm5275 = vmor %vm5273, %vm5274
  %v5276 = vsel %vm5275, %v5268, %v5272
  %v5277 = vand.u32 2147483647, %v4942
  %vm5278 = vcmp.eq.f32.partialorder %v5277, 8.507059e+37
  %v5279 = vand.u32 %v4942, 2147483648
  %v5280 = vor.u32 1.1754944e-38, %v5279
  %v5281 = vsel %vm5278, %v5280, %v5276
  %v5282 = vmul.f32 1.0, %v5281
  %v5283 = vrcp.pop %v4943
  %v5284 = vmul.f32 %v4943, %v5283
  %v5285 = vsub.f32 1.0, %v5284
  %v5286 = vmul.f32 %v5283, %v5285
  %v5287 = vadd.f32 %v5283, %v5286
  %vm5288 = vweird.f32 %v4943
  %vm5289 = vweird.f32 %v5283
  %vm5290 = vmor %vm5288, %vm5289
  %v5291 = vsel %vm5290, %v5283, %v5287
  %v5292 = vand.u32 2147483647, %v4943
  %vm5293 = vcmp.eq.f32.partialorder %v5292, 8.507059e+37
  %v5294 = vand.u32 %v4943, 2147483648
  %v5295 = vor.u32 1.1754944e-38, %v5294
  %v5296 = vsel %vm5293, %v5295, %v5291
  %v5297 = vmul.f32 1.0, %v5296
  %v5298 = vrcp.pop %v4944
  %v5299 = vmul.f32 %v4944, %v5298
  %v5300 = vsub.f32 1.0, %v5299
  %v5301 = vmul.f32 %v5298, %v5300
  %v5302 = vadd.f32 %v5298, %v5301
  %vm5303 = vweird.f32 %v4944
  %vm5304 = vweird.f32 %v5298
  %vm5305 = vmor %vm5303, %vm5304
  %v5306 = vsel %vm5305, %v5298, %v5302
  %v5307 = vand.u32 2147483647, %v4944
  %vm5308 = vcmp.eq.f32.partialorder %v5307, 8.507059e+37
  %v5309 = vand.u32 %v4944, 2147483648
  %v5310 = vor.u32 1.1754944e-38, %v5309
  %v5311 = vsel %vm5308, %v5310, %v5306
  %v5312 = vmul.f32 1.0, %v5311
  %v5313 = vrcp.pop %v4945
  %v5314 = vmul.f32 %v4945, %v5313
  %v5315 = vsub.f32 1.0, %v5314
  %v5316 = vmul.f32 %v5313, %v5315
  %v5317 = vadd.f32 %v5313, %v5316
  %vm5318 = vweird.f32 %v4945
  %vm5319 = vweird.f32 %v5313
  %vm5320 = vmor %vm5318, %vm5319
  %v5321 = vsel %vm5320, %v5313, %v5317
  %v5322 = vand.u32 2147483647, %v4945
  %vm5323 = vcmp.eq.f32.partialorder %v5322, 8.507059e+37
  %v5324 = vand.u32 %v4945, 2147483648
  %v5325 = vor.u32 1.1754944e-38, %v5324
  %v5326 = vsel %vm5323, %v5325, %v5321
  %v5327 = vmul.f32 1.0, %v5326
  %v5328 = vrcp.pop %v4946
  %v5329 = vmul.f32 %v4946, %v5328
  %v5330 = vsub.f32 1.0, %v5329
  %v5331 = vmul.f32 %v5328, %v5330
  %v5332 = vadd.f32 %v5328, %v5331
  %vm5333 = vweird.f32 %v4946
  %vm5334 = vweird.f32 %v5328
  %vm5335 = vmor %vm5333, %vm5334
  %v5336 = vsel %vm5335, %v5328, %v5332
  %v5337 = vand.u32 2147483647, %v4946
  %vm5338 = vcmp.eq.f32.partialorder %v5337, 8.507059e+37
  %v5339 = vand.u32 %v4946, 2147483648
  %v5340 = vor.u32 1.1754944e-38, %v5339
  %v5341 = vsel %vm5338, %v5340, %v5336
  %v5342 = vmul.f32 1.0, %v5341
  %v5343 = vrcp.pop %v4947
  %v5344 = vmul.f32 %v4947, %v5343
  %v5345 = vsub.f32 1.0, %v5344
  %v5346 = vmul.f32 %v5343, %v5345
  %v5347 = vadd.f32 %v5343, %v5346
  %vm5348 = vweird.f32 %v4947
  %vm5349 = vweird.f32 %v5343
  %vm5350 = vmor %vm5348, %vm5349
  %v5351 = vsel %vm5350, %v5343, %v5347
  %v5352 = vand.u32 2147483647, %v4947
  %vm5353 = vcmp.eq.f32.partialorder %v5352, 8.507059e+37
  %v5354 = vand.u32 %v4947, 2147483648
  %v5355 = vor.u32 1.1754944e-38, %v5354
  %v5356 = vsel %vm5353, %v5355, %v5351
  %v5357 = vmul.f32 1.0, %v5356
  %v5358 = vrcp.pop %v4948
  %v5359 = vmul.f32 %v4948, %v5358
  %v5360 = vsub.f32 1.0, %v5359
  %v5361 = vmul.f32 %v5358, %v5360
  %v5362 = vadd.f32 %v5358, %v5361
  %vm5363 = vweird.f32 %v4948
  %vm5364 = vweird.f32 %v5358
  %vm5365 = vmor %vm5363, %vm5364
  %v5366 = vsel %vm5365, %v5358, %v5362
  %v5367 = vand.u32 2147483647, %v4948
  %vm5368 = vcmp.eq.f32.partialorder %v5367, 8.507059e+37
  %v5369 = vand.u32 %v4948, 2147483648
  %v5370 = vor.u32 1.1754944e-38, %v5369
  %v5371 = vsel %vm5368, %v5370, %v5366
  %v5372 = vmul.f32 1.0, %v5371
  %v5373 = vrcp.pop %v4949
  %v5374 = vmul.f32 %v4949, %v5373
  %v5375 = vsub.f32 1.0, %v5374
  %v5376 = vmul.f32 %v5373, %v5375
  %v5377 = vadd.f32 %v5373, %v5376
  %vm5378 = vweird.f32 %v4949
  %vm5379 = vweird.f32 %v5373
  %vm5380 = vmor %vm5378, %vm5379
  %v5381 = vsel %vm5380, %v5373, %v5377
  %v5382 = vand.u32 2147483647, %v4949
  %vm5383 = vcmp.eq.f32.partialorder %v5382, 8.507059e+37
  %v5384 = vand.u32 %v4949, 2147483648
  %v5385 = vor.u32 1.1754944e-38, %v5384
  %v5386 = vsel %vm5383, %v5385, %v5381
  %v5387 = vmul.f32 1.0, %v5386
  %v5388 = vrcp.pop %v4950
  %v5389 = vmul.f32 %v4950, %v5388
  %v5390 = vsub.f32 1.0, %v5389
  %v5391 = vmul.f32 %v5388, %v5390
  %v5392 = vadd.f32 %v5388, %v5391
  %vm5393 = vweird.f32 %v4950
  %vm5394 = vweird.f32 %v5388
  %vm5395 = vmor %vm5393, %vm5394
  %v5396 = vsel %vm5395, %v5388, %v5392
  %v5397 = vand.u32 2147483647, %v4950
  %vm5398 = vcmp.eq.f32.partialorder %v5397, 8.507059e+37
  %v5399 = vand.u32 %v4950, 2147483648
  %v5400 = vor.u32 1.1754944e-38, %v5399
  %v5401 = vsel %vm5398, %v5400, %v5396
  %v5402 = vmul.f32 1.0, %v5401
  %v5403 = vrcp.pop %v4951
  %v5404 = vmul.f32 %v4951, %v5403
  %v5405 = vsub.f32 1.0, %v5404
  %v5406 = vmul.f32 %v5403, %v5405
  %v5407 = vadd.f32 %v5403, %v5406
  %vm5408 = vweird.f32 %v4951
  %vm5409 = vweird.f32 %v5403
  %vm5410 = vmor %vm5408, %vm5409
  %v5411 = vsel %vm5410, %v5403, %v5407
  %v5412 = vand.u32 2147483647, %v4951
  %vm5413 = vcmp.eq.f32.partialorder %v5412, 8.507059e+37
  %v5414 = vand.u32 %v4951, 2147483648
  %v5415 = vor.u32 1.1754944e-38, %v5414
  %v5416 = vsel %vm5413, %v5415, %v5411
  %v5417 = vmul.f32 1.0, %v5416
  %v5418 = vrcp.pop %v4952
  %v5419 = vmul.f32 %v4952, %v5418
  %v5420 = vsub.f32 1.0, %v5419
  %v5421 = vmul.f32 %v5418, %v5420
  %v5422 = vadd.f32 %v5418, %v5421
  %vm5423 = vweird.f32 %v4952
  %vm5424 = vweird.f32 %v5418
  %vm5425 = vmor %vm5423, %vm5424
  %v5426 = vsel %vm5425, %v5418, %v5422
  %v5427 = vand.u32 2147483647, %v4952
  %vm5428 = vcmp.eq.f32.partialorder %v5427, 8.507059e+37
  %v5429 = vand.u32 %v4952, 2147483648
  %v5430 = vor.u32 1.1754944e-38, %v5429
  %v5431 = vsel %vm5428, %v5430, %v5426
  %v5432 = vmul.f32 1.0, %v5431
  %v5433 = vmul.f32 %v4683, %v4967
  %v5434 = vmul.f32 %v4702, %v4982
  %v5435 = vmul.f32 %v4721, %v4997
  %v5436 = vmul.f32 %v4740, %v5012
  %v5437 = vmul.f32 %v4759, %v5027
  %v5438 = vmul.f32 %v4778, %v5042
  %v5439 = vmul.f32 %v4797, %v5057
  %v5440 = vmul.f32 %v4816, %v5072
  %v5441 = vmul.f32 %v4685, %v5087
  %v5442 = vmul.f32 %v4704, %v5102
  %v5443 = vmul.f32 %v4723, %v5117
  %v5444 = vmul.f32 %v4742, %v5132
  %v5445 = vmul.f32 %v4761, %v5147
  %v5446 = vmul.f32 %v4780, %v5162
  %v5447 = vmul.f32 %v4799, %v5177
  %v5448 = vmul.f32 %v4818, %v5192
  %v5449 = vmul.f32 %v4688, %v5207
  %v5450 = vmul.f32 %v4707, %v5222
  %v5451 = vmul.f32 %v4726, %v5237
  %v5452 = vmul.f32 %v4745, %v5252
  %v5453 = vmul.f32 %v4764, %v5267
  %v5454 = vmul.f32 %v4783, %v5282
  %v5455 = vmul.f32 %v4802, %v5297
  %v5456 = vmul.f32 %v4821, %v5312
  %v5457 = vmul.f32 %v4690, %v5327
  %v5458 = vmul.f32 %v4709, %v5342
  %v5459 = vmul.f32 %v4728, %v5357
  %v5460 = vmul.f32 %v4747, %v5372
  %v5461 = vmul.f32 %v4766, %v5387
  %v5462 = vmul.f32 %v4785, %v5402
  %v5463 = vmul.f32 %v4804, %v5417
  %v5464 = vmul.f32 %v4823, %v5432
  %v5465 = vadd.f32 %v3725, %v5433
  %v5466 = vadd.f32 %v3726, %v5434
  %v5467 = vadd.f32 %v3727, %v5435
  %v5468 = vadd.f32 %v3728, %v5436
  %v5469 = vadd.f32 %v3729, %v5437
  %v5470 = vadd.f32 %v3730, %v5438
  %v5471 = vadd.f32 %v3731, %v5439
  %v5472 = vadd.f32 %v3732, %v5440
  %v5473 = vadd.f32 %v3733, %v5441
  %v5474 = vadd.f32 %v3734, %v5442
  %v5475 = vadd.f32 %v3735, %v5443
  %v5476 = vadd.f32 %v3736, %v5444
  %v5477 = vadd.f32 %v3737, %v5445
  %v5478 = vadd.f32 %v3738, %v5446
  %v5479 = vadd.f32 %v3739, %v5447
  %v5480 = vadd.f32 %v3740, %v5448
  %v5481 = vadd.f32 %v3741, %v5449
  %v5482 = vadd.f32 %v3742, %v5450
  %v5483 = vadd.f32 %v3743, %v5451
  %v5484 = vadd.f32 %v3744, %v5452
  %v5485 = vadd.f32 %v3745, %v5453
  %v5486 = vadd.f32 %v3746, %v5454
  %v5487 = vadd.f32 %v3747, %v5455
  %v5488 = vadd.f32 %v3748, %v5456
  %v5489 = vadd.f32 %v3749, %v5457
  %v5490 = vadd.f32 %v3750, %v5458
  %v5491 = vadd.f32 %v3751, %v5459
  %v5492 = vadd.f32 %v3752, %v5460
  %v5493 = vadd.f32 %v3753, %v5461
  %v5494 = vadd.f32 %v3754, %v5462
  %v5495 = vadd.f32 %v3755, %v5463
  %v5496 = vadd.f32 %v3756, %v5464
  %v5497 = vld [vmem:[%s5] sm:$0x1]
  %v5498 = vld [vmem:[#allocation2] sm:$0x1]
  %v5499 = vpack.c.bf16 %v5473, %v5465
  %v5500 = vpack.c.bf16 %v5474, %v5466
  %v5501 = vpack.c.bf16 %v5475, %v5467
  %v5502 = vpack.c.bf16 %v5476, %v5468
  %v5503 = vpack.c.bf16 %v5477, %v5469
  %v5504 = vpack.c.bf16 %v5478, %v5470
  %v5505 = vpack.c.bf16 %v5479, %v5471
  %v5506 = vpack.c.bf16 %v5480, %v5472
  %v5507 = vpack.c.bf16 %v5489, %v5481
  %v5508 = vpack.c.bf16 %v5490, %v5482
  %v5509 = vpack.c.bf16 %v5491, %v5483
  %v5510 = vpack.c.bf16 %v5492, %v5484
  %v5511 = vpack.c.bf16 %v5493, %v5485
  %v5512 = vpack.c.bf16 %v5494, %v5486
  %v5513 = vpack.c.bf16 %v5495, %v5487
  %v5514 = vpack.c.bf16 %v5496, %v5488
  %5516 = vset.pattern.permute.xlu0 0
  %5517 = vperm.xlu0 %5516, %v5498
  %v5518 = vpop.permute.xlu0 %5517
  %v5520 = vperm.slane %v5518, 0
  %v5522 = vsel %vm332, %v5497, 0
  %5524 = vmatpush.bf16.msra.mxu0 0
  %5525 = vmatpush.bf16.msra.mxu0 0
  %5526 = vmatpush.bf16.msra.mxu0 0
  %5527 = vmatpush.bf16.msra.mxu0 0
  %5528 = vmatpush.bf16.msra.mxu0 0
  %5529 = vmatpush.bf16.msra.mxu0 0
  %5530 = vmatpush.bf16.msra.mxu0 %v5507
  %5531 = vmatpush.bf16.msra.mxu0 %v5499
  %5532 = vmatmul.bf16.gmra.mxu0 %v5522
  %v5533 = vpop.f32.mrf.mxu0
  %v5534 = vadd.f32 %v5520, %v5533
  %v5535 = vpop.f32.mrf.mxu0
  %5536 = vdwg.mxu0
  %5537 = vmatpush.bf16.msra.mxu0 0
  %5538 = vmatpush.bf16.msra.mxu0 0
  %5539 = vmatpush.bf16.msra.mxu0 0
  %5540 = vmatpush.bf16.msra.mxu0 0
  %5541 = vmatpush.bf16.msra.mxu0 0
  %5542 = vmatpush.bf16.msra.mxu0 0
  %5543 = vmatpush.bf16.msra.mxu0 %v5508
  %5544 = vmatpush.bf16.msra.mxu0 %v5500
  %5545 = vmatmul.bf16.gmra.mxu0 %v5522
  %v5546 = vpop.f32.mrf.mxu0
  %v5547 = vadd.f32 %v5520, %v5546
  %v5548 = vpop.f32.mrf.mxu0
  %5549 = vdwg.mxu0
  %5550 = vmatpush.bf16.msra.mxu0 0
  %5551 = vmatpush.bf16.msra.mxu0 0
  %5552 = vmatpush.bf16.msra.mxu0 0
  %5553 = vmatpush.bf16.msra.mxu0 0
  %5554 = vmatpush.bf16.msra.mxu0 0
  %5555 = vmatpush.bf16.msra.mxu0 0
  %5556 = vmatpush.bf16.msra.mxu0 %v5509
  %5557 = vmatpush.bf16.msra.mxu0 %v5501
  %5558 = vmatmul.bf16.gmra.mxu0 %v5522
  %v5559 = vpop.f32.mrf.mxu0
  %v5560 = vadd.f32 %v5520, %v5559
  %v5561 = vpop.f32.mrf.mxu0
  %5562 = vdwg.mxu0
  %5563 = vmatpush.bf16.msra.mxu0 0
  %5564 = vmatpush.bf16.msra.mxu0 0
  %5565 = vmatpush.bf16.msra.mxu0 0
  %5566 = vmatpush.bf16.msra.mxu0 0
  %5567 = vmatpush.bf16.msra.mxu0 0
  %5568 = vmatpush.bf16.msra.mxu0 0
  %5569 = vmatpush.bf16.msra.mxu0 %v5510
  %5570 = vmatpush.bf16.msra.mxu0 %v5502
  %5571 = vmatmul.bf16.gmra.mxu0 %v5522
  %v5572 = vpop.f32.mrf.mxu0
  %v5573 = vadd.f32 %v5520, %v5572
  %v5574 = vpop.f32.mrf.mxu0
  %5575 = vdwg.mxu0
  %5576 = vmatpush.bf16.msra.mxu0 0
  %5577 = vmatpush.bf16.msra.mxu0 0
  %5578 = vmatpush.bf16.msra.mxu0 0
  %5579 = vmatpush.bf16.msra.mxu0 0
  %5580 = vmatpush.bf16.msra.mxu0 0
  %5581 = vmatpush.bf16.msra.mxu0 0
  %5582 = vmatpush.bf16.msra.mxu0 %v5511
  %5583 = vmatpush.bf16.msra.mxu0 %v5503
  %5584 = vmatmul.bf16.gmra.mxu0 %v5522
  %v5585 = vpop.f32.mrf.mxu0
  %v5586 = vadd.f32 %v5520, %v5585
  %v5587 = vpop.f32.mrf.mxu0
  %5588 = vdwg.mxu0
  %5589 = vmatpush.bf16.msra.mxu0 0
  %5590 = vmatpush.bf16.msra.mxu0 0
  %5591 = vmatpush.bf16.msra.mxu0 0
  %5592 = vmatpush.bf16.msra.mxu0 0
  %5593 = vmatpush.bf16.msra.mxu0 0
  %5594 = vmatpush.bf16.msra.mxu0 0
  %5595 = vmatpush.bf16.msra.mxu0 %v5512
  %5596 = vmatpush.bf16.msra.mxu0 %v5504
  %5597 = vmatmul.bf16.gmra.mxu0 %v5522
  %v5598 = vpop.f32.mrf.mxu0
  %v5599 = vadd.f32 %v5520, %v5598
  %v5600 = vpop.f32.mrf.mxu0
  %5601 = vdwg.mxu0
  %5602 = vmatpush.bf16.msra.mxu0 0
  %5603 = vmatpush.bf16.msra.mxu0 0
  %5604 = vmatpush.bf16.msra.mxu0 0
  %5605 = vmatpush.bf16.msra.mxu0 0
  %5606 = vmatpush.bf16.msra.mxu0 0
  %5607 = vmatpush.bf16.msra.mxu0 0
  %5608 = vmatpush.bf16.msra.mxu0 %v5513
  %5609 = vmatpush.bf16.msra.mxu0 %v5505
  %5610 = vmatmul.bf16.gmra.mxu0 %v5522
  %v5611 = vpop.f32.mrf.mxu0
  %v5612 = vadd.f32 %v5520, %v5611
  %v5613 = vpop.f32.mrf.mxu0
  %5614 = vdwg.mxu0
  %5615 = vmatpush.bf16.msra.mxu0 0
  %5616 = vmatpush.bf16.msra.mxu0 0
  %5617 = vmatpush.bf16.msra.mxu0 0
  %5618 = vmatpush.bf16.msra.mxu0 0
  %5619 = vmatpush.bf16.msra.mxu0 0
  %5620 = vmatpush.bf16.msra.mxu0 0
  %5621 = vmatpush.bf16.msra.mxu0 %v5514
  %5622 = vmatpush.bf16.msra.mxu0 %v5506
  %5623 = vmatmul.bf16.gmra.mxu0 %v5522
  %v5624 = vpop.f32.mrf.mxu0
  %v5625 = vadd.f32 %v5520, %v5624
  %v5626 = vpop.f32.mrf.mxu0
  %5627 = vdwg.mxu0
  %v5636 = vrot.slane %v5547, 7
  %v5637 = vrot.slane %v5560, 6
  %v5638 = vrot.slane %v5573, 5
  %v5639 = vrot.slane %v5586, 4
  %v5640 = vrot.slane %v5599, 3
  %v5641 = vrot.slane %v5612, 2
  %v5642 = vrot.slane %v5625, 1
  %vm5643 = vcmask 1040384
  %v5644 = vsel %vm5643, %v5534, %v5636
  %vm5645 = vcmask 1042434
  %v5646 = vsel %vm5645, %v5637, %v5638
  %vm5647 = vcmask 1041408
  %v5648 = vsel %vm5647, %v5644, %v5646
  %vm5649 = vcmask 1044484
  %v5650 = vsel %vm5649, %v5639, %v5640
  %vm5651 = vcmask 1046534
  %v5652 = vsel %vm5651, %v5641, %v5642
  %vm5653 = vcmask 1045508
  %v5654 = vsel %vm5653, %v5650, %v5652
  %vm5655 = vcmask 1043456
  %v5656 = vsel %vm5655, %v5648, %v5654
  %5658 = vst [vmem:[%s7] sm:$0xff] %v5656
  // Predicated region
  $region30: #{net_forward.1} parent=0 // pred_check
    _
  $region31: #{net_forward.1} parent=0 // pred_check_branch
    %5660 = sbr.rel (0) target = $region33
  $region32: #{net_forward.1} parent=0 // pred_region
    _
  $region33: #{net_forward.1} parent=0 // pred_fallthru
    _
  // Predicated region
  $region34: #{net_forward.1} parent=0 // pred_check
    _
  $region35: #{net_forward.1} parent=0 // pred_check_branch
    %5662 = sbr.rel (0) target = $region37
  $region36: #{net_forward.1} parent=0 // pred_region
    _
  $region37: #{net_forward.1} parent=0 // pred_fallthru
    _

</llo_original>
